<compile_context>
chip_gen: v7x
topology: tpu7x:2x2x1
jax: 0.10.0
libtpu: 0.0.40
codegen_flags: <defaults>
</compile_context>

<pallas_src>
import functools

import jax
import jax.numpy as jnp
from jax.experimental import pallas as pl
from jax.experimental.pallas import tpu as pltpu

LANE = 128   # output-channel (lane) padding multiple
LSUB = 8     # sublane-aligned column offset of the strip interior in xw


def _ceil_to(x, m):
    return (x + m - 1) // m * m


def _pick_tile(dim, target):
    """Largest divisor of `dim` that is <= target (>=1)."""
    t = min(dim, max(1, target))
    while dim % t:
        t -= 1
    return t


def _phys_bytes(shape, itemsize):
    """Rough physical VMEM footprint (last dim -> 128 lanes, 2nd-last -> 8)."""
    s = list(shape)
    s[-1] = _ceil_to(s[-1], LANE)
    if len(s) >= 2:
        s[-2] = _ceil_to(s[-2], 8)
    n = 1
    for d in s:
        n *= d
    return n * itemsize


# ----------------------------------------------------------------------------
# Fused kernel: [optional BN+ReLU of the previous layer on the input strip]
#               + 3x3 'same' conv + per-strip channel sum / sum-of-squares.
# One grid step = one (image, H-strip); both grid axes are fully parallel.
# ----------------------------------------------------------------------------
def _conv_stats_kernel(*refs, th, w_cols, lsub, fuse_bn, c_in):
    if fuse_bn:
        (xb_ref, xt_ref, xo_ref, scale_ref, shift_ref, wk_ref,
         y_ref, ssum_ref, ssq_ref, xw_ref, scr_ref) = refs
    else:
        (xb_ref, xt_ref, xo_ref, wk_ref,
         y_ref, ssum_ref, ssq_ref, xw_ref, scr_ref) = refs
        scale_ref = shift_ref = None

    W = w_cols
    h = pl.program_id(1)
    nh = pl.num_programs(1)

    def prep(v):
        # Previous layer's train-mode BN + ReLU as a per-channel FMA (f32),
        # then cast to the bf16 MXU operand dtype.
        v = v.astype(jnp.float32)
        if fuse_bn:
            v = jnp.maximum(v * scale_ref[0][None, None, :]
                            + shift_ref[0][None, None, :], 0.0)
        return v.astype(xw_ref.dtype)

    # 1) Build the halo'd input strip in VMEM.  The interior is stored at a
    #    sublane-aligned column offset (lsub); only the two halo columns that
    #    the shifted windows actually read are re-zeroed each step (no full
    #    scratch zero pass, no reliance on scratch persistence).
    zcol = jnp.zeros((th + 2, 1, c_in), xw_ref.dtype)
    xw_ref[:, lsub - 1:lsub, :] = zcol
    xw_ref[:, lsub + W:lsub + W + 1, :] = zcol

    xw_ref[1:th + 1, lsub:lsub + W, :] = prep(xb_ref[0])

    top = prep(xt_ref[0])                                   # (1, W, C)
    bot = prep(xo_ref[0])
    top = jnp.where(h > 0, top, jnp.zeros_like(top))        # zero pad @ image top
    bot = jnp.where(h < nh - 1, bot, jnp.zeros_like(bot))   # zero pad @ image bottom
    xw_ref[0:1, lsub:lsub + W, :] = top
    xw_ref[th + 1:th + 2, lsub:lsub + W, :] = bot

    # 2) Fold the 3 dx taps into the contraction:
    #      scr[r, w, dx*C + c] = xw[r, w + dx - 1 (+halo), c]
    #    -> K = 3*C matmuls (better fill of the 256-wide v6e/v7x MXU than
    #    nine K=C matmuls).
    for dx in range(3):
        scr_ref[:, :, dx * c_in:(dx + 1) * c_in] = (
            xw_ref[:, lsub - 1 + dx:lsub - 1 + dx + W, :])

    # 3) Three matmuls (one per dy), f32 accumulation in a live value,
    #    single store of the output strip.
    acc = jax.lax.dot_general(
        scr_ref[0:th], wk_ref[0],
        dimension_numbers=(((2,), (0,)), ((), ())),
        preferred_element_type=jnp.float32)
    for dy in (1, 2):
        acc = acc + jax.lax.dot_general(
            scr_ref[dy:dy + th], wk_ref[dy],
            dimension_numbers=(((2,), (0,)), ((), ())),
            preferred_element_type=jnp.float32)

    # 4) Per-strip BatchNorm statistics from the f32 accumulator (NOT from the
    #    stored bf16 tensor), written as partials and reduced in XLA.
    ssum_ref[...] = jnp.sum(acc, axis=(0, 1)).reshape(ssum_ref.shape)
    ssq_ref[...] = jnp.sum(acc * acc, axis=(0, 1)).reshape(ssq_ref.shape)
    y_ref[0] = acc.astype(y_ref.dtype)


def _conv_stats_layer(x_nhwc, w_k, scale=None, shift=None, th_target=32):
    """x: (N,H,W,Cin), w_k: (3, 3*Cin, CP) bf16 (dx folded into K).
    Returns conv output (N,H,W,CP) bf16 and per-(image,strip) channel
    sum / sum-of-squares, each (N, n_strips, 1, CP) f32."""
    N, H, W, Cin = x_nhwc.shape
    CP = w_k.shape[-1]
    fuse = scale is not None
    TH = _pick_tile(H, th_target)
    nh = H // TH
    in_b = jnp.dtype(x_nhwc.dtype).itemsize

    kern = functools.partial(_conv_stats_kernel, th=TH, w_cols=W, lsub=LSUB,
                             fuse_bn=fuse, c_in=Cin)

    body_spec = pl.BlockSpec((1, TH, W, Cin), lambda n, h: (n, h, 0, 0))
    # 1-row halo blocks: block size 1 along H, so the returned block index is
    # the row index (clamped at the image border; the kernel zero-masks it).
    top_spec = pl.BlockSpec(
        (1, 1, W, Cin), lambda n, h: (n, jnp.maximum(h * TH - 1, 0), 0, 0))
    bot_spec = pl.BlockSpec(
        (1, 1, W, Cin), lambda n, h: (n, jnp.minimum((h + 1) * TH, H - 1), 0, 0))

    in_specs = [body_spec, top_spec, bot_spec]
    operands = [x_nhwc, x_nhwc, x_nhwc]
    if fuse:
        vspec = pl.BlockSpec((1, CP), lambda n, h: (0, 0))
        in_specs += [vspec, vspec]
        operands += [scale.reshape(1, CP), shift.reshape(1, CP)]
    in_specs.append(pl.BlockSpec((3, 3 * Cin, CP), lambda n, h: (0, 0, 0)))
    operands.append(w_k)

    # VMEM budget sized from the tiles (double-buffered ins/outs + scratch +
    # f32 accumulator), with generous headroom.
    est = 0
    est += 2 * _phys_bytes((TH, W, Cin), in_b)           # body strip
    est += 2 * 2 * _phys_bytes((1, W, Cin), in_b)        # 2 halo rows
    est += 2 * 3 * _phys_bytes((3 * Cin, CP), 2)         # weights (bf16)
    est += 2 * _phys_bytes((TH, W, CP), 2)               # y strip out (bf16)
    est += 4 * _phys_bytes((1, CP), 4)                   # stats outs
    if fuse:
        est += 4 * _phys_bytes((1, CP), 4)               # scale / shift
    est += _phys_bytes((TH + 2, W + 2 * LSUB, Cin), 2)   # halo'd input scratch
    est += _phys_bytes((TH + 2, W, 3 * Cin), 2)          # dx-folded scratch
    est += 2 * _phys_bytes((TH, W, CP), 4)               # f32 accumulator/temps
    vmem_limit = min(2 * est + (8 << 20), 64 << 20)

    y, s_sum, s_sq = pl.pallas_call(
        kern,
        out_shape=(jax.ShapeDtypeStruct((N, H, W, CP), jnp.bfloat16),
                   jax.ShapeDtypeStruct((N, nh, 1, CP), jnp.float32),
                   jax.ShapeDtypeStruct((N, nh, 1, CP), jnp.float32)),
        grid_spec=pltpu.PrefetchScalarGridSpec(
            num_scalar_prefetch=0,
            grid=(N, nh),
            in_specs=in_specs,
            out_specs=(pl.BlockSpec((1, TH, W, CP), lambda n, h: (n, h, 0, 0)),
                       pl.BlockSpec((1, 1, 1, CP), lambda n, h: (n, h, 0, 0)),
                       pl.BlockSpec((1, 1, 1, CP), lambda n, h: (n, h, 0, 0))),
            scratch_shapes=[
                pltpu.VMEM((TH + 2, W + 2 * LSUB, Cin), jnp.bfloat16),
                pltpu.VMEM((TH + 2, W, 3 * Cin), jnp.bfloat16)],
        ),
        compiler_params=pltpu.CompilerParams(
            dimension_semantics=("parallel", "parallel"),
            vmem_limit_bytes=vmem_limit),
    )(*operands)
    return y, s_sum, s_sq


# ----------------------------------------------------------------------------
# Final BN + ReLU (lane-dense, strip tiled).
# ----------------------------------------------------------------------------
def _bn_relu_kernel(y_ref, scale_ref, shift_ref, o_ref):
    y = y_ref[0].astype(jnp.float32)
    z = y * scale_ref[0][None, None, :] + shift_ref[0][None, None, :]
    o_ref[0] = jnp.maximum(z, 0.0).astype(o_ref.dtype)


def _bn_relu(y, scale, shift, th_target=32):
    N, H, W, C = y.shape
    TH = _pick_tile(H, th_target)
    nh = H // TH
    est = (2 * _phys_bytes((TH, W, C), jnp.dtype(y.dtype).itemsize)
           + 2 * _phys_bytes((TH, W, C), 4)
           + 4 * _phys_bytes((1, C), 4))
    vmem_limit = min(2 * est + (8 << 20), 64 << 20)
    vspec = pl.BlockSpec((1, C), lambda n, h: (0, 0))
    return pl.pallas_call(
        _bn_relu_kernel,
        out_shape=jax.ShapeDtypeStruct((N, H, W, C), jnp.float32),
        grid_spec=pltpu.PrefetchScalarGridSpec(
            num_scalar_prefetch=0,
            grid=(N, nh),
            in_specs=[pl.BlockSpec((1, TH, W, C), lambda n, h: (n, h, 0, 0)),
                      vspec, vspec],
            out_specs=pl.BlockSpec((1, TH, W, C), lambda n, h: (n, h, 0, 0)),
        ),
        compiler_params=pltpu.CompilerParams(
            dimension_semantics=("parallel", "parallel"),
            vmem_limit_bytes=vmem_limit),
    )(y, scale.reshape(1, C), shift.reshape(1, C))


def _bn_scale_shift(s_sum, s_sq, count, gamma, beta, eps):
    """Fold train-mode BN (batch mean / biased var) into a per-channel FMA."""
    mean = jnp.sum(s_sum, axis=(0, 1, 2)) / count
    # Biased variance; clamp at 0 to guard E[x^2]-mean^2 cancellation in f32.
    var = jnp.maximum(jnp.sum(s_sq, axis=(0, 1, 2)) / count - mean * mean, 0.0)
    scale = gamma * jax.lax.rsqrt(var + eps)
    shift = beta - mean * scale
    return scale, shift


# ----------------------------------------------------------------------------
# Double_Conv forward.
# ----------------------------------------------------------------------------
def double_conv_forward_nhwc(x_nhwc, params, eps=1e-5, th=32):
    N, H, W, Cin = x_nhwc.shape
    Cout = params["w1"].shape[-1]
    CP = _ceil_to(Cout, LANE)
    dC = CP - Cout

    # Zero-pad weights / BN params on the output-channel (lane) axis; padded
    # channels stay exactly zero through the whole block.  Conv biases are not
    # applied: a per-channel constant is cancelled exactly by train-mode BN.
    # TODO(synk): for production Cout < 128, pack spatial positions per lane
    # group instead of zero-padding channels to 128 (padding costs extra HBM
    # traffic at small Cout; for Cout >= 128 this scheme is already optimal).
    w1 = jnp.pad(params["w1"].astype(jnp.float32),
                 ((0, 0), (0, 0), (0, 0), (0, dC)))
    w2 = jnp.pad(params["w2"].astype(jnp.float32),
                 ((0, 0), (0, 0), (0, dC), (0, dC)))
    # (dy, dx*Cin + c, co) layout for the dx-folded K=3*Cin contraction, bf16.
    w1k = w1.reshape(3, 3 * Cin, CP).astype(jnp.bfloat16)
    w2k = w2.reshape(3, 3 * CP, CP).astype(jnp.bfloat16)
    g1 = jnp.pad(params["gamma1"].astype(jnp.float32), (0, dC))
    b1 = jnp.pad(params["beta1"].astype(jnp.float32), (0, dC))
    g2 = jnp.pad(params["gamma2"].astype(jnp.float32), (0, dC))
    b2 = jnp.pad(params["beta2"].astype(jnp.float32), (0, dC))
    count = float(N * H * W)

    # Layer 1: conv1 + per-strip stats (y1 stays pre-BN, bf16 in HBM).
    y1, s1, q1 = _conv_stats_layer(x_nhwc, w1k, th_target=th)
    sc1, sh1 = _bn_scale_shift(s1, q1, count, g1, b1, eps)

    # Layer 2: BN1+ReLU folded into conv2's input path, + conv2 + stats.
    y2, s2, q2 = _conv_stats_layer(y1, w2k, scale=sc1, shift=sh1, th_target=th)
    sc2, sh2 = _bn_scale_shift(s2, q2, count, g2, b2, eps)

    # Final BN2 + ReLU at lane-dense width, then drop the padding channels.
    # TODO(synk): in a full U-Net, export (sc2, sh2) and fold BN2+ReLU into the
    # next block's conv input path (like the fuse path above) to drop this pass.
    z = _bn_relu(y2, sc2, sh2, th_target=th)
    return z[..., :Cout] if dC else z


def double_conv_forward(x_nchw, params, eps=1e-5, th=32):
    """NCHW interface for parity with the PyTorch module.  A full NHWC U-Net
    should call double_conv_forward_nhwc directly and skip these transposes."""
    x = jnp.transpose(x_nchw, (0, 2, 3, 1))
    z = double_conv_forward_nhwc(x, params, eps, th)
    return jnp.transpose(z, (0, 3, 1, 2))


def init_params(key, channels_in, channels_out):
    k1, k2, k3, k4 = jax.random.split(key, 4)
    return {
        # conv weights stored as (kh, kw, Cin, Cout)
        "w1": 0.1 * jax.random.normal(k1, (3, 3, channels_in, channels_out), jnp.float32),
        "b1": 0.1 * jax.random.normal(k2, (channels_out,), jnp.float32),
        "w2": 0.1 * jax.random.normal(k3, (3, 3, channels_out, channels_out), jnp.float32),
        "b2": 0.1 * jax.random.normal(k4, (channels_out,), jnp.float32),
        # BatchNorm2d default init: weight=1, bias=0
        "gamma1": jnp.ones((channels_out,), jnp.float32),
        "beta1": jnp.zeros((channels_out,), jnp.float32),
        "gamma2": jnp.ones((channels_out,), jnp.float32),
        "beta2": jnp.zeros((channels_out,), jnp.float32),
    }


# Pure-JAX f32 reference mirroring the PyTorch module (including conv bias,
# which train-mode BN cancels) for a numerical self-check.
def _reference(x_nchw, params, eps=1e-5):
    def conv(x, w, b):
        out = jax.lax.conv_general_dilated(
            x, jnp.transpose(w, (3, 2, 0, 1)),
            window_strides=(1, 1), padding=((1, 1), (1, 1)),
            dimension_numbers=("NCHW", "OIHW", "NCHW"))
        return out + b[None, :, None, None]

    def bn_relu(y, gamma, beta):
        mean = jnp.mean(y, axis=(0, 2, 3), keepdims=True)
        var = jnp.var(y, axis=(0, 2, 3), keepdims=True)
        z = (y - mean) * jax.lax.rsqrt(var + eps)
        z = z * gamma[None, :, None, None] + beta[None, :, None, None]
        return jnp.maximum(z, 0.0)

    h = bn_relu(conv(x_nchw, params["w1"], params["b1"]),
                params["gamma1"], params["beta1"])
    return bn_relu(conv(h, params["w2"], params["b2"]),
                   params["gamma2"], params["beta2"])


if __name__ == "__main__":
    N, Cin, H, W = 2, 4, 16, 16
    Cout = 8

    key = jax.random.PRNGKey(0)
    kx, kp = jax.random.split(key)
    x = jax.random.normal(kx, (N, Cin, H, W), jnp.float32)
    params = init_params(kp, Cin, Cout)

    # th=8 -> 2 H-strips per image: exercises the strip grid and the halo path.
    fwd = jax.jit(functools.partial(double_conv_forward, th=8))
    out = fwd(x, params)
    jax.block_until_ready(out)
    assert out.shape == (N, Cout, H, W), out.shape

    ref = _reference(x, params)
    # bf16 MXU operands / bf16 intermediates => bf16-level tolerance.
    err = float(jnp.max(jnp.abs(out - ref) / (1.0 + jnp.abs(ref))))
    assert err < 5e-2, f"max normalized err vs reference: {err}"
    print("KERNEL_OK")
</pallas_src>

<mosaic_0001>
module attributes {stable_mosaic.version = 11 : i64} {
  func.func @_conv_stats_kernel(%arg0: i32, %arg1: i32, %arg2: memref<1x8x16x4xf32, #tpu.memory_space<vmem>>, %arg3: memref<1x1x16x4xf32, #tpu.memory_space<vmem>>, %arg4: memref<1x1x16x4xf32, #tpu.memory_space<vmem>>, %arg5: memref<3x12x128xbf16, #tpu.memory_space<vmem>>, %arg6: memref<1x8x16x128xbf16, #tpu.memory_space<vmem>>, %arg7: memref<1x1x1x128xf32, #tpu.memory_space<vmem>>, %arg8: memref<1x1x1x128xf32, #tpu.memory_space<vmem>>, %arg9: memref<10x32x4xbf16, #tpu.memory_space<vmem>>, %arg10: memref<10x16x12xbf16, #tpu.memory_space<vmem>>) attributes {dimension_semantics = [#tpu.dimension_semantics<parallel>, #tpu.dimension_semantics<parallel>], iteration_bounds = array<i64: 2, 2>, scalar_prefetch = 0 : i64, scratch_operands = 2 : i64, tpu.core_type = #tpu.core_type<tc>, window_params = [{transform_indices = @transform_0, window_bounds = array<i64: 1, 8, 16, 4>}, {transform_indices = @transform_1, window_bounds = array<i64: 1, 1, 16, 4>}, {transform_indices = @transform_2, window_bounds = array<i64: 1, 1, 16, 4>}, {pipeline_mode = #tpu.pipeline_mode<synchronous>, transform_indices = @transform_3, window_bounds = array<i64: 3, 12, 128>}, {transform_indices = @transform_4, window_bounds = array<i64: 1, 8, 16, 128>}, {transform_indices = @transform_5, window_bounds = array<i64: 1, 1, 1, 128>}, {transform_indices = @transform_6, window_bounds = array<i64: 1, 1, 1, 128>}]} {
    %cst = arith.constant 0.000000e+00 : bf16
    %0 = vector.broadcast %cst : bf16 to vector<10x1x4xbf16>
    %c0 = arith.constant 0 : index
    %c7 = arith.constant 7 : index
    %c0_0 = arith.constant 0 : index
    %1 = vector.load %arg9[%c0, %c7, %c0_0] : memref<10x32x4xbf16, #tpu.memory_space<vmem>>, vector<10x1x4xbf16>
    tpu.vector_store %arg9[%c0, %c7, %c0_0], %0 {strides = array<i32>} : memref<10x32x4xbf16, #tpu.memory_space<vmem>>, vector<10x1x4xbf16>,
    %c0_1 = arith.constant 0 : index
    %c24 = arith.constant 24 : index
    %c0_2 = arith.constant 0 : index
    %2 = vector.load %arg9[%c0_1, %c24, %c0_2] : memref<10x32x4xbf16, #tpu.memory_space<vmem>>, vector<10x1x4xbf16>
    tpu.vector_store %arg9[%c0_1, %c24, %c0_2], %0 {strides = array<i32>} : memref<10x32x4xbf16, #tpu.memory_space<vmem>>, vector<10x1x4xbf16>,
    %c0_3 = arith.constant 0 : index
    %c0_4 = arith.constant 0 : index
    %c0_5 = arith.constant 0 : index
    %c0_6 = arith.constant 0 : index
    %3 = vector.load %arg2[%c0_3, %c0_4, %c0_5, %c0_6] : memref<1x8x16x4xf32, #tpu.memory_space<vmem>>, vector<1x8x16x4xf32>
    %4 = vector.shape_cast %3 : vector<1x8x16x4xf32> to vector<8x16x4xf32>
    %5 = arith.truncf %4 : vector<8x16x4xf32> to vector<8x16x4xbf16>
    %c1 = arith.constant 1 : index
    %c8 = arith.constant 8 : index
    %c0_7 = arith.constant 0 : index
    %6 = vector.load %arg9[%c1, %c8, %c0_7] : memref<10x32x4xbf16, #tpu.memory_space<vmem>>, vector<8x16x4xbf16>
    tpu.vector_store %arg9[%c1, %c8, %c0_7], %5 {strides = array<i32>} : memref<10x32x4xbf16, #tpu.memory_space<vmem>>, vector<8x16x4xbf16>,
    %c0_8 = arith.constant 0 : index
    %c0_9 = arith.constant 0 : index
    %c0_10 = arith.constant 0 : index
    %c0_11 = arith.constant 0 : index
    %7 = vector.load %arg3[%c0_8, %c0_9, %c0_10, %c0_11] : memref<1x1x16x4xf32, #tpu.memory_space<vmem>>, vector<1x1x16x4xf32>
    %8 = vector.shape_cast %7 : vector<1x1x16x4xf32> to vector<1x16x4xf32>
    %9 = arith.truncf %8 : vector<1x16x4xf32> to vector<1x16x4xbf16>
    %c0_12 = arith.constant 0 : index
    %c0_13 = arith.constant 0 : index
    %c0_14 = arith.constant 0 : index
    %c0_15 = arith.constant 0 : index
    %10 = vector.load %arg4[%c0_12, %c0_13, %c0_14, %c0_15] : memref<1x1x16x4xf32, #tpu.memory_space<vmem>>, vector<1x1x16x4xf32>
    %11 = vector.shape_cast %10 : vector<1x1x16x4xf32> to vector<1x16x4xf32>
    %12 = arith.truncf %11 : vector<1x16x4xf32> to vector<1x16x4xbf16>
    %c0_i32 = arith.constant 0 : i32
    %13 = arith.cmpi sgt, %arg1, %c0_i32 : i32
    %cst_16 = arith.constant 0.000000e+00 : bf16
    %14 = vector.broadcast %cst_16 : bf16 to vector<1x16x4xbf16>
    %15 = arith.select %13, %9, %14 : vector<1x16x4xbf16>
    %c1_i32 = arith.constant 1 : i32
    %16 = arith.cmpi slt, %arg1, %c1_i32 : i32
    %cst_17 = arith.constant 0.000000e+00 : bf16
    %17 = vector.broadcast %cst_17 : bf16 to vector<1x16x4xbf16>
    %18 = arith.select %16, %12, %17 : vector<1x16x4xbf16>
    %c0_18 = arith.constant 0 : index
    %c8_19 = arith.constant 8 : index
    %c0_20 = arith.constant 0 : index
    %19 = vector.load %arg9[%c0_18, %c8_19, %c0_20] : memref<10x32x4xbf16, #tpu.memory_space<vmem>>, vector<1x16x4xbf16>
    tpu.vector_store %arg9[%c0_18, %c8_19, %c0_20], %15 {strides = array<i32>} : memref<10x32x4xbf16, #tpu.memory_space<vmem>>, vector<1x16x4xbf16>,
    %c9 = arith.constant 9 : index
    %c8_21 = arith.constant 8 : index
    %c0_22 = arith.constant 0 : index
    %20 = vector.load %arg9[%c9, %c8_21, %c0_22] : memref<10x32x4xbf16, #tpu.memory_space<vmem>>, vector<1x16x4xbf16>
    tpu.vector_store %arg9[%c9, %c8_21, %c0_22], %18 {strides = array<i32>} : memref<10x32x4xbf16, #tpu.memory_space<vmem>>, vector<1x16x4xbf16>,
    %c0_23 = arith.constant 0 : index
    %c7_24 = arith.constant 7 : index
    %c0_25 = arith.constant 0 : index
    %21 = vector.load %arg9[%c0_23, %c7_24, %c0_25] : memref<10x32x4xbf16, #tpu.memory_space<vmem>>, vector<10x16x4xbf16>
    %c0_26 = arith.constant 0 : index
    %c0_27 = arith.constant 0 : index
    %c0_28 = arith.constant 0 : index
    %22 = vector.load %arg10[%c0_26, %c0_27, %c0_28] : memref<10x16x12xbf16, #tpu.memory_space<vmem>>, vector<10x16x4xbf16>
    tpu.vector_store %arg10[%c0_26, %c0_27, %c0_28], %21 {strides = array<i32>} : memref<10x16x12xbf16, #tpu.memory_space<vmem>>, vector<10x16x4xbf16>,
    %c0_29 = arith.constant 0 : index
    %c8_30 = arith.constant 8 : index
    %c0_31 = arith.constant 0 : index
    %23 = vector.load %arg9[%c0_29, %c8_30, %c0_31] : memref<10x32x4xbf16, #tpu.memory_space<vmem>>, vector<10x16x4xbf16>
    %c0_32 = arith.constant 0 : index
    %c0_33 = arith.constant 0 : index
    %c4 = arith.constant 4 : index
    %24 = vector.load %arg10[%c0_32, %c0_33, %c4] : memref<10x16x12xbf16, #tpu.memory_space<vmem>>, vector<10x16x4xbf16>
    tpu.vector_store %arg10[%c0_32, %c0_33, %c4], %23 {strides = array<i32>} : memref<10x16x12xbf16, #tpu.memory_space<vmem>>, vector<10x16x4xbf16>,
    %c0_34 = arith.constant 0 : index
    %c9_35 = arith.constant 9 : index
    %c0_36 = arith.constant 0 : index
    %25 = vector.load %arg9[%c0_34, %c9_35, %c0_36] : memref<10x32x4xbf16, #tpu.memory_space<vmem>>, vector<10x16x4xbf16>
    %c0_37 = arith.constant 0 : index
    %c0_38 = arith.constant 0 : index
    %c8_39 = arith.constant 8 : index
    %26 = vector.load %arg10[%c0_37, %c0_38, %c8_39] : memref<10x16x12xbf16, #tpu.memory_space<vmem>>, vector<10x16x4xbf16>
    tpu.vector_store %arg10[%c0_37, %c0_38, %c8_39], %25 {strides = array<i32>} : memref<10x16x12xbf16, #tpu.memory_space<vmem>>, vector<10x16x4xbf16>,
    %c0_40 = arith.constant 0 : index
    %c0_41 = arith.constant 0 : index
    %c0_42 = arith.constant 0 : index
    %27 = vector.load %arg10[%c0_40, %c0_41, %c0_42] : memref<10x16x12xbf16, #tpu.memory_space<vmem>>, vector<8x16x12xbf16>
    %c0_43 = arith.constant 0 : index
    %c0_44 = arith.constant 0 : index
    %c0_45 = arith.constant 0 : index
    %28 = vector.load %arg5[%c0_43, %c0_44, %c0_45] : memref<3x12x128xbf16, #tpu.memory_space<vmem>>, vector<1x12x128xbf16>
    %29 = vector.shape_cast %28 : vector<1x12x128xbf16> to vector<12x128xbf16>
    %cst_46 = arith.constant dense<0.000000e+00> : vector<8x16x128xf32>
    %30 = tpu.matmul %27, %29, %cst_46 {dimension_numbers = #tpu.dot_dimension_numbers<[2], [0], [0, 1], [1], [0, 0, 0, 1, 1, 1], [], []>} : vector<8x16x12xbf16>, vector<12x128xbf16>, vector<8x16x128xf32> -> vector<8x16x128xf32>
    %c1_47 = arith.constant 1 : index
    %c0_48 = arith.constant 0 : index
    %c0_49 = arith.constant 0 : index
    %31 = vector.load %arg10[%c1_47, %c0_48, %c0_49] : memref<10x16x12xbf16, #tpu.memory_space<vmem>>, vector<8x16x12xbf16>
    %c1_50 = arith.constant 1 : index
    %c0_51 = arith.constant 0 : index
    %c0_52 = arith.constant 0 : index
    %32 = vector.load %arg5[%c1_50, %c0_51, %c0_52] : memref<3x12x128xbf16, #tpu.memory_space<vmem>>, vector<1x12x128xbf16>
    %33 = vector.shape_cast %32 : vector<1x12x128xbf16> to vector<12x128xbf16>
    %cst_53 = arith.constant dense<0.000000e+00> : vector<8x16x128xf32>
    %34 = tpu.matmul %31, %33, %cst_53 {dimension_numbers = #tpu.dot_dimension_numbers<[2], [0], [0, 1], [1], [0, 0, 0, 1, 1, 1], [], []>} : vector<8x16x12xbf16>, vector<12x128xbf16>, vector<8x16x128xf32> -> vector<8x16x128xf32>
    %35 = arith.addf %30, %34 : vector<8x16x128xf32>
    %c2 = arith.constant 2 : index
    %c0_54 = arith.constant 0 : index
    %c0_55 = arith.constant 0 : index
    %36 = vector.load %arg10[%c2, %c0_54, %c0_55] : memref<10x16x12xbf16, #tpu.memory_space<vmem>>, vector<8x16x12xbf16>
    %c2_56 = arith.constant 2 : index
    %c0_57 = arith.constant 0 : index
    %c0_58 = arith.constant 0 : index
    %37 = vector.load %arg5[%c2_56, %c0_57, %c0_58] : memref<3x12x128xbf16, #tpu.memory_space<vmem>>, vector<1x12x128xbf16>
    %38 = vector.shape_cast %37 : vector<1x12x128xbf16> to vector<12x128xbf16>
    %cst_59 = arith.constant dense<0.000000e+00> : vector<8x16x128xf32>
    %39 = tpu.matmul %36, %38, %cst_59 {dimension_numbers = #tpu.dot_dimension_numbers<[2], [0], [0, 1], [1], [0, 0, 0, 1, 1, 1], [], []>} : vector<8x16x12xbf16>, vector<12x128xbf16>, vector<8x16x128xf32> -> vector<8x16x128xf32>
    %40 = arith.addf %35, %39 : vector<8x16x128xf32>
    %cst_60 = arith.constant dense<0.000000e+00> : vector<128xf32>
    %41 = vector.multi_reduction <add>, %40, %cst_60 [0, 1] : vector<8x16x128xf32> to vector<128xf32>
    %42 = vector.shape_cast %41 : vector<128xf32> to vector<1x1x1x128xf32>
    %c0_61 = arith.constant 0 : index
    %c0_62 = arith.constant 0 : index
    %c0_63 = arith.constant 0 : index
    %c0_64 = arith.constant 0 : index
    %43 = vector.load %arg7[%c0_61, %c0_62, %c0_63, %c0_64] : memref<1x1x1x128xf32, #tpu.memory_space<vmem>>, vector<1x1x1x128xf32>
    tpu.vector_store %arg7[%c0_61, %c0_62, %c0_63, %c0_64], %42 {strides = array<i32>} : memref<1x1x1x128xf32, #tpu.memory_space<vmem>>, vector<1x1x1x128xf32>,
    %44 = arith.mulf %40, %40 : vector<8x16x128xf32>
    %cst_65 = arith.constant dense<0.000000e+00> : vector<128xf32>
    %45 = vector.multi_reduction <add>, %44, %cst_65 [0, 1] : vector<8x16x128xf32> to vector<128xf32>
    %46 = vector.shape_cast %45 : vector<128xf32> to vector<1x1x1x128xf32>
    %c0_66 = arith.constant 0 : index
    %c0_67 = arith.constant 0 : index
    %c0_68 = arith.constant 0 : index
    %c0_69 = arith.constant 0 : index
    %47 = vector.load %arg8[%c0_66, %c0_67, %c0_68, %c0_69] : memref<1x1x1x128xf32, #tpu.memory_space<vmem>>, vector<1x1x1x128xf32>
    tpu.vector_store %arg8[%c0_66, %c0_67, %c0_68, %c0_69], %46 {strides = array<i32>} : memref<1x1x1x128xf32, #tpu.memory_space<vmem>>, vector<1x1x1x128xf32>,
    %48 = arith.truncf %40 : vector<8x16x128xf32> to vector<8x16x128xbf16>
    %c0_70 = arith.constant 0 : index
    %c0_71 = arith.constant 0 : index
    %c0_72 = arith.constant 0 : index
    %c0_73 = arith.constant 0 : index
    %49 = vector.load %arg6[%c0_70, %c0_71, %c0_72, %c0_73] : memref<1x8x16x128xbf16, #tpu.memory_space<vmem>>, vector<1x8x16x128xbf16>
    %50 = vector.shape_cast %49 : vector<1x8x16x128xbf16> to vector<8x16x128xbf16>
    %51 = vector.shape_cast %48 : vector<8x16x128xbf16> to vector<1x8x16x128xbf16>
    tpu.vector_store %arg6[%c0_70, %c0_71, %c0_72, %c0_73], %51 {strides = array<i32>} : memref<1x8x16x128xbf16, #tpu.memory_space<vmem>>, vector<1x8x16x128xbf16>,
    return
  }
  func.func @transform_0(%arg0: i32, %arg1: i32) -> (i32, i32, i32, i32) {
    %c0_i32 = arith.constant 0 : i32
    %c0_i32_0 = arith.constant 0 : i32
    %c0_i32_1 = arith.constant 0 : i32
    return %arg0, %arg1, %c0_i32, %c0_i32_0 : i32, i32, i32, i32
  }
  func.func @transform_1(%arg0: i32, %arg1: i32) -> (i32, i32, i32, i32) {
    %c8_i32 = arith.constant 8 : i32
    %0 = arith.muli %arg1, %c8_i32 : i32
    %c1_i32 = arith.constant 1 : i32
    %1 = arith.subi %0, %c1_i32 : i32
    %c0_i32 = arith.constant 0 : i32
    %2 = arith.maxsi %1, %c0_i32 : i32
    %c0_i32_0 = arith.constant 0 : i32
    %c0_i32_1 = arith.constant 0 : i32
    %c0_i32_2 = arith.constant 0 : i32
    return %arg0, %2, %c0_i32_0, %c0_i32_1 : i32, i32, i32, i32
  }
  func.func @transform_2(%arg0: i32, %arg1: i32) -> (i32, i32, i32, i32) {
    %c1_i32 = arith.constant 1 : i32
    %0 = arith.addi %arg1, %c1_i32 : i32
    %c8_i32 = arith.constant 8 : i32
    %1 = arith.muli %0, %c8_i32 : i32
    %c15_i32 = arith.constant 15 : i32
    %2 = arith.minsi %1, %c15_i32 : i32
    %c0_i32 = arith.constant 0 : i32
    %c0_i32_0 = arith.constant 0 : i32
    %c0_i32_1 = arith.constant 0 : i32
    return %arg0, %2, %c0_i32, %c0_i32_0 : i32, i32, i32, i32
  }
  func.func @transform_3(%arg0: i32, %arg1: i32) -> (i32, i32, i32) {
    %c0_i32 = arith.constant 0 : i32
    %c0_i32_0 = arith.constant 0 : i32
    %c0_i32_1 = arith.constant 0 : i32
    %c0_i32_2 = arith.constant 0 : i32
    return %c0_i32, %c0_i32_0, %c0_i32_1 : i32, i32, i32
  }
  func.func @transform_4(%arg0: i32, %arg1: i32) -> (i32, i32, i32, i32) {
    %c0_i32 = arith.constant 0 : i32
    %c0_i32_0 = arith.constant 0 : i32
    %c0_i32_1 = arith.constant 0 : i32
    return %arg0, %arg1, %c0_i32, %c0_i32_0 : i32, i32, i32, i32
  }
  func.func @transform_5(%arg0: i32, %arg1: i32) -> (i32, i32, i32, i32) {
    %c0_i32 = arith.constant 0 : i32
    %c0_i32_0 = arith.constant 0 : i32
    %c0_i32_1 = arith.constant 0 : i32
    return %arg0, %arg1, %c0_i32, %c0_i32_0 : i32, i32, i32, i32
  }
  func.func @transform_6(%arg0: i32, %arg1: i32) -> (i32, i32, i32, i32) {
    %c0_i32 = arith.constant 0 : i32
    %c0_i32_0 = arith.constant 0 : i32
    %c0_i32_1 = arith.constant 0 : i32
    return %arg0, %arg1, %c0_i32, %c0_i32_0 : i32, i32, i32, i32
  }
}

module attributes {stable_mosaic.version = 11 : i64} {
  func.func @_conv_stats_kernel(%arg0: i32, %arg1: i32, %arg2: memref<1x8x16x128xbf16, #tpu.memory_space<vmem>>, %arg3: memref<1x1x16x128xbf16, #tpu.memory_space<vmem>>, %arg4: memref<1x1x16x128xbf16, #tpu.memory_space<vmem>>, %arg5: memref<1x128xf32, #tpu.memory_space<vmem>>, %arg6: memref<1x128xf32, #tpu.memory_space<vmem>>, %arg7: memref<3x384x128xbf16, #tpu.memory_space<vmem>>, %arg8: memref<1x8x16x128xbf16, #tpu.memory_space<vmem>>, %arg9: memref<1x1x1x128xf32, #tpu.memory_space<vmem>>, %arg10: memref<1x1x1x128xf32, #tpu.memory_space<vmem>>, %arg11: memref<10x32x128xbf16, #tpu.memory_space<vmem>>, %arg12: memref<10x16x384xbf16, #tpu.memory_space<vmem>>) attributes {dimension_semantics = [#tpu.dimension_semantics<parallel>, #tpu.dimension_semantics<parallel>], iteration_bounds = array<i64: 2, 2>, scalar_prefetch = 0 : i64, scratch_operands = 2 : i64, tpu.core_type = #tpu.core_type<tc>, window_params = [{transform_indices = @transform_0, window_bounds = array<i64: 1, 8, 16, 128>}, {transform_indices = @transform_1, window_bounds = array<i64: 1, 1, 16, 128>}, {transform_indices = @transform_2, window_bounds = array<i64: 1, 1, 16, 128>}, {pipeline_mode = #tpu.pipeline_mode<synchronous>, transform_indices = @transform_3, window_bounds = array<i64: 1, 128>}, {pipeline_mode = #tpu.pipeline_mode<synchronous>, transform_indices = @transform_4, window_bounds = array<i64: 1, 128>}, {pipeline_mode = #tpu.pipeline_mode<synchronous>, transform_indices = @transform_5, window_bounds = array<i64: 3, 384, 128>}, {transform_indices = @transform_6, window_bounds = array<i64: 1, 8, 16, 128>}, {transform_indices = @transform_7, window_bounds = array<i64: 1, 1, 1, 128>}, {transform_indices = @transform_8, window_bounds = array<i64: 1, 1, 1, 128>}]} {
    %cst = arith.constant 0.000000e+00 : bf16
    %0 = vector.broadcast %cst : bf16 to vector<10x1x128xbf16>
    %c0 = arith.constant 0 : index
    %c7 = arith.constant 7 : index
    %c0_0 = arith.constant 0 : index
    %1 = vector.load %arg11[%c0, %c7, %c0_0] : memref<10x32x128xbf16, #tpu.memory_space<vmem>>, vector<10x1x128xbf16>
    tpu.vector_store %arg11[%c0, %c7, %c0_0], %0 {strides = array<i32>} : memref<10x32x128xbf16, #tpu.memory_space<vmem>>, vector<10x1x128xbf16>,
    %c0_1 = arith.constant 0 : index
    %c24 = arith.constant 24 : index
    %c0_2 = arith.constant 0 : index
    %2 = vector.load %arg11[%c0_1, %c24, %c0_2] : memref<10x32x128xbf16, #tpu.memory_space<vmem>>, vector<10x1x128xbf16>
    tpu.vector_store %arg11[%c0_1, %c24, %c0_2], %0 {strides = array<i32>} : memref<10x32x128xbf16, #tpu.memory_space<vmem>>, vector<10x1x128xbf16>,
    %c0_3 = arith.constant 0 : index
    %c0_4 = arith.constant 0 : index
    %c0_5 = arith.constant 0 : index
    %c0_6 = arith.constant 0 : index
    %3 = vector.load %arg2[%c0_3, %c0_4, %c0_5, %c0_6] : memref<1x8x16x128xbf16, #tpu.memory_space<vmem>>, vector<1x8x16x128xbf16>
    %4 = vector.shape_cast %3 : vector<1x8x16x128xbf16> to vector<8x16x128xbf16>
    %5 = arith.extf %4 : vector<8x16x128xbf16> to vector<8x16x128xf32>
    %c0_7 = arith.constant 0 : index
    %c0_8 = arith.constant 0 : index
    %6 = vector.load %arg5[%c0_7, %c0_8] : memref<1x128xf32, #tpu.memory_space<vmem>>, vector<1x128xf32>
    %7 = vector.shape_cast %6 : vector<1x128xf32> to vector<128xf32>
    %8 = vector.shape_cast %7 : vector<128xf32> to vector<1x1x128xf32>
    %9 = vector.broadcast %8 : vector<1x1x128xf32> to vector<8x16x128xf32>
    %10 = arith.mulf %5, %9 : vector<8x16x128xf32>
    %c0_9 = arith.constant 0 : index
    %c0_10 = arith.constant 0 : index
    %11 = vector.load %arg6[%c0_9, %c0_10] : memref<1x128xf32, #tpu.memory_space<vmem>>, vector<1x128xf32>
    %12 = vector.shape_cast %11 : vector<1x128xf32> to vector<128xf32>
    %13 = vector.shape_cast %12 : vector<128xf32> to vector<1x1x128xf32>
    %14 = vector.broadcast %13 : vector<1x1x128xf32> to vector<8x16x128xf32>
    %15 = arith.addf %10, %14 : vector<8x16x128xf32>
    %cst_11 = arith.constant 0.000000e+00 : f32
    %16 = vector.broadcast %cst_11 : f32 to vector<8x16x128xf32>
    %17 = arith.maximumf %15, %16 : vector<8x16x128xf32>
    %18 = arith.truncf %17 : vector<8x16x128xf32> to vector<8x16x128xbf16>
    %c1 = arith.constant 1 : index
    %c8 = arith.constant 8 : index
    %c0_12 = arith.constant 0 : index
    %19 = vector.load %arg11[%c1, %c8, %c0_12] : memref<10x32x128xbf16, #tpu.memory_space<vmem>>, vector<8x16x128xbf16>
    tpu.vector_store %arg11[%c1, %c8, %c0_12], %18 {strides = array<i32>} : memref<10x32x128xbf16, #tpu.memory_space<vmem>>, vector<8x16x128xbf16>,
    %c0_13 = arith.constant 0 : index
    %c0_14 = arith.constant 0 : index
    %c0_15 = arith.constant 0 : index
    %c0_16 = arith.constant 0 : index
    %20 = vector.load %arg3[%c0_13, %c0_14, %c0_15, %c0_16] : memref<1x1x16x128xbf16, #tpu.memory_space<vmem>>, vector<1x1x16x128xbf16>
    %21 = vector.shape_cast %20 : vector<1x1x16x128xbf16> to vector<1x16x128xbf16>
    %22 = arith.extf %21 : vector<1x16x128xbf16> to vector<1x16x128xf32>
    %c0_17 = arith.constant 0 : index
    %c0_18 = arith.constant 0 : index
    %23 = vector.load %arg5[%c0_17, %c0_18] : memref<1x128xf32, #tpu.memory_space<vmem>>, vector<1x128xf32>
    %24 = vector.shape_cast %23 : vector<1x128xf32> to vector<128xf32>
    %25 = vector.shape_cast %24 : vector<128xf32> to vector<1x1x128xf32>
    %26 = vector.broadcast %25 : vector<1x1x128xf32> to vector<1x16x128xf32>
    %27 = arith.mulf %22, %26 : vector<1x16x128xf32>
    %c0_19 = arith.constant 0 : index
    %c0_20 = arith.constant 0 : index
    %28 = vector.load %arg6[%c0_19, %c0_20] : memref<1x128xf32, #tpu.memory_space<vmem>>, vector<1x128xf32>
    %29 = vector.shape_cast %28 : vector<1x128xf32> to vector<128xf32>
    %30 = vector.shape_cast %29 : vector<128xf32> to vector<1x1x128xf32>
    %31 = vector.broadcast %30 : vector<1x1x128xf32> to vector<1x16x128xf32>
    %32 = arith.addf %27, %31 : vector<1x16x128xf32>
    %cst_21 = arith.constant 0.000000e+00 : f32
    %33 = vector.broadcast %cst_21 : f32 to vector<1x16x128xf32>
    %34 = arith.maximumf %32, %33 : vector<1x16x128xf32>
    %35 = arith.truncf %34 : vector<1x16x128xf32> to vector<1x16x128xbf16>
    %c0_22 = arith.constant 0 : index
    %c0_23 = arith.constant 0 : index
    %c0_24 = arith.constant 0 : index
    %c0_25 = arith.constant 0 : index
    %36 = vector.load %arg4[%c0_22, %c0_23, %c0_24, %c0_25] : memref<1x1x16x128xbf16, #tpu.memory_space<vmem>>, vector<1x1x16x128xbf16>
    %37 = vector.shape_cast %36 : vector<1x1x16x128xbf16> to vector<1x16x128xbf16>
    %38 = arith.extf %37 : vector<1x16x128xbf16> to vector<1x16x128xf32>
    %c0_26 = arith.constant 0 : index
    %c0_27 = arith.constant 0 : index
    %39 = vector.load %arg5[%c0_26, %c0_27] : memref<1x128xf32, #tpu.memory_space<vmem>>, vector<1x128xf32>
    %40 = vector.shape_cast %39 : vector<1x128xf32> to vector<128xf32>
    %41 = vector.shape_cast %40 : vector<128xf32> to vector<1x1x128xf32>
    %42 = vector.broadcast %41 : vector<1x1x128xf32> to vector<1x16x128xf32>
    %43 = arith.mulf %38, %42 : vector<1x16x128xf32>
    %c0_28 = arith.constant 0 : index
    %c0_29 = arith.constant 0 : index
    %44 = vector.load %arg6[%c0_28, %c0_29] : memref<1x128xf32, #tpu.memory_space<vmem>>, vector<1x128xf32>
    %45 = vector.shape_cast %44 : vector<1x128xf32> to vector<128xf32>
    %46 = vector.shape_cast %45 : vector<128xf32> to vector<1x1x128xf32>
    %47 = vector.broadcast %46 : vector<1x1x128xf32> to vector<1x16x128xf32>
    %48 = arith.addf %43, %47 : vector<1x16x128xf32>
    %cst_30 = arith.constant 0.000000e+00 : f32
    %49 = vector.broadcast %cst_30 : f32 to vector<1x16x128xf32>
    %50 = arith.maximumf %48, %49 : vector<1x16x128xf32>
    %51 = arith.truncf %50 : vector<1x16x128xf32> to vector<1x16x128xbf16>
    %c0_i32 = arith.constant 0 : i32
    %52 = arith.cmpi sgt, %arg1, %c0_i32 : i32
    %cst_31 = arith.constant 0.000000e+00 : bf16
    %53 = vector.broadcast %cst_31 : bf16 to vector<1x16x128xbf16>
    %54 = arith.select %52, %35, %53 : vector<1x16x128xbf16>
    %c1_i32 = arith.constant 1 : i32
    %55 = arith.cmpi slt, %arg1, %c1_i32 : i32
    %cst_32 = arith.constant 0.000000e+00 : bf16
    %56 = vector.broadcast %cst_32 : bf16 to vector<1x16x128xbf16>
    %57 = arith.select %55, %51, %56 : vector<1x16x128xbf16>
    %c0_33 = arith.constant 0 : index
    %c8_34 = arith.constant 8 : index
    %c0_35 = arith.constant 0 : index
    %58 = vector.load %arg11[%c0_33, %c8_34, %c0_35] : memref<10x32x128xbf16, #tpu.memory_space<vmem>>, vector<1x16x128xbf16>
    tpu.vector_store %arg11[%c0_33, %c8_34, %c0_35], %54 {strides = array<i32>} : memref<10x32x128xbf16, #tpu.memory_space<vmem>>, vector<1x16x128xbf16>,
    %c9 = arith.constant 9 : index
    %c8_36 = arith.constant 8 : index
    %c0_37 = arith.constant 0 : index
    %59 = vector.load %arg11[%c9, %c8_36, %c0_37] : memref<10x32x128xbf16, #tpu.memory_space<vmem>>, vector<1x16x128xbf16>
    tpu.vector_store %arg11[%c9, %c8_36, %c0_37], %57 {strides = array<i32>} : memref<10x32x128xbf16, #tpu.memory_space<vmem>>, vector<1x16x128xbf16>,
    %c0_38 = arith.constant 0 : index
    %c7_39 = arith.constant 7 : index
    %c0_40 = arith.constant 0 : index
    %60 = vector.load %arg11[%c0_38, %c7_39, %c0_40] : memref<10x32x128xbf16, #tpu.memory_space<vmem>>, vector<10x16x128xbf16>
    %c0_41 = arith.constant 0 : index
    %c0_42 = arith.constant 0 : index
    %c0_43 = arith.constant 0 : index
    %61 = vector.load %arg12[%c0_41, %c0_42, %c0_43] : memref<10x16x384xbf16, #tpu.memory_space<vmem>>, vector<10x16x128xbf16>
    tpu.vector_store %arg12[%c0_41, %c0_42, %c0_43], %60 {strides = array<i32>} : memref<10x16x384xbf16, #tpu.memory_space<vmem>>, vector<10x16x128xbf16>,
    %c0_44 = arith.constant 0 : index
    %c8_45 = arith.constant 8 : index
    %c0_46 = arith.constant 0 : index
    %62 = vector.load %arg11[%c0_44, %c8_45, %c0_46] : memref<10x32x128xbf16, #tpu.memory_space<vmem>>, vector<10x16x128xbf16>
    %c0_47 = arith.constant 0 : index
    %c0_48 = arith.constant 0 : index
    %c128 = arith.constant 128 : index
    %63 = vector.load %arg12[%c0_47, %c0_48, %c128] : memref<10x16x384xbf16, #tpu.memory_space<vmem>>, vector<10x16x128xbf16>
    tpu.vector_store %arg12[%c0_47, %c0_48, %c128], %62 {strides = array<i32>} : memref<10x16x384xbf16, #tpu.memory_space<vmem>>, vector<10x16x128xbf16>,
    %c0_49 = arith.constant 0 : index
    %c9_50 = arith.constant 9 : index
    %c0_51 = arith.constant 0 : index
    %64 = vector.load %arg11[%c0_49, %c9_50, %c0_51] : memref<10x32x128xbf16, #tpu.memory_space<vmem>>, vector<10x16x128xbf16>
    %c0_52 = arith.constant 0 : index
    %c0_53 = arith.constant 0 : index
    %c256 = arith.constant 256 : index
    %65 = vector.load %arg12[%c0_52, %c0_53, %c256] : memref<10x16x384xbf16, #tpu.memory_space<vmem>>, vector<10x16x128xbf16>
    tpu.vector_store %arg12[%c0_52, %c0_53, %c256], %64 {strides = array<i32>} : memref<10x16x384xbf16, #tpu.memory_space<vmem>>, vector<10x16x128xbf16>,
    %c0_54 = arith.constant 0 : index
    %c0_55 = arith.constant 0 : index
    %c0_56 = arith.constant 0 : index
    %66 = vector.load %arg12[%c0_54, %c0_55, %c0_56] : memref<10x16x384xbf16, #tpu.memory_space<vmem>>, vector<8x16x384xbf16>
    %c0_57 = arith.constant 0 : index
    %c0_58 = arith.constant 0 : index
    %c0_59 = arith.constant 0 : index
    %67 = vector.load %arg7[%c0_57, %c0_58, %c0_59] : memref<3x384x128xbf16, #tpu.memory_space<vmem>>, vector<1x384x128xbf16>
    %68 = vector.shape_cast %67 : vector<1x384x128xbf16> to vector<384x128xbf16>
    %cst_60 = arith.constant dense<0.000000e+00> : vector<8x16x128xf32>
    %69 = tpu.matmul %66, %68, %cst_60 {dimension_numbers = #tpu.dot_dimension_numbers<[2], [0], [0, 1], [1], [0, 0, 0, 1, 1, 1], [], []>} : vector<8x16x384xbf16>, vector<384x128xbf16>, vector<8x16x128xf32> -> vector<8x16x128xf32>
    %c1_61 = arith.constant 1 : index
    %c0_62 = arith.constant 0 : index
    %c0_63 = arith.constant 0 : index
    %70 = vector.load %arg12[%c1_61, %c0_62, %c0_63] : memref<10x16x384xbf16, #tpu.memory_space<vmem>>, vector<8x16x384xbf16>
    %c1_64 = arith.constant 1 : index
    %c0_65 = arith.constant 0 : index
    %c0_66 = arith.constant 0 : index
    %71 = vector.load %arg7[%c1_64, %c0_65, %c0_66] : memref<3x384x128xbf16, #tpu.memory_space<vmem>>, vector<1x384x128xbf16>
    %72 = vector.shape_cast %71 : vector<1x384x128xbf16> to vector<384x128xbf16>
    %cst_67 = arith.constant dense<0.000000e+00> : vector<8x16x128xf32>
    %73 = tpu.matmul %70, %72, %cst_67 {dimension_numbers = #tpu.dot_dimension_numbers<[2], [0], [0, 1], [1], [0, 0, 0, 1, 1, 1], [], []>} : vector<8x16x384xbf16>, vector<384x128xbf16>, vector<8x16x128xf32> -> vector<8x16x128xf32>
    %74 = arith.addf %69, %73 : vector<8x16x128xf32>
    %c2 = arith.constant 2 : index
    %c0_68 = arith.constant 0 : index
    %c0_69 = arith.constant 0 : index
    %75 = vector.load %arg12[%c2, %c0_68, %c0_69] : memref<10x16x384xbf16, #tpu.memory_space<vmem>>, vector<8x16x384xbf16>
    %c2_70 = arith.constant 2 : index
    %c0_71 = arith.constant 0 : index
    %c0_72 = arith.constant 0 : index
    %76 = vector.load %arg7[%c2_70, %c0_71, %c0_72] : memref<3x384x128xbf16, #tpu.memory_space<vmem>>, vector<1x384x128xbf16>
    %77 = vector.shape_cast %76 : vector<1x384x128xbf16> to vector<384x128xbf16>
    %cst_73 = arith.constant dense<0.000000e+00> : vector<8x16x128xf32>
    %78 = tpu.matmul %75, %77, %cst_73 {dimension_numbers = #tpu.dot_dimension_numbers<[2], [0], [0, 1], [1], [0, 0, 0, 1, 1, 1], [], []>} : vector<8x16x384xbf16>, vector<384x128xbf16>, vector<8x16x128xf32> -> vector<8x16x128xf32>
    %79 = arith.addf %74, %78 : vector<8x16x128xf32>
    %cst_74 = arith.constant dense<0.000000e+00> : vector<128xf32>
    %80 = vector.multi_reduction <add>, %79, %cst_74 [0, 1] : vector<8x16x128xf32> to vector<128xf32>
    %81 = vector.shape_cast %80 : vector<128xf32> to vector<1x1x1x128xf32>
    %c0_75 = arith.constant 0 : index
    %c0_76 = arith.constant 0 : index
    %c0_77 = arith.constant 0 : index
    %c0_78 = arith.constant 0 : index
    %82 = vector.load %arg9[%c0_75, %c0_76, %c0_77, %c0_78] : memref<1x1x1x128xf32, #tpu.memory_space<vmem>>, vector<1x1x1x128xf32>
    tpu.vector_store %arg9[%c0_75, %c0_76, %c0_77, %c0_78], %81 {strides = array<i32>} : memref<1x1x1x128xf32, #tpu.memory_space<vmem>>, vector<1x1x1x128xf32>,
    %83 = arith.mulf %79, %79 : vector<8x16x128xf32>
    %cst_79 = arith.constant dense<0.000000e+00> : vector<128xf32>
    %84 = vector.multi_reduction <add>, %83, %cst_79 [0, 1] : vector<8x16x128xf32> to vector<128xf32>
    %85 = vector.shape_cast %84 : vector<128xf32> to vector<1x1x1x128xf32>
    %c0_80 = arith.constant 0 : index
    %c0_81 = arith.constant 0 : index
    %c0_82 = arith.constant 0 : index
    %c0_83 = arith.constant 0 : index
    %86 = vector.load %arg10[%c0_80, %c0_81, %c0_82, %c0_83] : memref<1x1x1x128xf32, #tpu.memory_space<vmem>>, vector<1x1x1x128xf32>
    tpu.vector_store %arg10[%c0_80, %c0_81, %c0_82, %c0_83], %85 {strides = array<i32>} : memref<1x1x1x128xf32, #tpu.memory_space<vmem>>, vector<1x1x1x128xf32>,
    %87 = arith.truncf %79 : vector<8x16x128xf32> to vector<8x16x128xbf16>
    %c0_84 = arith.constant 0 : index
    %c0_85 = arith.constant 0 : index
    %c0_86 = arith.constant 0 : index
    %c0_87 = arith.constant 0 : index
    %88 = vector.load %arg8[%c0_84, %c0_85, %c0_86, %c0_87] : memref<1x8x16x128xbf16, #tpu.memory_space<vmem>>, vector<1x8x16x128xbf16>
    %89 = vector.shape_cast %88 : vector<1x8x16x128xbf16> to vector<8x16x128xbf16>
    %90 = vector.shape_cast %87 : vector<8x16x128xbf16> to vector<1x8x16x128xbf16>
    tpu.vector_store %arg8[%c0_84, %c0_85, %c0_86, %c0_87], %90 {strides = array<i32>} : memref<1x8x16x128xbf16, #tpu.memory_space<vmem>>, vector<1x8x16x128xbf16>,
    return
  }
  func.func @transform_0(%arg0: i32, %arg1: i32) -> (i32, i32, i32, i32) {
    %c0_i32 = arith.constant 0 : i32
    %c0_i32_0 = arith.constant 0 : i32
    %c0_i32_1 = arith.constant 0 : i32
    return %arg0, %arg1, %c0_i32, %c0_i32_0 : i32, i32, i32, i32
  }
  func.func @transform_1(%arg0: i32, %arg1: i32) -> (i32, i32, i32, i32) {
    %c8_i32 = arith.constant 8 : i32
    %0 = arith.muli %arg1, %c8_i32 : i32
    %c1_i32 = arith.constant 1 : i32
    %1 = arith.subi %0, %c1_i32 : i32
    %c0_i32 = arith.constant 0 : i32
    %2 = arith.maxsi %1, %c0_i32 : i32
    %c0_i32_0 = arith.constant 0 : i32
    %c0_i32_1 = arith.constant 0 : i32
    %c0_i32_2 = arith.constant 0 : i32
    return %arg0, %2, %c0_i32_0, %c0_i32_1 : i32, i32, i32, i32
  }
  func.func @transform_2(%arg0: i32, %arg1: i32) -> (i32, i32, i32, i32) {
    %c1_i32 = arith.constant 1 : i32
    %0 = arith.addi %arg1, %c1_i32 : i32
    %c8_i32 = arith.constant 8 : i32
    %1 = arith.muli %0, %c8_i32 : i32
    %c15_i32 = arith.constant 15 : i32
    %2 = arith.minsi %1, %c15_i32 : i32
    %c0_i32 = arith.constant 0 : i32
    %c0_i32_0 = arith.constant 0 : i32
    %c0_i32_1 = arith.constant 0 : i32
    return %arg0, %2, %c0_i32, %c0_i32_0 : i32, i32, i32, i32
  }
  func.func @transform_3(%arg0: i32, %arg1: i32) -> (i32, i32) {
    %c0_i32 = arith.constant 0 : i32
    %c0_i32_0 = arith.constant 0 : i32
    %c0_i32_1 = arith.constant 0 : i32
    return %c0_i32, %c0_i32_0 : i32, i32
  }
  func.func @transform_4(%arg0: i32, %arg1: i32) -> (i32, i32) {
    %c0_i32 = arith.constant 0 : i32
    %c0_i32_0 = arith.constant 0 : i32
    %c0_i32_1 = arith.constant 0 : i32
    return %c0_i32, %c0_i32_0 : i32, i32
  }
  func.func @transform_5(%arg0: i32, %arg1: i32) -> (i32, i32, i32) {
    %c0_i32 = arith.constant 0 : i32
    %c0_i32_0 = arith.constant 0 : i32
    %c0_i32_1 = arith.constant 0 : i32
    %c0_i32_2 = arith.constant 0 : i32
    return %c0_i32, %c0_i32_0, %c0_i32_1 : i32, i32, i32
  }
  func.func @transform_6(%arg0: i32, %arg1: i32) -> (i32, i32, i32, i32) {
    %c0_i32 = arith.constant 0 : i32
    %c0_i32_0 = arith.constant 0 : i32
    %c0_i32_1 = arith.constant 0 : i32
    return %arg0, %arg1, %c0_i32, %c0_i32_0 : i32, i32, i32, i32
  }
  func.func @transform_7(%arg0: i32, %arg1: i32) -> (i32, i32, i32, i32) {
    %c0_i32 = arith.constant 0 : i32
    %c0_i32_0 = arith.constant 0 : i32
    %c0_i32_1 = arith.constant 0 : i32
    return %arg0, %arg1, %c0_i32, %c0_i32_0 : i32, i32, i32, i32
  }
  func.func @transform_8(%arg0: i32, %arg1: i32) -> (i32, i32, i32, i32) {
    %c0_i32 = arith.constant 0 : i32
    %c0_i32_0 = arith.constant 0 : i32
    %c0_i32_1 = arith.constant 0 : i32
    return %arg0, %arg1, %c0_i32, %c0_i32_0 : i32, i32, i32, i32
  }
}

module attributes {stable_mosaic.version = 11 : i64} {
  func.func @_bn_relu_kernel(%arg0: i32, %arg1: i32, %arg2: memref<1x8x16x128xbf16, #tpu.memory_space<vmem>>, %arg3: memref<1x128xf32, #tpu.memory_space<vmem>>, %arg4: memref<1x128xf32, #tpu.memory_space<vmem>>, %arg5: memref<1x8x16x128xf32, #tpu.memory_space<vmem>>) attributes {dimension_semantics = [#tpu.dimension_semantics<parallel>, #tpu.dimension_semantics<parallel>], iteration_bounds = array<i64: 2, 2>, scalar_prefetch = 0 : i64, scratch_operands = 0 : i64, tpu.core_type = #tpu.core_type<tc>, window_params = [{transform_indices = @transform_0, window_bounds = array<i64: 1, 8, 16, 128>}, {pipeline_mode = #tpu.pipeline_mode<synchronous>, transform_indices = @transform_1, window_bounds = array<i64: 1, 128>}, {pipeline_mode = #tpu.pipeline_mode<synchronous>, transform_indices = @transform_2, window_bounds = array<i64: 1, 128>}, {transform_indices = @transform_3, window_bounds = array<i64: 1, 8, 16, 128>}]} {
    %c0 = arith.constant 0 : index
    %c0_0 = arith.constant 0 : index
    %c0_1 = arith.constant 0 : index
    %c0_2 = arith.constant 0 : index
    %0 = vector.load %arg2[%c0, %c0_0, %c0_1, %c0_2] : memref<1x8x16x128xbf16, #tpu.memory_space<vmem>>, vector<1x8x16x128xbf16>
    %1 = vector.shape_cast %0 : vector<1x8x16x128xbf16> to vector<8x16x128xbf16>
    %2 = arith.extf %1 : vector<8x16x128xbf16> to vector<8x16x128xf32>
    %c0_3 = arith.constant 0 : index
    %c0_4 = arith.constant 0 : index
    %3 = vector.load %arg3[%c0_3, %c0_4] : memref<1x128xf32, #tpu.memory_space<vmem>>, vector<1x128xf32>
    %4 = vector.shape_cast %3 : vector<1x128xf32> to vector<128xf32>
    %5 = vector.shape_cast %4 : vector<128xf32> to vector<1x1x128xf32>
    %6 = vector.broadcast %5 : vector<1x1x128xf32> to vector<8x16x128xf32>
    %7 = arith.mulf %2, %6 : vector<8x16x128xf32>
    %c0_5 = arith.constant 0 : index
    %c0_6 = arith.constant 0 : index
    %8 = vector.load %arg4[%c0_5, %c0_6] : memref<1x128xf32, #tpu.memory_space<vmem>>, vector<1x128xf32>
    %9 = vector.shape_cast %8 : vector<1x128xf32> to vector<128xf32>
    %10 = vector.shape_cast %9 : vector<128xf32> to vector<1x1x128xf32>
    %11 = vector.broadcast %10 : vector<1x1x128xf32> to vector<8x16x128xf32>
    %12 = arith.addf %7, %11 : vector<8x16x128xf32>
    %cst = arith.constant 0.000000e+00 : f32
    %13 = vector.broadcast %cst : f32 to vector<8x16x128xf32>
    %14 = arith.maximumf %12, %13 : vector<8x16x128xf32>
    %c0_7 = arith.constant 0 : index
    %c0_8 = arith.constant 0 : index
    %c0_9 = arith.constant 0 : index
    %c0_10 = arith.constant 0 : index
    %15 = vector.load %arg5[%c0_7, %c0_8, %c0_9, %c0_10] : memref<1x8x16x128xf32, #tpu.memory_space<vmem>>, vector<1x8x16x128xf32>
    %16 = vector.shape_cast %15 : vector<1x8x16x128xf32> to vector<8x16x128xf32>
    %17 = vector.shape_cast %14 : vector<8x16x128xf32> to vector<1x8x16x128xf32>
    tpu.vector_store %arg5[%c0_7, %c0_8, %c0_9, %c0_10], %17 {strides = array<i32>} : memref<1x8x16x128xf32, #tpu.memory_space<vmem>>, vector<1x8x16x128xf32>,
    return
  }
  func.func @transform_0(%arg0: i32, %arg1: i32) -> (i32, i32, i32, i32) {
    %c0_i32 = arith.constant 0 : i32
    %c0_i32_0 = arith.constant 0 : i32
    %c0_i32_1 = arith.constant 0 : i32
    return %arg0, %arg1, %c0_i32, %c0_i32_0 : i32, i32, i32, i32
  }
  func.func @transform_1(%arg0: i32, %arg1: i32) -> (i32, i32) {
    %c0_i32 = arith.constant 0 : i32
    %c0_i32_0 = arith.constant 0 : i32
    %c0_i32_1 = arith.constant 0 : i32
    return %c0_i32, %c0_i32_0 : i32, i32
  }
  func.func @transform_2(%arg0: i32, %arg1: i32) -> (i32, i32) {
    %c0_i32 = arith.constant 0 : i32
    %c0_i32_0 = arith.constant 0 : i32
    %c0_i32_1 = arith.constant 0 : i32
    return %c0_i32, %c0_i32_0 : i32, i32
  }
  func.func @transform_3(%arg0: i32, %arg1: i32) -> (i32, i32, i32, i32) {
    %c0_i32 = arith.constant 0 : i32
    %c0_i32_0 = arith.constant 0 : i32
    %c0_i32_1 = arith.constant 0 : i32
    return %arg0, %arg1, %c0_i32, %c0_i32_0 : i32, i32, i32, i32
  }
}

</mosaic_0001>

<llo_original>
// kernel: double_conv_forward.5
$region0: #{double_conv_forward.5}
  #allocation0 [shape = 'u32[]', space=smem, size = 0x4, offset = 0x4, fixed_abs, tag = 'smem constant byte address 0x4 - core index']
  #allocation1 [shape = 'u32[144,128]{1,0:T(1,128)}', space=vmem, size = 0x12000, scoped, tag = 'internal scratch']
  %s0 = inlined_call_operand.vmem [shape: bf16[2,16,16,128], index: 0, kind: input, shape index: {}]
  %s1 = inlined_call_operand.vmem [shape: f32[1,128], index: 1, kind: input, shape index: {}]
  %s2 = inlined_call_operand.vmem [shape: f32[1,128], index: 2, kind: input, shape index: {}]
  %s3 = inlined_call_operand.vmem [shape: f32[2,16,16,128], index: 3, kind: output, shape index: {}]
  %s4 = sld [smem:[#allocation0]]
  $region45: #{double_conv_forward.5} parent=0
    _
  %s6 = ssub.s32 1, %s4
  %s7 = scalar_select 0, %s6, %s4
  loop: start=0, step=1, limit=6
  $region2: #{double_conv_forward.5} parent=0 // loop_pre_header
    _
  $region3: #{double_conv_forward.5} parent=0 // loop_header
    %s9 = sphi 0, %s13
    %p10 = scmp.ge.s32.totalorder %s9, 6
    %s16 = sphi 0, %s28
    %s17 = sphi 0, %s24
    %s18 = sphi 0, %s16
    %s19 = sphi 0, %s17
    %s20 = sphi 0, %s18
    %s21 = sphi 0, %s19
    %s33 = sphi 0, %s35
    %s36 = sphi 0, %s33
    %s37 = sphi 0, %s36
    %s53 = sphi 0, %s37
    %s57 = sphi 0, %s57
    %s59 = sphi 0, %s57
    %s60 = sphi 0, %s59
    %s74 = sphi 0, %s60
    %s78 = sphi 0, %s78
    %s80 = sphi 0, %s78
    %s81 = sphi 0, %s80
    %s95 = sphi 0, %s81
    %s103 = sphi 0, %s105
    %s106 = sphi 0, %s103
    %s107 = sphi 0, %s106
    %s123 = sphi 0, %s107
  $region4: #{double_conv_forward.5} parent=0 // loop_header_branch
    %12 = sbr.rel (%p10) target = $region8
  $region5: #{double_conv_forward.5} parent=0 // loop_body
    %s14 = ssub.s32 %s9, 1
    %s15 = ssub.s32 %s9, 2
    %s22 = sadd.s32 1, %s17
    %p23 = scmp.ge.s32.totalorder %s22, 2
    %s24 = scalar_select %p23, 0, %s22
    %s25 = sadd.s32 1, %s16
    %s26 = scalar_select %p23, %s25, %s16
    %p27 = scmp.ge.s32.totalorder %s26, 2
    %s28 = scalar_select %p27, 0, %s26
    %s29 = ssub.s32 %s16, %s28
    %s30 = ssub.s32 %s17, %s24
    %s31 = sor.u32 %s29, %s30
    %p32 = scmp.eq.s32.totalorder %s31, 0
    %s34 = sadd.s32 %s33, 1
    %s35 = scalar_select %p32, %s33, %s34
    %p38 = pneg %p32
    %p39 = scmp.eq.s32.totalorder %s9, 3
    %p40 = por %p38, %p39
    %p41 = scmp.ne.s32.totalorder %s33, %s36
    %p42 = scmp.eq.s32.totalorder %s9, 0
    %p43 = por %p41, %p42
    %p44 = scmp.ne.s32.totalorder %s33, %s36
    %p45 = scmp.eq.s32.totalorder %s14, 3
    %p46 = por %p44, %p45
    %p47 = scmp.ne.s32.totalorder %s36, %s37
    %p48 = scmp.eq.s32.totalorder %s14, 0
    %p49 = por %p47, %p48
    %p50 = scmp.ne.s32.totalorder %s36, %s37
    %p51 = scmp.eq.s32.totalorder %s15, 3
    %p52 = por %p50, %p51
    %p54 = scmp.ne.s32.totalorder %s37, %s53
    %p55 = scmp.eq.s32.totalorder %s15, 0
    %p56 = por %p54, %p55
    %s58 = sadd.s32 %s57, 1
    %p61 = scmp.eq.s32.totalorder %s9, 3
    %p62 = scmp.ne.s32.totalorder %s57, %s59
    %p63 = scmp.eq.s32.totalorder %s9, 0
    %p64 = por %p62, %p63
    %p65 = scmp.ne.s32.totalorder %s57, %s59
    %p66 = scmp.eq.s32.totalorder %s14, 3
    %p67 = por %p65, %p66
    %p68 = scmp.ne.s32.totalorder %s59, %s60
    %p69 = scmp.eq.s32.totalorder %s14, 0
    %p70 = por %p68, %p69
    %p71 = scmp.ne.s32.totalorder %s59, %s60
    %p72 = scmp.eq.s32.totalorder %s15, 3
    %p73 = por %p71, %p72
    %p75 = scmp.ne.s32.totalorder %s60, %s74
    %p76 = scmp.eq.s32.totalorder %s15, 0
    %p77 = por %p75, %p76
    %s79 = sadd.s32 %s78, 1
    %p82 = scmp.eq.s32.totalorder %s9, 3
    %p83 = scmp.ne.s32.totalorder %s78, %s80
    %p84 = scmp.eq.s32.totalorder %s9, 0
    %p85 = por %p83, %p84
    %p86 = scmp.ne.s32.totalorder %s78, %s80
    %p87 = scmp.eq.s32.totalorder %s14, 3
    %p88 = por %p86, %p87
    %p89 = scmp.ne.s32.totalorder %s80, %s81
    %p90 = scmp.eq.s32.totalorder %s14, 0
    %p91 = por %p89, %p90
    %p92 = scmp.ne.s32.totalorder %s80, %s81
    %p93 = scmp.eq.s32.totalorder %s15, 3
    %p94 = por %p92, %p93
    %p96 = scmp.ne.s32.totalorder %s81, %s95
    %p97 = scmp.eq.s32.totalorder %s15, 0
    %p98 = por %p96, %p97
    %s99 = ssub.s32 %s16, %s28
    %s100 = ssub.s32 %s17, %s24
    %s101 = sor.u32 %s99, %s100
    %p102 = scmp.eq.s32.totalorder %s101, 0
    %s104 = sadd.s32 %s103, 1
    %s105 = scalar_select %p102, %s103, %s104
    %p108 = pneg %p102
    %p109 = scmp.eq.s32.totalorder %s9, 3
    %p110 = por %p108, %p109
    %p111 = scmp.ne.s32.totalorder %s103, %s106
    %p112 = scmp.eq.s32.totalorder %s9, 0
    %p113 = por %p111, %p112
    %p114 = scmp.ne.s32.totalorder %s103, %s106
    %p115 = scmp.eq.s32.totalorder %s14, 3
    %p116 = por %p114, %p115
    %p117 = scmp.ne.s32.totalorder %s106, %s107
    %p118 = scmp.eq.s32.totalorder %s14, 0
    %p119 = por %p117, %p118
    %p120 = scmp.ne.s32.totalorder %s106, %s107
    %p121 = scmp.eq.s32.totalorder %s15, 3
    %p122 = por %p120, %p121
    %p124 = scmp.ne.s32.totalorder %s107, %s123
    %p125 = scmp.eq.s32.totalorder %s15, 0
    %p126 = por %p124, %p125
    %p127 = scmp.le.s32.totalorder 1, %s9
    %p128 = scmp.lt.s32.totalorder %s9, 5
    %p129 = pnand %p127, %p128
    %p130 = pneg %p129
    // Predicated region
    $region9: #{double_conv_forward.5} parent=5 // pred_check
      _
    $region10: #{double_conv_forward.5} parent=5 // pred_check_branch
      %132 = sbr.rel (%p129) target = $region12
    $region11: #{double_conv_forward.5} parent=5 // pred_region
      %s133 = ssub.s32 %s9, 1
      // Predicated region
      $region13: #{double_conv_forward.5} parent=11 // pred_check
        %p134 = pneg %p70
      $region14: #{double_conv_forward.5} parent=11 // pred_check_branch
        %136 = sbr.rel (%p134) target = $region16
      $region15: #{double_conv_forward.5} parent=11 // pred_region
        _
      $region16: #{double_conv_forward.5} parent=11 // pred_fallthru
        _
      // Predicated region
      $region17: #{double_conv_forward.5} parent=11 // pred_check
        %p137 = pneg %p91
      $region18: #{double_conv_forward.5} parent=11 // pred_check_branch
        %139 = sbr.rel (%p137) target = $region20
      $region19: #{double_conv_forward.5} parent=11 // pred_region
        _
      $region20: #{double_conv_forward.5} parent=11 // pred_fallthru
        _
    $region12: #{double_conv_forward.5} parent=5 // pred_fallthru
      _
    %p140 = scmp.lt.s32.totalorder %s9, 4
    // Predicated region
    $region21: #{double_conv_forward.5} parent=5 // pred_check
      %p141 = pneg %p140
    $region22: #{double_conv_forward.5} parent=5 // pred_check_branch
      %143 = sbr.rel (%p141) target = $region24
    $region23: #{double_conv_forward.5} parent=5 // pred_region
      // Predicated region
      $region25: #{double_conv_forward.5} parent=23 // pred_check
        %p144 = pneg %p43
      $region26: #{double_conv_forward.5} parent=23 // pred_check_branch
        %146 = sbr.rel (%p144) target = $region28
      $region27: #{double_conv_forward.5} parent=23 // pred_region
        %s147 = smul.u32 8, %s17
        %p148 = scmp.lt.s32.totalorder %s16, 1
        %s149 = scalar_select %p148, %s16, 1
        %p150 = scmp.lt.s32.totalorder %s147, 15
        %s151 = scalar_select %p150, %s147, 15
        %s152 = smul.addr %s151, 2
        %s153 = smul.addr %s149, 32
        %s154 = sadd.s32 %s152, %s153
        %s155 = smul.addr %s154, 4
        %s156 = scalar_lea.vmem %s0, %s155
        %s157 = smul.u32 8, %s17
      $region28: #{double_conv_forward.5} parent=23 // pred_fallthru
        _
    $region24: #{double_conv_forward.5} parent=5 // pred_fallthru
      _
    %p158 = scmp.le.s32.totalorder 1, %s9
    %p159 = scmp.lt.s32.totalorder %s9, 5
    %p160 = pnand %p158, %p159
    %p161 = pneg %p160
    // Predicated region
    $region29: #{double_conv_forward.5} parent=5 // pred_check
      _
    $region30: #{double_conv_forward.5} parent=5 // pred_check_branch
      %163 = sbr.rel (%p160) target = $region32
    $region31: #{double_conv_forward.5} parent=5 // pred_region
      %s164 = ssub.s32 %s9, 1
      %s165 = smul.u32 8, %s19
      %p166 = scmp.lt.s32.totalorder %s18, 1
      %s167 = scalar_select %p166, %s18, 1
      %p168 = scmp.lt.s32.totalorder %s165, 15
      %s169 = scalar_select %p168, %s165, 15
      %s170 = smul.addr %s169, 2
      %s171 = smul.addr %s167, 32
      %s172 = sadd.s32 %s170, %s171
      %s173 = smul.addr %s172, 4
      %s174 = scalar_lea.vmem %s0, %s173
      %p175 = pneg %p49
      %p176 = pneg %p46
      %p177 = pneg %p70
      %p178 = pneg %p67
      %p179 = pneg %p91
      %p180 = pneg %p88
      %p181 = pneg %p119
      %p182 = pneg %p116
      %s183 = smul.u32 8, %s19
      %p184 = scmp.lt.s32.totalorder %s18, 1
      %s185 = scalar_select %p184, %s18, 1
      %p186 = scmp.lt.s32.totalorder %s183, 15
      %s187 = scalar_select %p186, %s183, 15
      %s188 = smul.addr %s187, 2
      %s189 = smul.addr %s185, 32
      %s190 = sadd.s32 %s188, %s189
      %s191 = smul.addr %s190, 8
      %s192 = scalar_lea.vmem %s3, %s191
      %s193 = smul.u32 8, %s19
      %p194 = scmp.lt.s32.totalorder %s18, 1
      %s195 = scalar_select %p194, %s18, 1
      %p196 = scmp.lt.s32.totalorder %s193, 15
      %s197 = scalar_select %p196, %s193, 15
      %s198 = smul.addr %s197, 2
      %s199 = smul.addr %s195, 32
      %s200 = sadd.s32 %s198, %s199
      %s201 = smul.addr %s200, 4
      %s202 = scalar_lea.vmem %s0, %s201
      %s203 = smul.u32 8, %s19
      %s204 = smul.u32 8, %s19
      %p205 = scmp.lt.s32.totalorder %s18, 1
      %s206 = scalar_select %p205, %s18, 1
      %p207 = scmp.lt.s32.totalorder %s204, 15
      %s208 = scalar_select %p207, %s204, 15
      %s209 = smul.addr %s208, 2
      %s210 = smul.addr %s206, 32
      %s211 = sadd.s32 %s209, %s210
      %s212 = smul.addr %s211, 8
      %s213 = scalar_lea.vmem %s3, %s212
      %s214 = smul.u32 8, %s19
      %v215 = vld [vmem:[%s202] sm:$0xf]
      %v216 = vld [vmem:[%s202 + $0x4] sm:$0xf]
      %v217 = vld [vmem:[%s202 + $0x8] sm:$0xf]
      %v218 = vld [vmem:[%s202 + $0xc] sm:$0xf]
      %v219 = vld [vmem:[%s202 + $0x10] sm:$0xf]
      %v220 = vld [vmem:[%s202 + $0x14] sm:$0xf]
      %v221 = vld [vmem:[%s202 + $0x18] sm:$0xf]
      %v222 = vld [vmem:[%s202 + $0x1c] sm:$0xf]
      %v223 = vld [vmem:[%s202 + $0x20] sm:$0xf]
      %v224 = vld [vmem:[%s202 + $0x24] sm:$0xf]
      %v225 = vld [vmem:[%s202 + $0x28] sm:$0xf]
      %v226 = vld [vmem:[%s202 + $0x2c] sm:$0xf]
      %v227 = vld [vmem:[%s202 + $0x30] sm:$0xf]
      %v228 = vld [vmem:[%s202 + $0x34] sm:$0xf]
      %v229 = vld [vmem:[%s202 + $0x38] sm:$0xf]
      %v230 = vld [vmem:[%s202 + $0x3c] sm:$0xf]
      %v231 = vunpack.c.l.bf16 %v215
      %v232 = vunpack.c.l.bf16 %v216
      %v233 = vunpack.c.l.bf16 %v217
      %v234 = vunpack.c.l.bf16 %v218
      %v235 = vunpack.c.l.bf16 %v219
      %v236 = vunpack.c.l.bf16 %v220
      %v237 = vunpack.c.l.bf16 %v221
      %v238 = vunpack.c.l.bf16 %v222
      %v239 = vunpack.c.l.bf16 %v223
      %v240 = vunpack.c.l.bf16 %v224
      %v241 = vunpack.c.l.bf16 %v225
      %v242 = vunpack.c.l.bf16 %v226
      %v243 = vunpack.c.l.bf16 %v227
      %v244 = vunpack.c.l.bf16 %v228
      %v245 = vunpack.c.l.bf16 %v229
      %v246 = vunpack.c.l.bf16 %v230
      %v247 = vld [vmem:[%s1] sm:$0x1]
      %v249 = vlaneseq
      %v250 = vshrl.u32 %v249, 7
      %v251 = vsub.s32 0, %v250
      %v252 = vrot.slane %v247, %v251
      %v254 = vmul.f32 %v231, %v252
      %v255 = vmul.f32 %v232, %v252
      %v256 = vmul.f32 %v233, %v252
      %v257 = vmul.f32 %v234, %v252
      %v258 = vmul.f32 %v235, %v252
      %v259 = vmul.f32 %v236, %v252
      %v260 = vmul.f32 %v237, %v252
      %v261 = vmul.f32 %v238, %v252
      %v262 = vmul.f32 %v239, %v252
      %v263 = vmul.f32 %v240, %v252
      %v264 = vmul.f32 %v241, %v252
      %v265 = vmul.f32 %v242, %v252
      %v266 = vmul.f32 %v243, %v252
      %v267 = vmul.f32 %v244, %v252
      %v268 = vmul.f32 %v245, %v252
      %v269 = vmul.f32 %v246, %v252
      %v270 = vld [vmem:[%s2] sm:$0x1]
      %v272 = vlaneseq
      %v273 = vshrl.u32 %v272, 7
      %v274 = vsub.s32 0, %v273
      %v275 = vrot.slane %v270, %v274
      %v277 = vadd.f32 %v254, %v275
      %v278 = vadd.f32 %v255, %v275
      %v279 = vadd.f32 %v256, %v275
      %v280 = vadd.f32 %v257, %v275
      %v281 = vadd.f32 %v258, %v275
      %v282 = vadd.f32 %v259, %v275
      %v283 = vadd.f32 %v260, %v275
      %v284 = vadd.f32 %v261, %v275
      %v285 = vadd.f32 %v262, %v275
      %v286 = vadd.f32 %v263, %v275
      %v287 = vadd.f32 %v264, %v275
      %v288 = vadd.f32 %v265, %v275
      %v289 = vadd.f32 %v266, %v275
      %v290 = vadd.f32 %v267, %v275
      %v291 = vadd.f32 %v268, %v275
      %v292 = vadd.f32 %v269, %v275
      %v293 = vmax.f32 %v277, 0.0
      %v294 = vmax.f32 %v278, 0.0
      %v295 = vmax.f32 %v279, 0.0
      %v296 = vmax.f32 %v280, 0.0
      %v297 = vmax.f32 %v281, 0.0
      %v298 = vmax.f32 %v282, 0.0
      %v299 = vmax.f32 %v283, 0.0
      %v300 = vmax.f32 %v284, 0.0
      %v301 = vmax.f32 %v285, 0.0
      %v302 = vmax.f32 %v286, 0.0
      %v303 = vmax.f32 %v287, 0.0
      %v304 = vmax.f32 %v288, 0.0
      %v305 = vmax.f32 %v289, 0.0
      %v306 = vmax.f32 %v290, 0.0
      %v307 = vmax.f32 %v291, 0.0
      %v308 = vmax.f32 %v292, 0.0
      %309 = vst [vmem:[%s213] sm:$0xff] %v293
      %310 = vst [vmem:[%s213 + $0x8] sm:$0xff] %v294
      %311 = vst [vmem:[%s213 + $0x10] sm:$0xff] %v295
      %312 = vst [vmem:[%s213 + $0x18] sm:$0xff] %v296
      %313 = vst [vmem:[%s213 + $0x20] sm:$0xff] %v297
      %314 = vst [vmem:[%s213 + $0x28] sm:$0xff] %v298
      %315 = vst [vmem:[%s213 + $0x30] sm:$0xff] %v299
      %316 = vst [vmem:[%s213 + $0x38] sm:$0xff] %v300
      %317 = vst [vmem:[%s213 + $0x40] sm:$0xff] %v301
      %318 = vst [vmem:[%s213 + $0x48] sm:$0xff] %v302
      %319 = vst [vmem:[%s213 + $0x50] sm:$0xff] %v303
      %320 = vst [vmem:[%s213 + $0x58] sm:$0xff] %v304
      %321 = vst [vmem:[%s213 + $0x60] sm:$0xff] %v305
      %322 = vst [vmem:[%s213 + $0x68] sm:$0xff] %v306
      %323 = vst [vmem:[%s213 + $0x70] sm:$0xff] %v307
      %324 = vst [vmem:[%s213 + $0x78] sm:$0xff] %v308
      %s325 = smul.u32 8, %s19
      %p326 = scmp.lt.s32.totalorder %s18, 1
      %s327 = scalar_select %p326, %s18, 1
      %p328 = scmp.lt.s32.totalorder %s325, 15
      %s329 = scalar_select %p328, %s325, 15
      %s330 = smul.addr %s329, 2
      %s331 = smul.addr %s327, 32
      %s332 = sadd.s32 %s330, %s331
      %s333 = smul.addr %s332, 8
      %s334 = scalar_lea.vmem %s3, %s333
      // Predicated region
      $region33: #{double_conv_forward.5} parent=31 // pred_check
        %p335 = pneg %p116
      $region34: #{double_conv_forward.5} parent=31 // pred_check_branch
        %337 = sbr.rel (%p335) target = $region36
      $region35: #{double_conv_forward.5} parent=31 // pred_region
        %s338 = smul.u32 8, %s19
      $region36: #{double_conv_forward.5} parent=31 // pred_fallthru
        _
    $region32: #{double_conv_forward.5} parent=5 // pred_fallthru
      _
    %p339 = scmp.le.s32.totalorder 2, %s9
    // Predicated region
    $region37: #{double_conv_forward.5} parent=5 // pred_check
      %p340 = pneg %p339
    $region38: #{double_conv_forward.5} parent=5 // pred_check_branch
      %342 = sbr.rel (%p340) target = $region40
    $region39: #{double_conv_forward.5} parent=5 // pred_region
      %s343 = ssub.s32 %s9, 2
      // Predicated region
      $region41: #{double_conv_forward.5} parent=39 // pred_check
        %p344 = pneg %p122
      $region42: #{double_conv_forward.5} parent=39 // pred_check_branch
        %346 = sbr.rel (%p344) target = $region44
      $region43: #{double_conv_forward.5} parent=39 // pred_region
        %s347 = smul.u32 8, %s21
        %p348 = scmp.lt.s32.totalorder %s20, 1
        %s349 = scalar_select %p348, %s20, 1
        %p350 = scmp.lt.s32.totalorder %s347, 15
        %s351 = scalar_select %p350, %s347, 15
        %s352 = smul.addr %s351, 2
        %s353 = smul.addr %s349, 32
        %s354 = sadd.s32 %s352, %s353
        %s355 = smul.addr %s354, 8
        %s356 = scalar_lea.vmem %s3, %s355
      $region44: #{double_conv_forward.5} parent=39 // pred_fallthru
        _
    $region40: #{double_conv_forward.5} parent=5 // pred_fallthru
      _
  $region6: #{double_conv_forward.5} parent=0 // loop_footer
    %s13 = sadd.s32 1, %s9
  $region7: #{double_conv_forward.5} parent=0 // loop_footer_branch
    %8 = sbr.rel target = $region3
  $region8: #{double_conv_forward.5} parent=0 // loop_exit
    _

// kernel: double_conv_forward.3
$region0: #{double_conv_forward.3}
  #allocation0 [shape = 'u32[]', space=smem, size = 0x4, offset = 0x4, fixed_abs, tag = 'smem constant byte address 0x4 - core index']
  #allocation1 [shape = 'u32[144,128]{1,0:T(1,128)}', space=vmem, size = 0x12000, scoped, tag = 'internal scratch']
  #allocation2 [shape = 'bf16[10,32,4]{2,1,0:T(16,128)(2,1)}', space=vmem, size = 0x14000, scoped, tag = 'scratch operand']
  #allocation3 [shape = 'bf16[10,16,12]{2,1,0:T(16,128)(2,1)}', space=vmem, size = 0xa000, scoped, tag = 'scratch operand']
  %s0 = inlined_call_operand.vmem [shape: f32[2,16,16,4], index: 0, kind: input, shape index: {}, may-alias: {0,1,2}]
  %s1 = inlined_call_operand.vmem [shape: f32[2,16,16,4], index: 1, kind: input, shape index: {}, may-alias: {0,1,2}]
  %s2 = inlined_call_operand.vmem [shape: f32[2,16,16,4], index: 2, kind: input, shape index: {}, may-alias: {0,1,2}]
  %s3 = inlined_call_operand.vmem [shape: bf16[3,12,128], index: 3, kind: input, shape index: {}]
  %s4 = inlined_call_operand.vmem [shape: bf16[2,16,16,128], index: 4, kind: output, shape index: {0}]
  %s5 = inlined_call_operand.vmem [shape: f32[2,2,1,128], index: 5, kind: output, shape index: {1}]
  %s6 = inlined_call_operand.vmem [shape: f32[2,2,1,128], index: 6, kind: output, shape index: {2}]
  %7 = xla_tuple %s4, %s5, %s6
  %s8 = sld [smem:[#allocation0]]
  $region65: #{double_conv_forward.3} parent=0
    _
  %s10 = ssub.s32 1, %s8
  %s11 = scalar_select 0, %s10, %s8
  loop: start=0, step=1, limit=6
  $region2: #{double_conv_forward.3} parent=0 // loop_pre_header
    _
  $region3: #{double_conv_forward.3} parent=0 // loop_header
    %s13 = sphi 0, %s17
    %p14 = scmp.ge.s32.totalorder %s13, 6
    %s20 = sphi 0, %s32
    %s21 = sphi 0, %s28
    %s22 = sphi 0, %s20
    %s23 = sphi 0, %s21
    %s24 = sphi 0, %s22
    %s25 = sphi 0, %s23
    %s37 = sphi 0, %s39
    %s40 = sphi 0, %s37
    %s41 = sphi 0, %s40
    %s57 = sphi 0, %s41
    %s73 = sphi 0, %s75
    %s76 = sphi 0, %s73
    %s77 = sphi 0, %s76
    %s93 = sphi 0, %s77
    %s109 = sphi 0, %s111
    %s112 = sphi 0, %s109
    %s113 = sphi 0, %s112
    %s129 = sphi 0, %s113
    %s133 = sphi 0, %s133
    %s135 = sphi 0, %s133
    %s136 = sphi 0, %s135
    %s150 = sphi 0, %s136
    %s158 = sphi 0, %s160
    %s161 = sphi 0, %s158
    %s162 = sphi 0, %s161
    %s178 = sphi 0, %s162
    %s186 = sphi 0, %s188
    %s189 = sphi 0, %s186
    %s190 = sphi 0, %s189
    %s206 = sphi 0, %s190
    %s214 = sphi 0, %s216
    %s217 = sphi 0, %s214
    %s218 = sphi 0, %s217
    %s234 = sphi 0, %s218
  $region4: #{double_conv_forward.3} parent=0 // loop_header_branch
    %16 = sbr.rel (%p14) target = $region8
  $region5: #{double_conv_forward.3} parent=0 // loop_body
    %s18 = ssub.s32 %s13, 1
    %s19 = ssub.s32 %s13, 2
    %s26 = sadd.s32 1, %s21
    %p27 = scmp.ge.s32.totalorder %s26, 2
    %s28 = scalar_select %p27, 0, %s26
    %s29 = sadd.s32 1, %s20
    %s30 = scalar_select %p27, %s29, %s20
    %p31 = scmp.ge.s32.totalorder %s30, 2
    %s32 = scalar_select %p31, 0, %s30
    %s33 = ssub.s32 %s20, %s32
    %s34 = ssub.s32 %s21, %s28
    %s35 = sor.u32 %s33, %s34
    %p36 = scmp.eq.s32.totalorder %s35, 0
    %s38 = sadd.s32 %s37, 1
    %s39 = scalar_select %p36, %s37, %s38
    %p42 = pneg %p36
    %p43 = scmp.eq.s32.totalorder %s13, 3
    %p44 = por %p42, %p43
    %p45 = scmp.ne.s32.totalorder %s37, %s40
    %p46 = scmp.eq.s32.totalorder %s13, 0
    %p47 = por %p45, %p46
    %p48 = scmp.ne.s32.totalorder %s37, %s40
    %p49 = scmp.eq.s32.totalorder %s18, 3
    %p50 = por %p48, %p49
    %p51 = scmp.ne.s32.totalorder %s40, %s41
    %p52 = scmp.eq.s32.totalorder %s18, 0
    %p53 = por %p51, %p52
    %p54 = scmp.ne.s32.totalorder %s40, %s41
    %p55 = scmp.eq.s32.totalorder %s19, 3
    %p56 = por %p54, %p55
    %p58 = scmp.ne.s32.totalorder %s41, %s57
    %p59 = scmp.eq.s32.totalorder %s19, 0
    %p60 = por %p58, %p59
    %s61 = smul.u32 %s21, 8
    %s62 = ssub.s32 %s61, 1
    %p63 = scmp.gt.s32.totalorder %s62, 0
    %s64 = scalar_select %p63, %s62, 0
    %s65 = smul.u32 %s28, 8
    %s66 = ssub.s32 %s65, 1
    %p67 = scmp.gt.s32.totalorder %s66, 0
    %s68 = scalar_select %p67, %s66, 0
    %s69 = ssub.s32 %s20, %s32
    %s70 = ssub.s32 %s64, %s68
    %s71 = sor.u32 %s69, %s70
    %p72 = scmp.eq.s32.totalorder %s71, 0
    %s74 = sadd.s32 %s73, 1
    %s75 = scalar_select %p72, %s73, %s74
    %p78 = pneg %p72
    %p79 = scmp.eq.s32.totalorder %s13, 3
    %p80 = por %p78, %p79
    %p81 = scmp.ne.s32.totalorder %s73, %s76
    %p82 = scmp.eq.s32.totalorder %s13, 0
    %p83 = por %p81, %p82
    %p84 = scmp.ne.s32.totalorder %s73, %s76
    %p85 = scmp.eq.s32.totalorder %s18, 3
    %p86 = por %p84, %p85
    %p87 = scmp.ne.s32.totalorder %s76, %s77
    %p88 = scmp.eq.s32.totalorder %s18, 0
    %p89 = por %p87, %p88
    %p90 = scmp.ne.s32.totalorder %s76, %s77
    %p91 = scmp.eq.s32.totalorder %s19, 3
    %p92 = por %p90, %p91
    %p94 = scmp.ne.s32.totalorder %s77, %s93
    %p95 = scmp.eq.s32.totalorder %s19, 0
    %p96 = por %p94, %p95
    %s97 = sadd.s32 %s21, 1
    %s98 = smul.u32 %s97, 8
    %p99 = scmp.lt.s32.totalorder %s98, 15
    %s100 = scalar_select %p99, %s98, 15
    %s101 = sadd.s32 %s28, 1
    %s102 = smul.u32 %s101, 8
    %p103 = scmp.lt.s32.totalorder %s102, 15
    %s104 = scalar_select %p103, %s102, 15
    %s105 = ssub.s32 %s20, %s32
    %s106 = ssub.s32 %s100, %s104
    %s107 = sor.u32 %s105, %s106
    %p108 = scmp.eq.s32.totalorder %s107, 0
    %s110 = sadd.s32 %s109, 1
    %s111 = scalar_select %p108, %s109, %s110
    %p114 = pneg %p108
    %p115 = scmp.eq.s32.totalorder %s13, 3
    %p116 = por %p114, %p115
    %p117 = scmp.ne.s32.totalorder %s109, %s112
    %p118 = scmp.eq.s32.totalorder %s13, 0
    %p119 = por %p117, %p118
    %p120 = scmp.ne.s32.totalorder %s109, %s112
    %p121 = scmp.eq.s32.totalorder %s18, 3
    %p122 = por %p120, %p121
    %p123 = scmp.ne.s32.totalorder %s112, %s113
    %p124 = scmp.eq.s32.totalorder %s18, 0
    %p125 = por %p123, %p124
    %p126 = scmp.ne.s32.totalorder %s112, %s113
    %p127 = scmp.eq.s32.totalorder %s19, 3
    %p128 = por %p126, %p127
    %p130 = scmp.ne.s32.totalorder %s113, %s129
    %p131 = scmp.eq.s32.totalorder %s19, 0
    %p132 = por %p130, %p131
    %s134 = sadd.s32 %s133, 1
    %p137 = scmp.eq.s32.totalorder %s13, 3
    %p138 = scmp.ne.s32.totalorder %s133, %s135
    %p139 = scmp.eq.s32.totalorder %s13, 0
    %p140 = por %p138, %p139
    %p141 = scmp.ne.s32.totalorder %s133, %s135
    %p142 = scmp.eq.s32.totalorder %s18, 3
    %p143 = por %p141, %p142
    %p144 = scmp.ne.s32.totalorder %s135, %s136
    %p145 = scmp.eq.s32.totalorder %s18, 0
    %p146 = por %p144, %p145
    %p147 = scmp.ne.s32.totalorder %s135, %s136
    %p148 = scmp.eq.s32.totalorder %s19, 3
    %p149 = por %p147, %p148
    %p151 = scmp.ne.s32.totalorder %s136, %s150
    %p152 = scmp.eq.s32.totalorder %s19, 0
    %p153 = por %p151, %p152
    %s154 = ssub.s32 %s20, %s32
    %s155 = ssub.s32 %s21, %s28
    %s156 = sor.u32 %s154, %s155
    %p157 = scmp.eq.s32.totalorder %s156, 0
    %s159 = sadd.s32 %s158, 1
    %s160 = scalar_select %p157, %s158, %s159
    %p163 = pneg %p157
    %p164 = scmp.eq.s32.totalorder %s13, 3
    %p165 = por %p163, %p164
    %p166 = scmp.ne.s32.totalorder %s158, %s161
    %p167 = scmp.eq.s32.totalorder %s13, 0
    %p168 = por %p166, %p167
    %p169 = scmp.ne.s32.totalorder %s158, %s161
    %p170 = scmp.eq.s32.totalorder %s18, 3
    %p171 = por %p169, %p170
    %p172 = scmp.ne.s32.totalorder %s161, %s162
    %p173 = scmp.eq.s32.totalorder %s18, 0
    %p174 = por %p172, %p173
    %p175 = scmp.ne.s32.totalorder %s161, %s162
    %p176 = scmp.eq.s32.totalorder %s19, 3
    %p177 = por %p175, %p176
    %p179 = scmp.ne.s32.totalorder %s162, %s178
    %p180 = scmp.eq.s32.totalorder %s19, 0
    %p181 = por %p179, %p180
    %s182 = ssub.s32 %s20, %s32
    %s183 = ssub.s32 %s21, %s28
    %s184 = sor.u32 %s182, %s183
    %p185 = scmp.eq.s32.totalorder %s184, 0
    %s187 = sadd.s32 %s186, 1
    %s188 = scalar_select %p185, %s186, %s187
    %p191 = pneg %p185
    %p192 = scmp.eq.s32.totalorder %s13, 3
    %p193 = por %p191, %p192
    %p194 = scmp.ne.s32.totalorder %s186, %s189
    %p195 = scmp.eq.s32.totalorder %s13, 0
    %p196 = por %p194, %p195
    %p197 = scmp.ne.s32.totalorder %s186, %s189
    %p198 = scmp.eq.s32.totalorder %s18, 3
    %p199 = por %p197, %p198
    %p200 = scmp.ne.s32.totalorder %s189, %s190
    %p201 = scmp.eq.s32.totalorder %s18, 0
    %p202 = por %p200, %p201
    %p203 = scmp.ne.s32.totalorder %s189, %s190
    %p204 = scmp.eq.s32.totalorder %s19, 3
    %p205 = por %p203, %p204
    %p207 = scmp.ne.s32.totalorder %s190, %s206
    %p208 = scmp.eq.s32.totalorder %s19, 0
    %p209 = por %p207, %p208
    %s210 = ssub.s32 %s20, %s32
    %s211 = ssub.s32 %s21, %s28
    %s212 = sor.u32 %s210, %s211
    %p213 = scmp.eq.s32.totalorder %s212, 0
    %s215 = sadd.s32 %s214, 1
    %s216 = scalar_select %p213, %s214, %s215
    %p219 = pneg %p213
    %p220 = scmp.eq.s32.totalorder %s13, 3
    %p221 = por %p219, %p220
    %p222 = scmp.ne.s32.totalorder %s214, %s217
    %p223 = scmp.eq.s32.totalorder %s13, 0
    %p224 = por %p222, %p223
    %p225 = scmp.ne.s32.totalorder %s214, %s217
    %p226 = scmp.eq.s32.totalorder %s18, 3
    %p227 = por %p225, %p226
    %p228 = scmp.ne.s32.totalorder %s217, %s218
    %p229 = scmp.eq.s32.totalorder %s18, 0
    %p230 = por %p228, %p229
    %p231 = scmp.ne.s32.totalorder %s217, %s218
    %p232 = scmp.eq.s32.totalorder %s19, 3
    %p233 = por %p231, %p232
    %p235 = scmp.ne.s32.totalorder %s218, %s234
    %p236 = scmp.eq.s32.totalorder %s19, 0
    %p237 = por %p235, %p236
    %p238 = scmp.le.s32.totalorder 1, %s13
    %p239 = scmp.lt.s32.totalorder %s13, 5
    %p240 = pnand %p238, %p239
    %p241 = pneg %p240
    // Predicated region
    $region9: #{double_conv_forward.3} parent=5 // pred_check
      _
    $region10: #{double_conv_forward.3} parent=5 // pred_check_branch
      %243 = sbr.rel (%p240) target = $region12
    $region11: #{double_conv_forward.3} parent=5 // pred_region
      %s244 = ssub.s32 %s13, 1
      // Predicated region
      $region13: #{double_conv_forward.3} parent=11 // pred_check
        %p245 = pneg %p146
      $region14: #{double_conv_forward.3} parent=11 // pred_check_branch
        %247 = sbr.rel (%p245) target = $region16
      $region15: #{double_conv_forward.3} parent=11 // pred_region
        _
      $region16: #{double_conv_forward.3} parent=11 // pred_fallthru
        _
    $region12: #{double_conv_forward.3} parent=5 // pred_fallthru
      _
    %p248 = scmp.lt.s32.totalorder %s13, 4
    // Predicated region
    $region17: #{double_conv_forward.3} parent=5 // pred_check
      %p249 = pneg %p248
    $region18: #{double_conv_forward.3} parent=5 // pred_check_branch
      %251 = sbr.rel (%p249) target = $region20
    $region19: #{double_conv_forward.3} parent=5 // pred_region
      // Predicated region
      $region21: #{double_conv_forward.3} parent=19 // pred_check
        %p252 = pneg %p47
      $region22: #{double_conv_forward.3} parent=19 // pred_check_branch
        %254 = sbr.rel (%p252) target = $region24
      $region23: #{double_conv_forward.3} parent=19 // pred_region
        %s255 = smul.u32 8, %s21
        %p256 = scmp.lt.s32.totalorder %s20, 1
        %s257 = scalar_select %p256, %s20, 1
        %p258 = scmp.lt.s32.totalorder %s255, 15
        %s259 = scalar_select %p258, %s255, 15
        %s260 = smul.addr %s259, 2
        %s261 = smul.addr %s257, 32
        %s262 = sadd.s32 %s260, %s261
        %s263 = smul.addr %s262, 8
        %s264 = scalar_lea.vmem %s0, %s263
        %s265 = smul.u32 8, %s21
      $region24: #{double_conv_forward.3} parent=19 // pred_fallthru
        _
      // Predicated region
      $region25: #{double_conv_forward.3} parent=19 // pred_check
        %p266 = pneg %p83
      $region26: #{double_conv_forward.3} parent=19 // pred_check_branch
        %268 = sbr.rel (%p266) target = $region28
      $region27: #{double_conv_forward.3} parent=19 // pred_region
        %s269 = smul.u32 %s21, 8
        %s270 = ssub.s32 %s269, 1
        %p271 = scmp.gt.s32.totalorder %s270, 0
        %s272 = scalar_select %p271, %s270, 0
        %p273 = scmp.lt.s32.totalorder %s20, 1
        %s274 = scalar_select %p273, %s20, 1
        %p275 = scmp.lt.s32.totalorder %s272, 15
        %s276 = scalar_select %p275, %s272, 15
        %s277 = smul.addr %s276, 2
        %s278 = smul.addr %s274, 32
        %s279 = sadd.s32 %s277, %s278
        %s280 = smul.addr %s279, 8
        %s281 = scalar_lea.vmem %s1, %s280
        %s282 = smul.u32 %s21, 8
        %s283 = ssub.s32 %s282, 1
        %p284 = scmp.gt.s32.totalorder %s283, 0
        %s285 = scalar_select %p284, %s283, 0
      $region28: #{double_conv_forward.3} parent=19 // pred_fallthru
        _
      // Predicated region
      $region29: #{double_conv_forward.3} parent=19 // pred_check
        %p286 = pneg %p119
      $region30: #{double_conv_forward.3} parent=19 // pred_check_branch
        %288 = sbr.rel (%p286) target = $region32
      $region31: #{double_conv_forward.3} parent=19 // pred_region
        %s289 = sadd.s32 %s21, 1
        %s290 = smul.u32 %s289, 8
        %p291 = scmp.lt.s32.totalorder %s290, 15
        %s292 = scalar_select %p291, %s290, 15
        %p293 = scmp.lt.s32.totalorder %s20, 1
        %s294 = scalar_select %p293, %s20, 1
        %p295 = scmp.lt.s32.totalorder %s292, 15
        %s296 = scalar_select %p295, %s292, 15
        %s297 = smul.addr %s296, 2
        %s298 = smul.addr %s294, 32
        %s299 = sadd.s32 %s297, %s298
        %s300 = smul.addr %s299, 8
        %s301 = scalar_lea.vmem %s2, %s300
        %s302 = sadd.s32 %s21, 1
        %s303 = smul.u32 %s302, 8
        %p304 = scmp.lt.s32.totalorder %s303, 15
        %s305 = scalar_select %p304, %s303, 15
      $region32: #{double_conv_forward.3} parent=19 // pred_fallthru
        _
    $region20: #{double_conv_forward.3} parent=5 // pred_fallthru
      _
    %p306 = scmp.le.s32.totalorder 1, %s13
    %p307 = scmp.lt.s32.totalorder %s13, 5
    %p308 = pnand %p306, %p307
    %p309 = pneg %p308
    // Predicated region
    $region33: #{double_conv_forward.3} parent=5 // pred_check
      _
    $region34: #{double_conv_forward.3} parent=5 // pred_check_branch
      %311 = sbr.rel (%p308) target = $region36
    $region35: #{double_conv_forward.3} parent=5 // pred_region
      %s312 = ssub.s32 %s13, 1
      %s313 = smul.u32 8, %s23
      %p314 = scmp.lt.s32.totalorder %s22, 1
      %s315 = scalar_select %p314, %s22, 1
      %p316 = scmp.lt.s32.totalorder %s313, 15
      %s317 = scalar_select %p316, %s313, 15
      %s318 = smul.addr %s317, 2
      %s319 = smul.addr %s315, 32
      %s320 = sadd.s32 %s318, %s319
      %s321 = smul.addr %s320, 8
      %s322 = scalar_lea.vmem %s0, %s321
      %p323 = pneg %p53
      %p324 = pneg %p50
      %s325 = smul.u32 %s23, 8
      %s326 = ssub.s32 %s325, 1
      %p327 = scmp.gt.s32.totalorder %s326, 0
      %s328 = scalar_select %p327, %s326, 0
      %p329 = scmp.lt.s32.totalorder %s22, 1
      %s330 = scalar_select %p329, %s22, 1
      %p331 = scmp.lt.s32.totalorder %s328, 15
      %s332 = scalar_select %p331, %s328, 15
      %s333 = smul.addr %s332, 2
      %s334 = smul.addr %s330, 32
      %s335 = sadd.s32 %s333, %s334
      %s336 = smul.addr %s335, 8
      %s337 = scalar_lea.vmem %s1, %s336
      %p338 = pneg %p89
      %p339 = pneg %p86
      %s340 = sadd.s32 %s23, 1
      %s341 = smul.u32 %s340, 8
      %p342 = scmp.lt.s32.totalorder %s341, 15
      %s343 = scalar_select %p342, %s341, 15
      %p344 = scmp.lt.s32.totalorder %s22, 1
      %s345 = scalar_select %p344, %s22, 1
      %p346 = scmp.lt.s32.totalorder %s343, 15
      %s347 = scalar_select %p346, %s343, 15
      %s348 = smul.addr %s347, 2
      %s349 = smul.addr %s345, 32
      %s350 = sadd.s32 %s348, %s349
      %s351 = smul.addr %s350, 8
      %s352 = scalar_lea.vmem %s2, %s351
      %p353 = pneg %p125
      %p354 = pneg %p122
      %p355 = pneg %p146
      %p356 = pneg %p143
      %p357 = pneg %p174
      %p358 = pneg %p171
      %s359 = smul.u32 8, %s23
      %p360 = scmp.lt.s32.totalorder %s22, 1
      %s361 = scalar_select %p360, %s22, 1
      %p362 = scmp.lt.s32.totalorder %s359, 15
      %s363 = scalar_select %p362, %s359, 15
      %s364 = smul.addr %s363, 2
      %s365 = smul.addr %s361, 32
      %s366 = sadd.s32 %s364, %s365
      %s367 = smul.addr %s366, 4
      %s368 = scalar_lea.vmem %s4, %s367
      %p369 = pneg %p202
      %p370 = pneg %p199
      %p371 = scmp.lt.s32.totalorder %s22, 1
      %s372 = scalar_select %p371, %s22, 1
      %p373 = scmp.lt.s32.totalorder %s23, 1
      %s374 = scalar_select %p373, %s23, 1
      %s375 = smul.addr %s372, 2
      %s376 = sadd.s32 %s374, %s375
      %s377 = scalar_lea.vmem %s5, %s376
      %p378 = pneg %p230
      %p379 = pneg %p227
      %p380 = scmp.lt.s32.totalorder %s22, 1
      %s381 = scalar_select %p380, %s22, 1
      %p382 = scmp.lt.s32.totalorder %s23, 1
      %s383 = scalar_select %p382, %s23, 1
      %s384 = smul.addr %s381, 2
      %s385 = sadd.s32 %s383, %s384
      %s386 = scalar_lea.vmem %s6, %s385
      %s387 = smul.u32 8, %s23
      %p388 = scmp.lt.s32.totalorder %s22, 1
      %s389 = scalar_select %p388, %s22, 1
      %p390 = scmp.lt.s32.totalorder %s387, 15
      %s391 = scalar_select %p390, %s387, 15
      %s392 = smul.addr %s391, 2
      %s393 = smul.addr %s389, 32
      %s394 = sadd.s32 %s392, %s393
      %s395 = smul.addr %s394, 8
      %s396 = scalar_lea.vmem %s0, %s395
      %s397 = smul.u32 8, %s23
      %s398 = smul.u32 %s23, 8
      %s399 = ssub.s32 %s398, 1
      %p400 = scmp.gt.s32.totalorder %s399, 0
      %s401 = scalar_select %p400, %s399, 0
      %p402 = scmp.lt.s32.totalorder %s22, 1
      %s403 = scalar_select %p402, %s22, 1
      %p404 = scmp.lt.s32.totalorder %s401, 15
      %s405 = scalar_select %p404, %s401, 15
      %s406 = smul.addr %s405, 2
      %s407 = smul.addr %s403, 32
      %s408 = sadd.s32 %s406, %s407
      %s409 = smul.addr %s408, 8
      %s410 = scalar_lea.vmem %s1, %s409
      %s411 = smul.u32 %s23, 8
      %s412 = ssub.s32 %s411, 1
      %p413 = scmp.gt.s32.totalorder %s412, 0
      %s414 = scalar_select %p413, %s412, 0
      %s415 = sadd.s32 %s23, 1
      %s416 = smul.u32 %s415, 8
      %p417 = scmp.lt.s32.totalorder %s416, 15
      %s418 = scalar_select %p417, %s416, 15
      %p419 = scmp.lt.s32.totalorder %s22, 1
      %s420 = scalar_select %p419, %s22, 1
      %p421 = scmp.lt.s32.totalorder %s418, 15
      %s422 = scalar_select %p421, %s418, 15
      %s423 = smul.addr %s422, 2
      %s424 = smul.addr %s420, 32
      %s425 = sadd.s32 %s423, %s424
      %s426 = smul.addr %s425, 8
      %s427 = scalar_lea.vmem %s2, %s426
      %s428 = sadd.s32 %s23, 1
      %s429 = smul.u32 %s428, 8
      %p430 = scmp.lt.s32.totalorder %s429, 15
      %s431 = scalar_select %p430, %s429, 15
      %s432 = smul.u32 8, %s23
      %p433 = scmp.lt.s32.totalorder %s22, 1
      %s434 = scalar_select %p433, %s22, 1
      %p435 = scmp.lt.s32.totalorder %s432, 15
      %s436 = scalar_select %p435, %s432, 15
      %s437 = smul.addr %s436, 2
      %s438 = smul.addr %s434, 32
      %s439 = sadd.s32 %s437, %s438
      %s440 = smul.addr %s439, 4
      %s441 = scalar_lea.vmem %s4, %s440
      %s442 = smul.u32 8, %s23
      %p443 = scmp.lt.s32.totalorder %s22, 1
      %s444 = scalar_select %p443, %s22, 1
      %p445 = scmp.lt.s32.totalorder %s23, 1
      %s446 = scalar_select %p445, %s23, 1
      %s447 = smul.addr %s444, 2
      %s448 = sadd.s32 %s446, %s447
      %s449 = scalar_lea.vmem %s5, %s448
      %p450 = scmp.lt.s32.totalorder %s22, 1
      %s451 = scalar_select %p450, %s22, 1
      %p452 = scmp.lt.s32.totalorder %s23, 1
      %s453 = scalar_select %p452, %s23, 1
      %s454 = smul.addr %s451, 2
      %s455 = sadd.s32 %s453, %s454
      %s456 = scalar_lea.vmem %s6, %s455
      %vm458 = vcmask 27651
      %vm459 = vsmask.f32 7950
      %vm460 = vmand %vm458, %vm459
      %v461 = vld [vmem:[#allocation2] sm:$0x8]
      %v462 = vsel %vm460, 0, %v461
      %463 = vst [vmem:[#allocation2] sm:$0x8] %v462
      %v464 = vld [vmem:[#allocation2 + $0x10] sm:$0x8]
      %v465 = vsel %vm460, 0, %v464
      %466 = vst [vmem:[#allocation2 + $0x10] sm:$0x8] %v465
      %v467 = vld [vmem:[#allocation2 + $0x20] sm:$0x8]
      %v468 = vsel %vm460, 0, %v467
      %469 = vst [vmem:[#allocation2 + $0x20] sm:$0x8] %v468
      %v470 = vld [vmem:[#allocation2 + $0x30] sm:$0x8]
      %v471 = vsel %vm460, 0, %v470
      %472 = vst [vmem:[#allocation2 + $0x30] sm:$0x8] %v471
      %v473 = vld [vmem:[#allocation2 + $0x40] sm:$0x8]
      %v474 = vsel %vm460, 0, %v473
      %475 = vst [vmem:[#allocation2 + $0x40] sm:$0x8] %v474
      %v476 = vld [vmem:[#allocation2 + $0x50] sm:$0x8]
      %v477 = vsel %vm460, 0, %v476
      %478 = vst [vmem:[#allocation2 + $0x50] sm:$0x8] %v477
      %v479 = vld [vmem:[#allocation2 + $0x60] sm:$0x8]
      %v480 = vsel %vm460, 0, %v479
      %481 = vst [vmem:[#allocation2 + $0x60] sm:$0x8] %v480
      %v482 = vld [vmem:[#allocation2 + $0x70] sm:$0x8]
      %v483 = vsel %vm460, 0, %v482
      %484 = vst [vmem:[#allocation2 + $0x70] sm:$0x8] %v483
      %v485 = vld [vmem:[#allocation2 + $0x80] sm:$0x8]
      %v486 = vsel %vm460, 0, %v485
      %487 = vst [vmem:[#allocation2 + $0x80] sm:$0x8] %v486
      %v488 = vld [vmem:[#allocation2 + $0x90] sm:$0x8]
      %v489 = vsel %vm460, 0, %v488
      %490 = vst [vmem:[#allocation2 + $0x90] sm:$0x8] %v489
      %vm491 = vcmask 28676
      %vm492 = vsmask.f32 4352
      %vm493 = vmand %vm491, %vm492
      %v494 = vld [vmem:[#allocation2 + $0x8] sm:$0x10]
      %v495 = vsel %vm493, 0, %v494
      %496 = vst [vmem:[#allocation2 + $0x8] sm:$0x10] %v495
      %v497 = vld [vmem:[#allocation2 + $0x18] sm:$0x10]
      %v498 = vsel %vm493, 0, %v497
      %499 = vst [vmem:[#allocation2 + $0x18] sm:$0x10] %v498
      %v500 = vld [vmem:[#allocation2 + $0x28] sm:$0x10]
      %v501 = vsel %vm493, 0, %v500
      %502 = vst [vmem:[#allocation2 + $0x28] sm:$0x10] %v501
      %v503 = vld [vmem:[#allocation2 + $0x38] sm:$0x10]
      %v504 = vsel %vm493, 0, %v503
      %505 = vst [vmem:[#allocation2 + $0x38] sm:$0x10] %v504
      %v506 = vld [vmem:[#allocation2 + $0x48] sm:$0x10]
      %v507 = vsel %vm493, 0, %v506
      %508 = vst [vmem:[#allocation2 + $0x48] sm:$0x10] %v507
      %v509 = vld [vmem:[#allocation2 + $0x58] sm:$0x10]
      %v510 = vsel %vm493, 0, %v509
      %511 = vst [vmem:[#allocation2 + $0x58] sm:$0x10] %v510
      %v512 = vld [vmem:[#allocation2 + $0x68] sm:$0x10]
      %v513 = vsel %vm493, 0, %v512
      %514 = vst [vmem:[#allocation2 + $0x68] sm:$0x10] %v513
      %v515 = vld [vmem:[#allocation2 + $0x78] sm:$0x10]
      %v516 = vsel %vm493, 0, %v515
      %517 = vst [vmem:[#allocation2 + $0x78] sm:$0x10] %v516
      %v518 = vld [vmem:[#allocation2 + $0x88] sm:$0x10]
      %v519 = vsel %vm493, 0, %v518
      %520 = vst [vmem:[#allocation2 + $0x88] sm:$0x10] %v519
      %v521 = vld [vmem:[#allocation2 + $0x98] sm:$0x10]
      %v522 = vsel %vm493, 0, %v521
      %523 = vst [vmem:[#allocation2 + $0x98] sm:$0x10] %v522
      %v524 = vld [vmem:[%s396] sm:$0xff]
      %v525 = vld [vmem:[%s396 + $0x8] sm:$0xff]
      %v526 = vld [vmem:[%s396 + $0x10] sm:$0xff]
      %v527 = vld [vmem:[%s396 + $0x18] sm:$0xff]
      %v528 = vld [vmem:[%s396 + $0x20] sm:$0xff]
      %v529 = vld [vmem:[%s396 + $0x28] sm:$0xff]
      %v530 = vld [vmem:[%s396 + $0x30] sm:$0xff]
      %v531 = vld [vmem:[%s396 + $0x38] sm:$0xff]
      %v532 = vld [vmem:[%s396 + $0x40] sm:$0xff]
      %v533 = vld [vmem:[%s396 + $0x48] sm:$0xff]
      %v534 = vld [vmem:[%s396 + $0x50] sm:$0xff]
      %v535 = vld [vmem:[%s396 + $0x58] sm:$0xff]
      %v536 = vld [vmem:[%s396 + $0x60] sm:$0xff]
      %v537 = vld [vmem:[%s396 + $0x68] sm:$0xff]
      %v538 = vld [vmem:[%s396 + $0x70] sm:$0xff]
      %v539 = vld [vmem:[%s396 + $0x78] sm:$0xff]
      %v540 = vpack.c.bf16 %v525, %v524
      %v541 = vpack.c.bf16 %v527, %v526
      %v542 = vpack.c.bf16 %v529, %v528
      %v543 = vpack.c.bf16 %v531, %v530
      %v544 = vpack.c.bf16 %v533, %v532
      %v545 = vpack.c.bf16 %v535, %v534
      %v546 = vpack.c.bf16 %v537, %v536
      %v547 = vpack.c.bf16 %v539, %v538
      %v556 = vrot.slane %v540, 4
      %v557 = vrot.slane %v541, 4
      %v558 = vrot.slane %v542, 4
      %v559 = vrot.slane %v543, 4
      %v560 = vrot.slane %v544, 4
      %v561 = vrot.slane %v545, 4
      %v562 = vrot.slane %v546, 4
      %v563 = vrot.slane %v547, 4
      %s572 = scalar_lea.vmem [#allocation2], 16
      %vm573 = vcmask 31748
      %574 = vst.msk [vmem:[%s572] sm:$0xf0] %vm573, %v556
      %vm575 = vcmask 27648
      %576 = vst.msk [vmem:[%s572 + $0x8] sm:$0xf] %vm575, %v556
      %577 = vst.msk [vmem:[%s572 + $0x10] sm:$0xf0] %vm573, %v557
      %578 = vst.msk [vmem:[%s572 + $0x18] sm:$0xf] %vm575, %v557
      %579 = vst.msk [vmem:[%s572 + $0x20] sm:$0xf0] %vm573, %v558
      %580 = vst.msk [vmem:[%s572 + $0x28] sm:$0xf] %vm575, %v558
      %581 = vst.msk [vmem:[%s572 + $0x30] sm:$0xf0] %vm573, %v559
      %582 = vst.msk [vmem:[%s572 + $0x38] sm:$0xf] %vm575, %v559
      %583 = vst.msk [vmem:[%s572 + $0x40] sm:$0xf0] %vm573, %v560
      %584 = vst.msk [vmem:[%s572 + $0x48] sm:$0xf] %vm575, %v560
      %585 = vst.msk [vmem:[%s572 + $0x50] sm:$0xf0] %vm573, %v561
      %586 = vst.msk [vmem:[%s572 + $0x58] sm:$0xf] %vm575, %v561
      %587 = vst.msk [vmem:[%s572 + $0x60] sm:$0xf0] %vm573, %v562
      %588 = vst.msk [vmem:[%s572 + $0x68] sm:$0xf] %vm575, %v562
      %589 = vst.msk [vmem:[%s572 + $0x70] sm:$0xf0] %vm573, %v563
      %590 = vst.msk [vmem:[%s572 + $0x78] sm:$0xf] %vm575, %v563
      %v591 = vld [vmem:[%s410] sm:$0xff]
      %v592 = vld [vmem:[%s410 + $0x8] sm:$0xff]
      %v593 = vpack.c.bf16 %v592, %v591
      %v594 = vld [vmem:[%s427] sm:$0xff]
      %v595 = vld [vmem:[%s427 + $0x8] sm:$0xff]
      %v596 = vpack.c.bf16 %v595, %v594
      %p597 = scmp.gt.s32.totalorder %s23, 0
      %s598 = scalar_select %p597, 1, 0
      %v599 = vstv %s598
      %vm600 = vcmp.eq.s32.totalorder %v599, 1
      %v601 = vsel %vm600, %v593, 0
      %p602 = scmp.lt.s32.totalorder %s23, 1
      %s603 = scalar_select %p602, 1, 0
      %v604 = vstv %s603
      %vm605 = vcmp.eq.s32.totalorder %v604, 1
      %v606 = vsel %vm605, %v596, 0
      %v608 = vrot.slane %v601, 4
      %610 = vst.msk [vmem:[#allocation2] sm:$0xf0] %vm573, %v608
      %611 = vst.msk [vmem:[#allocation2 + $0x8] sm:$0xf] %vm575, %v608
      %v613 = vrot.slane %v606, 4
      %s615 = scalar_lea.vmem [#allocation2], 144
      %616 = vst.msk [vmem:[%s615] sm:$0xf0] %vm573, %v613
      %617 = vst.msk [vmem:[%s615 + $0x8] sm:$0xf] %vm575, %v613
      %v618 = vld [vmem:[#allocation2] sm:$0xf8]
      %v619 = vld [vmem:[#allocation2 + $0x8] sm:$0xf]
      %v620 = vld [vmem:[#allocation2 + $0x10] sm:$0xf8]
      %v621 = vld [vmem:[#allocation2 + $0x18] sm:$0xf]
      %v622 = vld [vmem:[#allocation2 + $0x20] sm:$0xf8]
      %v623 = vld [vmem:[#allocation2 + $0x28] sm:$0xf]
      %v624 = vld [vmem:[#allocation2 + $0x30] sm:$0xf8]
      %v625 = vld [vmem:[#allocation2 + $0x38] sm:$0xf]
      %v626 = vld [vmem:[#allocation2 + $0x40] sm:$0xf8]
      %v627 = vld [vmem:[#allocation2 + $0x48] sm:$0xf]
      %v628 = vld [vmem:[#allocation2 + $0x50] sm:$0xf8]
      %v629 = vld [vmem:[#allocation2 + $0x58] sm:$0xf]
      %v630 = vld [vmem:[#allocation2 + $0x60] sm:$0xf8]
      %v631 = vld [vmem:[#allocation2 + $0x68] sm:$0xf]
      %v632 = vld [vmem:[#allocation2 + $0x70] sm:$0xf8]
      %v633 = vld [vmem:[#allocation2 + $0x78] sm:$0xf]
      %v634 = vld [vmem:[#allocation2 + $0x80] sm:$0xf8]
      %v635 = vld [vmem:[#allocation2 + $0x88] sm:$0xf]
      %v636 = vld [vmem:[#allocation2 + $0x90] sm:$0xf8]
      %v637 = vld [vmem:[#allocation2 + $0x98] sm:$0xf]
      %v639 = vshrl.u32 %v618, 16
      %v641 = vrot.slane %v639, 3
      %v642 = vshll.u32 %v618, 16
      %v644 = vrot.slane %v642, 4
      %v645 = vor.u32 %v641, %v644
      %v647 = vshrl.u32 %v619, 16
      %v649 = vrot.slane %v647, 3
      %v650 = vshll.u32 %v619, 16
      %v652 = vrot.slane %v650, 4
      %v653 = vor.u32 %v649, %v652
      %v654 = vsel %vm492, %v645, %v653
      %v656 = vshrl.u32 %v620, 16
      %v658 = vrot.slane %v656, 3
      %v659 = vshll.u32 %v620, 16
      %v661 = vrot.slane %v659, 4
      %v662 = vor.u32 %v658, %v661
      %v664 = vshrl.u32 %v621, 16
      %v666 = vrot.slane %v664, 3
      %v667 = vshll.u32 %v621, 16
      %v669 = vrot.slane %v667, 4
      %v670 = vor.u32 %v666, %v669
      %v671 = vsel %vm492, %v662, %v670
      %v673 = vshrl.u32 %v622, 16
      %v675 = vrot.slane %v673, 3
      %v676 = vshll.u32 %v622, 16
      %v678 = vrot.slane %v676, 4
      %v679 = vor.u32 %v675, %v678
      %v681 = vshrl.u32 %v623, 16
      %v683 = vrot.slane %v681, 3
      %v684 = vshll.u32 %v623, 16
      %v686 = vrot.slane %v684, 4
      %v687 = vor.u32 %v683, %v686
      %v688 = vsel %vm492, %v679, %v687
      %v690 = vshrl.u32 %v624, 16
      %v692 = vrot.slane %v690, 3
      %v693 = vshll.u32 %v624, 16
      %v695 = vrot.slane %v693, 4
      %v696 = vor.u32 %v692, %v695
      %v698 = vshrl.u32 %v625, 16
      %v700 = vrot.slane %v698, 3
      %v701 = vshll.u32 %v625, 16
      %v703 = vrot.slane %v701, 4
      %v704 = vor.u32 %v700, %v703
      %v705 = vsel %vm492, %v696, %v704
      %v707 = vshrl.u32 %v626, 16
      %v709 = vrot.slane %v707, 3
      %v710 = vshll.u32 %v626, 16
      %v712 = vrot.slane %v710, 4
      %v713 = vor.u32 %v709, %v712
      %v715 = vshrl.u32 %v627, 16
      %v717 = vrot.slane %v715, 3
      %v718 = vshll.u32 %v627, 16
      %v720 = vrot.slane %v718, 4
      %v721 = vor.u32 %v717, %v720
      %v722 = vsel %vm492, %v713, %v721
      %v724 = vshrl.u32 %v628, 16
      %v726 = vrot.slane %v724, 3
      %v727 = vshll.u32 %v628, 16
      %v729 = vrot.slane %v727, 4
      %v730 = vor.u32 %v726, %v729
      %v732 = vshrl.u32 %v629, 16
      %v734 = vrot.slane %v732, 3
      %v735 = vshll.u32 %v629, 16
      %v737 = vrot.slane %v735, 4
      %v738 = vor.u32 %v734, %v737
      %v739 = vsel %vm492, %v730, %v738
      %v741 = vshrl.u32 %v630, 16
      %v743 = vrot.slane %v741, 3
      %v744 = vshll.u32 %v630, 16
      %v746 = vrot.slane %v744, 4
      %v747 = vor.u32 %v743, %v746
      %v749 = vshrl.u32 %v631, 16
      %v751 = vrot.slane %v749, 3
      %v752 = vshll.u32 %v631, 16
      %v754 = vrot.slane %v752, 4
      %v755 = vor.u32 %v751, %v754
      %v756 = vsel %vm492, %v747, %v755
      %v758 = vshrl.u32 %v632, 16
      %v760 = vrot.slane %v758, 3
      %v761 = vshll.u32 %v632, 16
      %v763 = vrot.slane %v761, 4
      %v764 = vor.u32 %v760, %v763
      %v766 = vshrl.u32 %v633, 16
      %v768 = vrot.slane %v766, 3
      %v769 = vshll.u32 %v633, 16
      %v771 = vrot.slane %v769, 4
      %v772 = vor.u32 %v768, %v771
      %v773 = vsel %vm492, %v764, %v772
      %v775 = vshrl.u32 %v634, 16
      %v777 = vrot.slane %v775, 3
      %v778 = vshll.u32 %v634, 16
      %v780 = vrot.slane %v778, 4
      %v781 = vor.u32 %v777, %v780
      %v783 = vshrl.u32 %v635, 16
      %v785 = vrot.slane %v783, 3
      %v786 = vshll.u32 %v635, 16
      %v788 = vrot.slane %v786, 4
      %v789 = vor.u32 %v785, %v788
      %v790 = vsel %vm492, %v781, %v789
      %v792 = vshrl.u32 %v636, 16
      %v794 = vrot.slane %v792, 3
      %v795 = vshll.u32 %v636, 16
      %v797 = vrot.slane %v795, 4
      %v798 = vor.u32 %v794, %v797
      %v800 = vshrl.u32 %v637, 16
      %v802 = vrot.slane %v800, 3
      %v803 = vshll.u32 %v637, 16
      %v805 = vrot.slane %v803, 4
      %v806 = vor.u32 %v802, %v805
      %v807 = vsel %vm492, %v798, %v806
      %vm818 = vcmask 31744
      %819 = vst.msk [vmem:[#allocation3] sm:$0xff] %vm818, %v654
      %820 = vst.msk [vmem:[#allocation3 + $0x8] sm:$0xff] %vm818, %v671
      %821 = vst.msk [vmem:[#allocation3 + $0x10] sm:$0xff] %vm818, %v688
      %822 = vst.msk [vmem:[#allocation3 + $0x18] sm:$0xff] %vm818, %v705
      %823 = vst.msk [vmem:[#allocation3 + $0x20] sm:$0xff] %vm818, %v722
      %824 = vst.msk [vmem:[#allocation3 + $0x28] sm:$0xff] %vm818, %v739
      %825 = vst.msk [vmem:[#allocation3 + $0x30] sm:$0xff] %vm818, %v756
      %826 = vst.msk [vmem:[#allocation3 + $0x38] sm:$0xff] %vm818, %v773
      %827 = vst.msk [vmem:[#allocation3 + $0x40] sm:$0xff] %vm818, %v790
      %828 = vst.msk [vmem:[#allocation3 + $0x48] sm:$0xff] %vm818, %v807
      %v829 = vld [vmem:[#allocation2] sm:$0xf0]
      %v830 = vld [vmem:[#allocation2 + $0x8] sm:$0xf]
      %v831 = vld [vmem:[#allocation2 + $0x10] sm:$0xf0]
      %v832 = vld [vmem:[#allocation2 + $0x18] sm:$0xf]
      %v833 = vld [vmem:[#allocation2 + $0x20] sm:$0xf0]
      %v834 = vld [vmem:[#allocation2 + $0x28] sm:$0xf]
      %v835 = vld [vmem:[#allocation2 + $0x30] sm:$0xf0]
      %v836 = vld [vmem:[#allocation2 + $0x38] sm:$0xf]
      %v837 = vld [vmem:[#allocation2 + $0x40] sm:$0xf0]
      %v838 = vld [vmem:[#allocation2 + $0x48] sm:$0xf]
      %v839 = vld [vmem:[#allocation2 + $0x50] sm:$0xf0]
      %v840 = vld [vmem:[#allocation2 + $0x58] sm:$0xf]
      %v841 = vld [vmem:[#allocation2 + $0x60] sm:$0xf0]
      %v842 = vld [vmem:[#allocation2 + $0x68] sm:$0xf]
      %v843 = vld [vmem:[#allocation2 + $0x70] sm:$0xf0]
      %v844 = vld [vmem:[#allocation2 + $0x78] sm:$0xf]
      %v845 = vld [vmem:[#allocation2 + $0x80] sm:$0xf0]
      %v846 = vld [vmem:[#allocation2 + $0x88] sm:$0xf]
      %v847 = vld [vmem:[#allocation2 + $0x90] sm:$0xf0]
      %v848 = vld [vmem:[#allocation2 + $0x98] sm:$0xf]
      %vm869 = vcmask 1043456
      %v870 = vrot.slane %v829, 4
      %v871 = vrot.slane %v830, 4
      %v872 = vsel %vm869, %v870, %v871
      %v873 = vrot.slane %v831, 4
      %v874 = vrot.slane %v832, 4
      %v875 = vsel %vm869, %v873, %v874
      %v876 = vrot.slane %v833, 4
      %v877 = vrot.slane %v834, 4
      %v878 = vsel %vm869, %v876, %v877
      %v879 = vrot.slane %v835, 4
      %v880 = vrot.slane %v836, 4
      %v881 = vsel %vm869, %v879, %v880
      %v882 = vrot.slane %v837, 4
      %v883 = vrot.slane %v838, 4
      %v884 = vsel %vm869, %v882, %v883
      %v885 = vrot.slane %v839, 4
      %v886 = vrot.slane %v840, 4
      %v887 = vsel %vm869, %v885, %v886
      %v888 = vrot.slane %v841, 4
      %v889 = vrot.slane %v842, 4
      %v890 = vsel %vm869, %v888, %v889
      %v891 = vrot.slane %v843, 4
      %v892 = vrot.slane %v844, 4
      %v893 = vsel %vm869, %v891, %v892
      %v894 = vrot.slane %v845, 4
      %v895 = vrot.slane %v846, 4
      %v896 = vsel %vm869, %v894, %v895
      %v897 = vrot.slane %v847, 4
      %v898 = vrot.slane %v848, 4
      %v899 = vsel %vm869, %v897, %v898
      %900 = vrot.lane.b32.xlu0 %v872, 4
      %v901 = vpop.permute.xlu0 %900
      %902 = vrot.lane.b32.xlu0 %v875, 4
      %v903 = vpop.permute.xlu0 %902
      %904 = vrot.lane.b32.xlu0 %v878, 4
      %v905 = vpop.permute.xlu0 %904
      %906 = vrot.lane.b32.xlu0 %v881, 4
      %v907 = vpop.permute.xlu0 %906
      %908 = vrot.lane.b32.xlu0 %v884, 4
      %v909 = vpop.permute.xlu0 %908
      %910 = vrot.lane.b32.xlu0 %v887, 4
      %v911 = vpop.permute.xlu0 %910
      %912 = vrot.lane.b32.xlu0 %v890, 4
      %v913 = vpop.permute.xlu0 %912
      %914 = vrot.lane.b32.xlu0 %v893, 4
      %v915 = vpop.permute.xlu0 %914
      %916 = vrot.lane.b32.xlu0 %v896, 4
      %v917 = vpop.permute.xlu0 %916
      %918 = vrot.lane.b32.xlu0 %v899, 4
      %v919 = vpop.permute.xlu0 %918
      %vm930 = vcmask 64544
      %931 = vst.msk [vmem:[#allocation3] sm:$0xff] %vm930, %v901
      %932 = vst.msk [vmem:[#allocation3 + $0x8] sm:$0xff] %vm930, %v903
      %933 = vst.msk [vmem:[#allocation3 + $0x10] sm:$0xff] %vm930, %v905
      %934 = vst.msk [vmem:[#allocation3 + $0x18] sm:$0xff] %vm930, %v907
      %935 = vst.msk [vmem:[#allocation3 + $0x20] sm:$0xff] %vm930, %v909
      %936 = vst.msk [vmem:[#allocation3 + $0x28] sm:$0xff] %vm930, %v911
      %937 = vst.msk [vmem:[#allocation3 + $0x30] sm:$0xff] %vm930, %v913
      %938 = vst.msk [vmem:[#allocation3 + $0x38] sm:$0xff] %vm930, %v915
      %939 = vst.msk [vmem:[#allocation3 + $0x40] sm:$0xff] %vm930, %v917
      %940 = vst.msk [vmem:[#allocation3 + $0x48] sm:$0xff] %vm930, %v919
      %v941 = vld [vmem:[#allocation2] sm:$0xf0]
      %v942 = vld [vmem:[#allocation2 + $0x8] sm:$0x1f]
      %v943 = vld [vmem:[#allocation2 + $0x10] sm:$0xf0]
      %v944 = vld [vmem:[#allocation2 + $0x18] sm:$0x1f]
      %v945 = vld [vmem:[#allocation2 + $0x20] sm:$0xf0]
      %v946 = vld [vmem:[#allocation2 + $0x28] sm:$0x1f]
      %v947 = vld [vmem:[#allocation2 + $0x30] sm:$0xf0]
      %v948 = vld [vmem:[#allocation2 + $0x38] sm:$0x1f]
      %v949 = vld [vmem:[#allocation2 + $0x40] sm:$0xf0]
      %v950 = vld [vmem:[#allocation2 + $0x48] sm:$0x1f]
      %v951 = vld [vmem:[#allocation2 + $0x50] sm:$0xf0]
      %v952 = vld [vmem:[#allocation2 + $0x58] sm:$0x1f]
      %v953 = vld [vmem:[#allocation2 + $0x60] sm:$0xf0]
      %v954 = vld [vmem:[#allocation2 + $0x68] sm:$0x1f]
      %v955 = vld [vmem:[#allocation2 + $0x70] sm:$0xf0]
      %v956 = vld [vmem:[#allocation2 + $0x78] sm:$0x1f]
      %v957 = vld [vmem:[#allocation2 + $0x80] sm:$0xf0]
      %v958 = vld [vmem:[#allocation2 + $0x88] sm:$0x1f]
      %v959 = vld [vmem:[#allocation2 + $0x90] sm:$0xf0]
      %v960 = vld [vmem:[#allocation2 + $0x98] sm:$0x1f]
      %vm961 = vsmask.f32 3328
      %v963 = vshrl.u32 %v941, 16
      %v965 = vrot.slane %v963, 4
      %v966 = vshll.u32 %v941, 16
      %v968 = vrot.slane %v966, 5
      %v969 = vor.u32 %v965, %v968
      %v971 = vshrl.u32 %v942, 16
      %v973 = vrot.slane %v971, 4
      %v974 = vshll.u32 %v942, 16
      %v976 = vrot.slane %v974, 5
      %v977 = vor.u32 %v973, %v976
      %v978 = vsel %vm961, %v969, %v977
      %v980 = vshrl.u32 %v943, 16
      %v982 = vrot.slane %v980, 4
      %v983 = vshll.u32 %v943, 16
      %v985 = vrot.slane %v983, 5
      %v986 = vor.u32 %v982, %v985
      %v988 = vshrl.u32 %v944, 16
      %v990 = vrot.slane %v988, 4
      %v991 = vshll.u32 %v944, 16
      %v993 = vrot.slane %v991, 5
      %v994 = vor.u32 %v990, %v993
      %v995 = vsel %vm961, %v986, %v994
      %v997 = vshrl.u32 %v945, 16
      %v999 = vrot.slane %v997, 4
      %v1000 = vshll.u32 %v945, 16
      %v1002 = vrot.slane %v1000, 5
      %v1003 = vor.u32 %v999, %v1002
      %v1005 = vshrl.u32 %v946, 16
      %v1007 = vrot.slane %v1005, 4
      %v1008 = vshll.u32 %v946, 16
      %v1010 = vrot.slane %v1008, 5
      %v1011 = vor.u32 %v1007, %v1010
      %v1012 = vsel %vm961, %v1003, %v1011
      %v1014 = vshrl.u32 %v947, 16
      %v1016 = vrot.slane %v1014, 4
      %v1017 = vshll.u32 %v947, 16
      %v1019 = vrot.slane %v1017, 5
      %v1020 = vor.u32 %v1016, %v1019
      %v1022 = vshrl.u32 %v948, 16
      %v1024 = vrot.slane %v1022, 4
      %v1025 = vshll.u32 %v948, 16
      %v1027 = vrot.slane %v1025, 5
      %v1028 = vor.u32 %v1024, %v1027
      %v1029 = vsel %vm961, %v1020, %v1028
      %v1031 = vshrl.u32 %v949, 16
      %v1033 = vrot.slane %v1031, 4
      %v1034 = vshll.u32 %v949, 16
      %v1036 = vrot.slane %v1034, 5
      %v1037 = vor.u32 %v1033, %v1036
      %v1039 = vshrl.u32 %v950, 16
      %v1041 = vrot.slane %v1039, 4
      %v1042 = vshll.u32 %v950, 16
      %v1044 = vrot.slane %v1042, 5
      %v1045 = vor.u32 %v1041, %v1044
      %v1046 = vsel %vm961, %v1037, %v1045
      %v1048 = vshrl.u32 %v951, 16
      %v1050 = vrot.slane %v1048, 4
      %v1051 = vshll.u32 %v951, 16
      %v1053 = vrot.slane %v1051, 5
      %v1054 = vor.u32 %v1050, %v1053
      %v1056 = vshrl.u32 %v952, 16
      %v1058 = vrot.slane %v1056, 4
      %v1059 = vshll.u32 %v952, 16
      %v1061 = vrot.slane %v1059, 5
      %v1062 = vor.u32 %v1058, %v1061
      %v1063 = vsel %vm961, %v1054, %v1062
      %v1065 = vshrl.u32 %v953, 16
      %v1067 = vrot.slane %v1065, 4
      %v1068 = vshll.u32 %v953, 16
      %v1070 = vrot.slane %v1068, 5
      %v1071 = vor.u32 %v1067, %v1070
      %v1073 = vshrl.u32 %v954, 16
      %v1075 = vrot.slane %v1073, 4
      %v1076 = vshll.u32 %v954, 16
      %v1078 = vrot.slane %v1076, 5
      %v1079 = vor.u32 %v1075, %v1078
      %v1080 = vsel %vm961, %v1071, %v1079
      %v1082 = vshrl.u32 %v955, 16
      %v1084 = vrot.slane %v1082, 4
      %v1085 = vshll.u32 %v955, 16
      %v1087 = vrot.slane %v1085, 5
      %v1088 = vor.u32 %v1084, %v1087
      %v1090 = vshrl.u32 %v956, 16
      %v1092 = vrot.slane %v1090, 4
      %v1093 = vshll.u32 %v956, 16
      %v1095 = vrot.slane %v1093, 5
      %v1096 = vor.u32 %v1092, %v1095
      %v1097 = vsel %vm961, %v1088, %v1096
      %v1099 = vshrl.u32 %v957, 16
      %v1101 = vrot.slane %v1099, 4
      %v1102 = vshll.u32 %v957, 16
      %v1104 = vrot.slane %v1102, 5
      %v1105 = vor.u32 %v1101, %v1104
      %v1107 = vshrl.u32 %v958, 16
      %v1109 = vrot.slane %v1107, 4
      %v1110 = vshll.u32 %v958, 16
      %v1112 = vrot.slane %v1110, 5
      %v1113 = vor.u32 %v1109, %v1112
      %v1114 = vsel %vm961, %v1105, %v1113
      %v1116 = vshrl.u32 %v959, 16
      %v1118 = vrot.slane %v1116, 4
      %v1119 = vshll.u32 %v959, 16
      %v1121 = vrot.slane %v1119, 5
      %v1122 = vor.u32 %v1118, %v1121
      %v1124 = vshrl.u32 %v960, 16
      %v1126 = vrot.slane %v1124, 4
      %v1127 = vshll.u32 %v960, 16
      %v1129 = vrot.slane %v1127, 5
      %v1130 = vor.u32 %v1126, %v1129
      %v1131 = vsel %vm961, %v1122, %v1130
      %1132 = vrot.lane.b32.xlu0 %v978, 8
      %v1133 = vpop.permute.xlu0 %1132
      %1134 = vrot.lane.b32.xlu0 %v995, 8
      %v1135 = vpop.permute.xlu0 %1134
      %1136 = vrot.lane.b32.xlu0 %v1012, 8
      %v1137 = vpop.permute.xlu0 %1136
      %1138 = vrot.lane.b32.xlu0 %v1029, 8
      %v1139 = vpop.permute.xlu0 %1138
      %1140 = vrot.lane.b32.xlu0 %v1046, 8
      %v1141 = vpop.permute.xlu0 %1140
      %1142 = vrot.lane.b32.xlu0 %v1063, 8
      %v1143 = vpop.permute.xlu0 %1142
      %1144 = vrot.lane.b32.xlu0 %v1080, 8
      %v1145 = vpop.permute.xlu0 %1144
      %1146 = vrot.lane.b32.xlu0 %v1097, 8
      %v1147 = vpop.permute.xlu0 %1146
      %1148 = vrot.lane.b32.xlu0 %v1114, 8
      %v1149 = vpop.permute.xlu0 %1148
      %1150 = vrot.lane.b32.xlu0 %v1131, 8
      %v1151 = vpop.permute.xlu0 %1150
      %vm1162 = vcmask 97344
      %1163 = vst.msk [vmem:[#allocation3] sm:$0xff] %vm1162, %v1133
      %1164 = vst.msk [vmem:[#allocation3 + $0x8] sm:$0xff] %vm1162, %v1135
      %1165 = vst.msk [vmem:[#allocation3 + $0x10] sm:$0xff] %vm1162, %v1137
      %1166 = vst.msk [vmem:[#allocation3 + $0x18] sm:$0xff] %vm1162, %v1139
      %1167 = vst.msk [vmem:[#allocation3 + $0x20] sm:$0xff] %vm1162, %v1141
      %1168 = vst.msk [vmem:[#allocation3 + $0x28] sm:$0xff] %vm1162, %v1143
      %1169 = vst.msk [vmem:[#allocation3 + $0x30] sm:$0xff] %vm1162, %v1145
      %1170 = vst.msk [vmem:[#allocation3 + $0x38] sm:$0xff] %vm1162, %v1147
      %1171 = vst.msk [vmem:[#allocation3 + $0x40] sm:$0xff] %vm1162, %v1149
      %1172 = vst.msk [vmem:[#allocation3 + $0x48] sm:$0xff] %vm1162, %v1151
      %v1173 = vld [vmem:[#allocation3] sm:$0xff]
      %v1174 = vld [vmem:[#allocation3 + $0x8] sm:$0xff]
      %v1175 = vld [vmem:[#allocation3 + $0x10] sm:$0xff]
      %v1176 = vld [vmem:[#allocation3 + $0x18] sm:$0xff]
      %v1177 = vld [vmem:[#allocation3 + $0x20] sm:$0xff]
      %v1178 = vld [vmem:[#allocation3 + $0x28] sm:$0xff]
      %v1179 = vld [vmem:[#allocation3 + $0x30] sm:$0xff]
      %v1180 = vld [vmem:[#allocation3 + $0x38] sm:$0xff]
      %v1181 = vld [vmem:[%s3] sm:$0xf]
      %v1182 = vld [vmem:[%s3 + $0x4] sm:$0x3]
      %s1183 = scalar_lea.vmem [#allocation3], 8
      %v1184 = vld [vmem:[%s1183] sm:$0xff]
      %v1185 = vld [vmem:[%s1183 + $0x8] sm:$0xff]
      %v1186 = vld [vmem:[%s1183 + $0x10] sm:$0xff]
      %v1187 = vld [vmem:[%s1183 + $0x18] sm:$0xff]
      %v1188 = vld [vmem:[%s1183 + $0x20] sm:$0xff]
      %v1189 = vld [vmem:[%s1183 + $0x28] sm:$0xff]
      %v1190 = vld [vmem:[%s1183 + $0x30] sm:$0xff]
      %v1191 = vld [vmem:[%s1183 + $0x38] sm:$0xff]
      %s1192 = scalar_lea.vmem %s3, 8
      %v1193 = vld [vmem:[%s1192] sm:$0xf]
      %v1194 = vld [vmem:[%s1192 + $0x4] sm:$0x3]
      %v1197 = vunpack.c.l.b16 %v1193
      %v1198 = vunpack.c.l.b16 %v1194
      %v1199 = vpack.c.b16 %v1198, %v1197
      %vm1200 = vcmask 97280
      %v1202 = vsel %vm1200, %v1184, 0
      %v1205 = vsel %vm1200, %v1185, 0
      %v1208 = vsel %vm1200, %v1186, 0
      %v1211 = vsel %vm1200, %v1187, 0
      %v1214 = vsel %vm1200, %v1188, 0
      %v1217 = vsel %vm1200, %v1189, 0
      %v1220 = vsel %vm1200, %v1190, 0
      %v1223 = vsel %vm1200, %v1191, 0
      %vm1225 = vcmask 1045504
      %v1227 = vsel %vm1225, %v1199, 0
      %1229 = vmatprep.subr.bf16.mxu0 0
      %1230 = vmatpush1.bf16.msra.mxu0 %v1227
      %1231 = vmatprep.subr.bf16.mxu0 0
      %1232 = vmatpush1.bf16.msra.mxu0 0
      %1233 = vmatprep.subr.bf16.mxu0 0
      %1234 = vmatpush1.bf16.msra.mxu0 0
      %1235 = vmatprep.subr.bf16.mxu0 0
      %1236 = vmatpush1.bf16.msra.mxu0 0
      %1237 = vmatprep.subr.bf16.mxu0 0
      %1238 = vmatpush1.bf16.msra.mxu0 0
      %1239 = vmatprep.subr.bf16.mxu0 0
      %1240 = vmatpush1.bf16.msra.mxu0 0
      %1241 = vmatprep.subr.bf16.mxu0 0
      %1242 = vmatpush1.bf16.msra.mxu0 0
      %1243 = vmatprep.subr.bf16.mxu0 0
      %1244 = vmatpush1.bf16.msra.mxu0 0
      %1245 = vmatprep.subr.bf16.mxu0 0
      %1246 = vmatpush1.bf16.msra.mxu0 0
      %1247 = vmatprep.subr.bf16.mxu0 0
      %1248 = vmatpush1.bf16.msra.mxu0 0
      %1249 = vmatprep.subr.bf16.mxu0 0
      %1250 = vmatpush1.bf16.msra.mxu0 0
      %1251 = vmatprep.subr.bf16.mxu0 0
      %1252 = vmatpush1.bf16.msra.mxu0 0
      %1253 = vmatprep.subr.bf16.mxu0 0
      %1254 = vmatpush1.bf16.msra.mxu0 0
      %1255 = vmatprep.subr.bf16.mxu0 0
      %1256 = vmatpush1.bf16.msra.mxu0 0
      %1257 = vmatprep.subr.bf16.mxu0 0
      %1258 = vmatpush1.bf16.msra.mxu0 0
      %1259 = vmatprep.subr.bf16.mxu0 0
      %1260 = vmatpush1.bf16.msra.mxu0 0
      %1261 = vmatprep.mubr.bf16.mxu0 0
      %1262 = vmatmul.mubr.bf16.gmra.mrb[0].mxu0 %v1202
      %v1263 = vpop.f32.mrb[0].mxu0
      %v1264 = vadd.f32 0.0, %v1263
      %v1265 = vpop.f32.mrb[0].mxu0
      %v1266 = vpop.f32.mrb[0].mxu0
      %v1267 = vadd.f32 0.0, %v1266
      %v1268 = vpop.f32.mrb[0].mxu0
      %1269 = vmatprep.mubr.bf16.mxu0 0
      %1270 = vmatmul.mubr.bf16.gmra.mrb[0].mxu0 %v1205
      %v1271 = vpop.f32.mrb[0].mxu0
      %v1272 = vadd.f32 0.0, %v1271
      %v1273 = vpop.f32.mrb[0].mxu0
      %v1274 = vpop.f32.mrb[0].mxu0
      %v1275 = vadd.f32 0.0, %v1274
      %v1276 = vpop.f32.mrb[0].mxu0
      %1277 = vmatprep.mubr.bf16.mxu0 0
      %1278 = vmatmul.mubr.bf16.gmra.mrb[0].mxu0 %v1208
      %v1279 = vpop.f32.mrb[0].mxu0
      %v1280 = vadd.f32 0.0, %v1279
      %v1281 = vpop.f32.mrb[0].mxu0
      %v1282 = vpop.f32.mrb[0].mxu0
      %v1283 = vadd.f32 0.0, %v1282
      %v1284 = vpop.f32.mrb[0].mxu0
      %1285 = vmatprep.mubr.bf16.mxu0 0
      %1286 = vmatmul.mubr.bf16.gmra.mrb[0].mxu0 %v1211
      %v1287 = vpop.f32.mrb[0].mxu0
      %v1288 = vadd.f32 0.0, %v1287
      %v1289 = vpop.f32.mrb[0].mxu0
      %v1290 = vpop.f32.mrb[0].mxu0
      %v1291 = vadd.f32 0.0, %v1290
      %v1292 = vpop.f32.mrb[0].mxu0
      %1293 = vmatprep.mubr.bf16.mxu0 0
      %1294 = vmatmul.mubr.bf16.gmra.mrb[0].mxu0 %v1214
      %v1295 = vpop.f32.mrb[0].mxu0
      %v1296 = vadd.f32 0.0, %v1295
      %v1297 = vpop.f32.mrb[0].mxu0
      %v1298 = vpop.f32.mrb[0].mxu0
      %v1299 = vadd.f32 0.0, %v1298
      %v1300 = vpop.f32.mrb[0].mxu0
      %1301 = vmatprep.mubr.bf16.mxu0 0
      %1302 = vmatmul.mubr.bf16.gmra.mrb[0].mxu0 %v1217
      %v1303 = vpop.f32.mrb[0].mxu0
      %v1304 = vadd.f32 0.0, %v1303
      %v1305 = vpop.f32.mrb[0].mxu0
      %v1306 = vpop.f32.mrb[0].mxu0
      %v1307 = vadd.f32 0.0, %v1306
      %v1308 = vpop.f32.mrb[0].mxu0
      %1309 = vmatprep.mubr.bf16.mxu0 0
      %1310 = vmatmul.mubr.bf16.gmra.mrb[0].mxu0 %v1220
      %v1311 = vpop.f32.mrb[0].mxu0
      %v1312 = vadd.f32 0.0, %v1311
      %v1313 = vpop.f32.mrb[0].mxu0
      %v1314 = vpop.f32.mrb[0].mxu0
      %v1315 = vadd.f32 0.0, %v1314
      %v1316 = vpop.f32.mrb[0].mxu0
      %1317 = vmatprep.mubr.bf16.mxu0 0
      %1318 = vmatmul.mubr.bf16.gmra.mrb[0].mxu0 %v1223
      %v1319 = vpop.f32.mrb[0].mxu0
      %v1320 = vadd.f32 0.0, %v1319
      %v1321 = vpop.f32.mrb[0].mxu0
      %v1322 = vpop.f32.mrb[0].mxu0
      %v1323 = vadd.f32 0.0, %v1322
      %v1324 = vpop.f32.mrb[0].mxu0
      %1325 = vdwg.mxu0
      %v1328 = vunpack.c.l.b16 %v1181
      %v1329 = vunpack.c.l.b16 %v1182
      %v1330 = vpack.c.b16 %v1329, %v1328
      %v1332 = vsel %vm1200, %v1173, 0
      %v1335 = vsel %vm1200, %v1174, 0
      %v1338 = vsel %vm1200, %v1175, 0
      %v1341 = vsel %vm1200, %v1176, 0
      %v1344 = vsel %vm1200, %v1177, 0
      %v1347 = vsel %vm1200, %v1178, 0
      %v1350 = vsel %vm1200, %v1179, 0
      %v1353 = vsel %vm1200, %v1180, 0
      %v1356 = vsel %vm1225, %v1330, 0
      %1358 = vmatprep.subr.bf16.mxu0 0
      %1359 = vmatpush1.bf16.msra.mxu0 %v1356
      %1360 = vmatprep.subr.bf16.mxu0 0
      %1361 = vmatpush1.bf16.msra.mxu0 0
      %1362 = vmatprep.subr.bf16.mxu0 0
      %1363 = vmatpush1.bf16.msra.mxu0 0
      %1364 = vmatprep.subr.bf16.mxu0 0
      %1365 = vmatpush1.bf16.msra.mxu0 0
      %1366 = vmatprep.subr.bf16.mxu0 0
      %1367 = vmatpush1.bf16.msra.mxu0 0
      %1368 = vmatprep.subr.bf16.mxu0 0
      %1369 = vmatpush1.bf16.msra.mxu0 0
      %1370 = vmatprep.subr.bf16.mxu0 0
      %1371 = vmatpush1.bf16.msra.mxu0 0
      %1372 = vmatprep.subr.bf16.mxu0 0
      %1373 = vmatpush1.bf16.msra.mxu0 0
      %1374 = vmatprep.subr.bf16.mxu0 0
      %1375 = vmatpush1.bf16.msra.mxu0 0
      %1376 = vmatprep.subr.bf16.mxu0 0
      %1377 = vmatpush1.bf16.msra.mxu0 0
      %1378 = vmatprep.subr.bf16.mxu0 0
      %1379 = vmatpush1.bf16.msra.mxu0 0
      %1380 = vmatprep.subr.bf16.mxu0 0
      %1381 = vmatpush1.bf16.msra.mxu0 0
      %1382 = vmatprep.subr.bf16.mxu0 0
      %1383 = vmatpush1.bf16.msra.mxu0 0
      %1384 = vmatprep.subr.bf16.mxu0 0
      %1385 = vmatpush1.bf16.msra.mxu0 0
      %1386 = vmatprep.subr.bf16.mxu0 0
      %1387 = vmatpush1.bf16.msra.mxu0 0
      %1388 = vmatprep.subr.bf16.mxu0 0
      %1389 = vmatpush1.bf16.msra.mxu0 0
      %1390 = vmatprep.mubr.bf16.mxu0 0
      %1391 = vmatmul.mubr.bf16.gmra.mrb[0].mxu0 %v1332
      %v1392 = vpop.f32.mrb[0].mxu0
      %v1393 = vadd.f32 %v1264, %v1392
      %v1394 = vpop.f32.mrb[0].mxu0
      %v1395 = vpop.f32.mrb[0].mxu0
      %v1396 = vadd.f32 %v1267, %v1395
      %v1397 = vpop.f32.mrb[0].mxu0
      %1398 = vmatprep.mubr.bf16.mxu0 0
      %1399 = vmatmul.mubr.bf16.gmra.mrb[0].mxu0 %v1335
      %v1400 = vpop.f32.mrb[0].mxu0
      %v1401 = vadd.f32 %v1272, %v1400
      %v1402 = vpop.f32.mrb[0].mxu0
      %v1403 = vpop.f32.mrb[0].mxu0
      %v1404 = vadd.f32 %v1275, %v1403
      %v1405 = vpop.f32.mrb[0].mxu0
      %1406 = vmatprep.mubr.bf16.mxu0 0
      %1407 = vmatmul.mubr.bf16.gmra.mrb[0].mxu0 %v1338
      %v1408 = vpop.f32.mrb[0].mxu0
      %v1409 = vadd.f32 %v1280, %v1408
      %v1410 = vpop.f32.mrb[0].mxu0
      %v1411 = vpop.f32.mrb[0].mxu0
      %v1412 = vadd.f32 %v1283, %v1411
      %v1413 = vpop.f32.mrb[0].mxu0
      %1414 = vmatprep.mubr.bf16.mxu0 0
      %1415 = vmatmul.mubr.bf16.gmra.mrb[0].mxu0 %v1341
      %v1416 = vpop.f32.mrb[0].mxu0
      %v1417 = vadd.f32 %v1288, %v1416
      %v1418 = vpop.f32.mrb[0].mxu0
      %v1419 = vpop.f32.mrb[0].mxu0
      %v1420 = vadd.f32 %v1291, %v1419
      %v1421 = vpop.f32.mrb[0].mxu0
      %1422 = vmatprep.mubr.bf16.mxu0 0
      %1423 = vmatmul.mubr.bf16.gmra.mrb[0].mxu0 %v1344
      %v1424 = vpop.f32.mrb[0].mxu0
      %v1425 = vadd.f32 %v1296, %v1424
      %v1426 = vpop.f32.mrb[0].mxu0
      %v1427 = vpop.f32.mrb[0].mxu0
      %v1428 = vadd.f32 %v1299, %v1427
      %v1429 = vpop.f32.mrb[0].mxu0
      %1430 = vmatprep.mubr.bf16.mxu0 0
      %1431 = vmatmul.mubr.bf16.gmra.mrb[0].mxu0 %v1347
      %v1432 = vpop.f32.mrb[0].mxu0
      %v1433 = vadd.f32 %v1304, %v1432
      %v1434 = vpop.f32.mrb[0].mxu0
      %v1435 = vpop.f32.mrb[0].mxu0
      %v1436 = vadd.f32 %v1307, %v1435
      %v1437 = vpop.f32.mrb[0].mxu0
      %1438 = vmatprep.mubr.bf16.mxu0 0
      %1439 = vmatmul.mubr.bf16.gmra.mrb[0].mxu0 %v1350
      %v1440 = vpop.f32.mrb[0].mxu0
      %v1441 = vadd.f32 %v1312, %v1440
      %v1442 = vpop.f32.mrb[0].mxu0
      %v1443 = vpop.f32.mrb[0].mxu0
      %v1444 = vadd.f32 %v1315, %v1443
      %v1445 = vpop.f32.mrb[0].mxu0
      %1446 = vmatprep.mubr.bf16.mxu0 0
      %1447 = vmatmul.mubr.bf16.gmra.mrb[0].mxu0 %v1353
      %v1448 = vpop.f32.mrb[0].mxu0
      %v1449 = vadd.f32 %v1320, %v1448
      %v1450 = vpop.f32.mrb[0].mxu0
      %v1451 = vpop.f32.mrb[0].mxu0
      %v1452 = vadd.f32 %v1323, %v1451
      %v1453 = vpop.f32.mrb[0].mxu0
      %1454 = vdwg.mxu0
      %s1455 = scalar_lea.vmem [#allocation3], 16
      %v1456 = vld [vmem:[%s1455] sm:$0xff]
      %v1457 = vld [vmem:[%s1455 + $0x8] sm:$0xff]
      %v1458 = vld [vmem:[%s1455 + $0x10] sm:$0xff]
      %v1459 = vld [vmem:[%s1455 + $0x18] sm:$0xff]
      %v1460 = vld [vmem:[%s1455 + $0x20] sm:$0xff]
      %v1461 = vld [vmem:[%s1455 + $0x28] sm:$0xff]
      %v1462 = vld [vmem:[%s1455 + $0x30] sm:$0xff]
      %v1463 = vld [vmem:[%s1455 + $0x38] sm:$0xff]
      %s1464 = scalar_lea.vmem %s3, 16
      %v1465 = vld [vmem:[%s1464] sm:$0xf]
      %v1466 = vld [vmem:[%s1464 + $0x4] sm:$0x3]
      %v1469 = vunpack.c.l.b16 %v1465
      %v1470 = vunpack.c.l.b16 %v1466
      %v1471 = vpack.c.b16 %v1470, %v1469
      %v1473 = vsel %vm1200, %v1456, 0
      %v1476 = vsel %vm1200, %v1457, 0
      %v1479 = vsel %vm1200, %v1458, 0
      %v1482 = vsel %vm1200, %v1459, 0
      %v1485 = vsel %vm1200, %v1460, 0
      %v1488 = vsel %vm1200, %v1461, 0
      %v1491 = vsel %vm1200, %v1462, 0
      %v1494 = vsel %vm1200, %v1463, 0
      %v1497 = vsel %vm1225, %v1471, 0
      %1499 = vmatprep.subr.bf16.mxu0 0
      %1500 = vmatpush1.bf16.msra.mxu0 %v1497
      %1501 = vmatprep.subr.bf16.mxu0 0
      %1502 = vmatpush1.bf16.msra.mxu0 0
      %1503 = vmatprep.subr.bf16.mxu0 0
      %1504 = vmatpush1.bf16.msra.mxu0 0
      %1505 = vmatprep.subr.bf16.mxu0 0
      %1506 = vmatpush1.bf16.msra.mxu0 0
      %1507 = vmatprep.subr.bf16.mxu0 0
      %1508 = vmatpush1.bf16.msra.mxu0 0
      %1509 = vmatprep.subr.bf16.mxu0 0
      %1510 = vmatpush1.bf16.msra.mxu0 0
      %1511 = vmatprep.subr.bf16.mxu0 0
      %1512 = vmatpush1.bf16.msra.mxu0 0
      %1513 = vmatprep.subr.bf16.mxu0 0
      %1514 = vmatpush1.bf16.msra.mxu0 0
      %1515 = vmatprep.subr.bf16.mxu0 0
      %1516 = vmatpush1.bf16.msra.mxu0 0
      %1517 = vmatprep.subr.bf16.mxu0 0
      %1518 = vmatpush1.bf16.msra.mxu0 0
      %1519 = vmatprep.subr.bf16.mxu0 0
      %1520 = vmatpush1.bf16.msra.mxu0 0
      %1521 = vmatprep.subr.bf16.mxu0 0
      %1522 = vmatpush1.bf16.msra.mxu0 0
      %1523 = vmatprep.subr.bf16.mxu0 0
      %1524 = vmatpush1.bf16.msra.mxu0 0
      %1525 = vmatprep.subr.bf16.mxu0 0
      %1526 = vmatpush1.bf16.msra.mxu0 0
      %1527 = vmatprep.subr.bf16.mxu0 0
      %1528 = vmatpush1.bf16.msra.mxu0 0
      %1529 = vmatprep.subr.bf16.mxu0 0
      %1530 = vmatpush1.bf16.msra.mxu0 0
      %1531 = vmatprep.mubr.bf16.mxu0 0
      %1532 = vmatmul.mubr.bf16.gmra.mrb[0].mxu0 %v1473
      %v1533 = vpop.f32.mrb[0].mxu0
      %v1534 = vadd.f32 0.0, %v1533
      %v1535 = vpop.f32.mrb[0].mxu0
      %v1536 = vpop.f32.mrb[0].mxu0
      %v1537 = vadd.f32 0.0, %v1536
      %v1538 = vpop.f32.mrb[0].mxu0
      %1539 = vmatprep.mubr.bf16.mxu0 0
      %1540 = vmatmul.mubr.bf16.gmra.mrb[0].mxu0 %v1476
      %v1541 = vpop.f32.mrb[0].mxu0
      %v1542 = vadd.f32 0.0, %v1541
      %v1543 = vpop.f32.mrb[0].mxu0
      %v1544 = vpop.f32.mrb[0].mxu0
      %v1545 = vadd.f32 0.0, %v1544
      %v1546 = vpop.f32.mrb[0].mxu0
      %1547 = vmatprep.mubr.bf16.mxu0 0
      %1548 = vmatmul.mubr.bf16.gmra.mrb[0].mxu0 %v1479
      %v1549 = vpop.f32.mrb[0].mxu0
      %v1550 = vadd.f32 0.0, %v1549
      %v1551 = vpop.f32.mrb[0].mxu0
      %v1552 = vpop.f32.mrb[0].mxu0
      %v1553 = vadd.f32 0.0, %v1552
      %v1554 = vpop.f32.mrb[0].mxu0
      %1555 = vmatprep.mubr.bf16.mxu0 0
      %1556 = vmatmul.mubr.bf16.gmra.mrb[0].mxu0 %v1482
      %v1557 = vpop.f32.mrb[0].mxu0
      %v1558 = vadd.f32 0.0, %v1557
      %v1559 = vpop.f32.mrb[0].mxu0
      %v1560 = vpop.f32.mrb[0].mxu0
      %v1561 = vadd.f32 0.0, %v1560
      %v1562 = vpop.f32.mrb[0].mxu0
      %1563 = vmatprep.mubr.bf16.mxu0 0
      %1564 = vmatmul.mubr.bf16.gmra.mrb[0].mxu0 %v1485
      %v1565 = vpop.f32.mrb[0].mxu0
      %v1566 = vadd.f32 0.0, %v1565
      %v1567 = vpop.f32.mrb[0].mxu0
      %v1568 = vpop.f32.mrb[0].mxu0
      %v1569 = vadd.f32 0.0, %v1568
      %v1570 = vpop.f32.mrb[0].mxu0
      %1571 = vmatprep.mubr.bf16.mxu0 0
      %1572 = vmatmul.mubr.bf16.gmra.mrb[0].mxu0 %v1488
      %v1573 = vpop.f32.mrb[0].mxu0
      %v1574 = vadd.f32 0.0, %v1573
      %v1575 = vpop.f32.mrb[0].mxu0
      %v1576 = vpop.f32.mrb[0].mxu0
      %v1577 = vadd.f32 0.0, %v1576
      %v1578 = vpop.f32.mrb[0].mxu0
      %1579 = vmatprep.mubr.bf16.mxu0 0
      %1580 = vmatmul.mubr.bf16.gmra.mrb[0].mxu0 %v1491
      %v1581 = vpop.f32.mrb[0].mxu0
      %v1582 = vadd.f32 0.0, %v1581
      %v1583 = vpop.f32.mrb[0].mxu0
      %v1584 = vpop.f32.mrb[0].mxu0
      %v1585 = vadd.f32 0.0, %v1584
      %v1586 = vpop.f32.mrb[0].mxu0
      %1587 = vmatprep.mubr.bf16.mxu0 0
      %1588 = vmatmul.mubr.bf16.gmra.mrb[0].mxu0 %v1494
      %v1589 = vpop.f32.mrb[0].mxu0
      %v1590 = vadd.f32 0.0, %v1589
      %v1591 = vpop.f32.mrb[0].mxu0
      %v1592 = vpop.f32.mrb[0].mxu0
      %v1593 = vadd.f32 0.0, %v1592
      %v1594 = vpop.f32.mrb[0].mxu0
      %1595 = vdwg.mxu0
      %v1596 = vadd.f32 %v1393, %v1534
      %v1597 = vadd.f32 %v1396, %v1537
      %v1598 = vadd.f32 %v1401, %v1542
      %v1599 = vadd.f32 %v1404, %v1545
      %v1600 = vadd.f32 %v1409, %v1550
      %v1601 = vadd.f32 %v1412, %v1553
      %v1602 = vadd.f32 %v1417, %v1558
      %v1603 = vadd.f32 %v1420, %v1561
      %v1604 = vadd.f32 %v1425, %v1566
      %v1605 = vadd.f32 %v1428, %v1569
      %v1606 = vadd.f32 %v1433, %v1574
      %v1607 = vadd.f32 %v1436, %v1577
      %v1608 = vadd.f32 %v1441, %v1582
      %v1609 = vadd.f32 %v1444, %v1585
      %v1610 = vadd.f32 %v1449, %v1590
      %v1611 = vadd.f32 %v1452, %v1593
      %v1612 = vadd.f32 %v1596, %v1597
      %v1613 = vadd.f32 %v1612, %v1598
      %v1614 = vadd.f32 %v1613, %v1599
      %v1615 = vadd.f32 %v1614, %v1600
      %v1616 = vadd.f32 %v1615, %v1601
      %v1617 = vadd.f32 %v1616, %v1602
      %v1618 = vadd.f32 %v1617, %v1603
      %v1619 = vadd.f32 %v1618, %v1604
      %v1620 = vadd.f32 %v1619, %v1605
      %v1621 = vadd.f32 %v1620, %v1606
      %v1622 = vadd.f32 %v1621, %v1607
      %v1623 = vadd.f32 %v1622, %v1608
      %v1624 = vadd.f32 %v1623, %v1609
      %v1625 = vadd.f32 %v1624, %v1610
      %v1626 = vadd.f32 %v1625, %v1611
      %v1627 = vrot.slane %v1626, 4
      %v1628 = vadd.f32 %v1626, %v1627
      %v1629 = vrot.slane %v1628, 2
      %v1630 = vadd.f32 %v1628, %v1629
      %v1631 = vrot.slane %v1630, 1
      %v1632 = vadd.f32 %v1630, %v1631
      %1633 = vst [vmem:[%s449] sm:$0x1] %v1632
      %v1634 = vmul.f32 %v1596, %v1596
      %v1635 = vmul.f32 %v1597, %v1597
      %v1636 = vmul.f32 %v1598, %v1598
      %v1637 = vmul.f32 %v1599, %v1599
      %v1638 = vmul.f32 %v1600, %v1600
      %v1639 = vmul.f32 %v1601, %v1601
      %v1640 = vmul.f32 %v1602, %v1602
      %v1641 = vmul.f32 %v1603, %v1603
      %v1642 = vmul.f32 %v1604, %v1604
      %v1643 = vmul.f32 %v1605, %v1605
      %v1644 = vmul.f32 %v1606, %v1606
      %v1645 = vmul.f32 %v1607, %v1607
      %v1646 = vmul.f32 %v1608, %v1608
      %v1647 = vmul.f32 %v1609, %v1609
      %v1648 = vmul.f32 %v1610, %v1610
      %v1649 = vmul.f32 %v1611, %v1611
      %v1650 = vadd.f32 %v1634, %v1635
      %v1651 = vadd.f32 %v1650, %v1636
      %v1652 = vadd.f32 %v1651, %v1637
      %v1653 = vadd.f32 %v1652, %v1638
      %v1654 = vadd.f32 %v1653, %v1639
      %v1655 = vadd.f32 %v1654, %v1640
      %v1656 = vadd.f32 %v1655, %v1641
      %v1657 = vadd.f32 %v1656, %v1642
      %v1658 = vadd.f32 %v1657, %v1643
      %v1659 = vadd.f32 %v1658, %v1644
      %v1660 = vadd.f32 %v1659, %v1645
      %v1661 = vadd.f32 %v1660, %v1646
      %v1662 = vadd.f32 %v1661, %v1647
      %v1663 = vadd.f32 %v1662, %v1648
      %v1664 = vadd.f32 %v1663, %v1649
      %v1665 = vrot.slane %v1664, 4
      %v1666 = vadd.f32 %v1664, %v1665
      %v1667 = vrot.slane %v1666, 2
      %v1668 = vadd.f32 %v1666, %v1667
      %v1669 = vrot.slane %v1668, 1
      %v1670 = vadd.f32 %v1668, %v1669
      %1671 = vst [vmem:[%s456] sm:$0x1] %v1670
      %v1672 = vpack.c.bf16 %v1597, %v1596
      %v1673 = vpack.c.bf16 %v1599, %v1598
      %v1674 = vpack.c.bf16 %v1601, %v1600
      %v1675 = vpack.c.bf16 %v1603, %v1602
      %v1676 = vpack.c.bf16 %v1605, %v1604
      %v1677 = vpack.c.bf16 %v1607, %v1606
      %v1678 = vpack.c.bf16 %v1609, %v1608
      %v1679 = vpack.c.bf16 %v1611, %v1610
      %v1688 = vunpack.c.l.b16 %v1672
      %v1689 = vunpack.c.h.b16 %v1672
      %v1690 = vunpack.c.l.b16 %v1673
      %v1691 = vunpack.c.h.b16 %v1673
      %v1692 = vunpack.c.l.b16 %v1674
      %v1693 = vunpack.c.h.b16 %v1674
      %v1694 = vunpack.c.l.b16 %v1675
      %v1695 = vunpack.c.h.b16 %v1675
      %v1696 = vunpack.c.l.b16 %v1676
      %v1697 = vunpack.c.h.b16 %v1676
      %v1698 = vunpack.c.l.b16 %v1677
      %v1699 = vunpack.c.h.b16 %v1677
      %v1700 = vunpack.c.l.b16 %v1678
      %v1701 = vunpack.c.h.b16 %v1678
      %v1702 = vunpack.c.l.b16 %v1679
      %v1703 = vunpack.c.h.b16 %v1679
      %v1704 = vpack.c.b16 %v1688, %v1688
      %v1705 = vpack.c.b16 %v1689, %v1689
      %v1706 = vpack.c.b16 %v1690, %v1690
      %v1707 = vpack.c.b16 %v1691, %v1691
      %v1708 = vpack.c.b16 %v1692, %v1692
      %v1709 = vpack.c.b16 %v1693, %v1693
      %v1710 = vpack.c.b16 %v1694, %v1694
      %v1711 = vpack.c.b16 %v1695, %v1695
      %v1712 = vpack.c.b16 %v1696, %v1696
      %v1713 = vpack.c.b16 %v1697, %v1697
      %v1714 = vpack.c.b16 %v1698, %v1698
      %v1715 = vpack.c.b16 %v1699, %v1699
      %v1716 = vpack.c.b16 %v1700, %v1700
      %v1717 = vpack.c.b16 %v1701, %v1701
      %v1718 = vpack.c.b16 %v1702, %v1702
      %v1719 = vpack.c.b16 %v1703, %v1703
      %1736 = vst [vmem:[%s441] sm:$0xf] %v1704
      %1737 = vst [vmem:[%s441 + $0x4] sm:$0xf] %v1705
      %1738 = vst [vmem:[%s441 + $0x8] sm:$0xf] %v1706
      %1739 = vst [vmem:[%s441 + $0xc] sm:$0xf] %v1707
      %1740 = vst [vmem:[%s441 + $0x10] sm:$0xf] %v1708
      %1741 = vst [vmem:[%s441 + $0x14] sm:$0xf] %v1709
      %1742 = vst [vmem:[%s441 + $0x18] sm:$0xf] %v1710
      %1743 = vst [vmem:[%s441 + $0x1c] sm:$0xf] %v1711
      %1744 = vst [vmem:[%s441 + $0x20] sm:$0xf] %v1712
      %1745 = vst [vmem:[%s441 + $0x24] sm:$0xf] %v1713
      %1746 = vst [vmem:[%s441 + $0x28] sm:$0xf] %v1714
      %1747 = vst [vmem:[%s441 + $0x2c] sm:$0xf] %v1715
      %1748 = vst [vmem:[%s441 + $0x30] sm:$0xf] %v1716
      %1749 = vst [vmem:[%s441 + $0x34] sm:$0xf] %v1717
      %1750 = vst [vmem:[%s441 + $0x38] sm:$0xf] %v1718
      %1751 = vst [vmem:[%s441 + $0x3c] sm:$0xf] %v1719
      %s1752 = smul.u32 8, %s23
      %p1753 = scmp.lt.s32.totalorder %s22, 1
      %s1754 = scalar_select %p1753, %s22, 1
      %p1755 = scmp.lt.s32.totalorder %s1752, 15
      %s1756 = scalar_select %p1755, %s1752, 15
      %s1757 = smul.addr %s1756, 2
      %s1758 = smul.addr %s1754, 32
      %s1759 = sadd.s32 %s1757, %s1758
      %s1760 = smul.addr %s1759, 4
      %s1761 = scalar_lea.vmem %s4, %s1760
      %p1762 = scmp.lt.s32.totalorder %s22, 1
      %s1763 = scalar_select %p1762, %s22, 1
      %p1764 = scmp.lt.s32.totalorder %s23, 1
      %s1765 = scalar_select %p1764, %s23, 1
      %s1766 = smul.addr %s1763, 2
      %s1767 = sadd.s32 %s1765, %s1766
      %s1768 = scalar_lea.vmem %s5, %s1767
      %p1769 = scmp.lt.s32.totalorder %s22, 1
      %s1770 = scalar_select %p1769, %s22, 1
      %p1771 = scmp.lt.s32.totalorder %s23, 1
      %s1772 = scalar_select %p1771, %s23, 1
      %s1773 = smul.addr %s1770, 2
      %s1774 = sadd.s32 %s1772, %s1773
      %s1775 = scalar_lea.vmem %s6, %s1774
      // Predicated region
      $region37: #{double_conv_forward.3} parent=35 // pred_check
        %p1776 = pneg %p171
      $region38: #{double_conv_forward.3} parent=35 // pred_check_branch
        %1778 = sbr.rel (%p1776) target = $region40
      $region39: #{double_conv_forward.3} parent=35 // pred_region
        %s1779 = smul.u32 8, %s23
      $region40: #{double_conv_forward.3} parent=35 // pred_fallthru
        _
      // Predicated region
      $region41: #{double_conv_forward.3} parent=35 // pred_check
        %p1780 = pneg %p199
      $region42: #{double_conv_forward.3} parent=35 // pred_check_branch
        %1782 = sbr.rel (%p1780) target = $region44
      $region43: #{double_conv_forward.3} parent=35 // pred_region
        _
      $region44: #{double_conv_forward.3} parent=35 // pred_fallthru
        _
      // Predicated region
      $region45: #{double_conv_forward.3} parent=35 // pred_check
        %p1783 = pneg %p227
      $region46: #{double_conv_forward.3} parent=35 // pred_check_branch
        %1785 = sbr.rel (%p1783) target = $region48
      $region47: #{double_conv_forward.3} parent=35 // pred_region
        _
      $region48: #{double_conv_forward.3} parent=35 // pred_fallthru
        _
    $region36: #{double_conv_forward.3} parent=5 // pred_fallthru
      _
    %p1786 = scmp.le.s32.totalorder 2, %s13
    // Predicated region
    $region49: #{double_conv_forward.3} parent=5 // pred_check
      %p1787 = pneg %p1786
    $region50: #{double_conv_forward.3} parent=5 // pred_check_branch
      %1789 = sbr.rel (%p1787) target = $region52
    $region51: #{double_conv_forward.3} parent=5 // pred_region
      %s1790 = ssub.s32 %s13, 2
      // Predicated region
      $region53: #{double_conv_forward.3} parent=51 // pred_check
        %p1791 = pneg %p177
      $region54: #{double_conv_forward.3} parent=51 // pred_check_branch
        %1793 = sbr.rel (%p1791) target = $region56
      $region55: #{double_conv_forward.3} parent=51 // pred_region
        %s1794 = smul.u32 8, %s25
        %p1795 = scmp.lt.s32.totalorder %s24, 1
        %s1796 = scalar_select %p1795, %s24, 1
        %p1797 = scmp.lt.s32.totalorder %s1794, 15
        %s1798 = scalar_select %p1797, %s1794, 15
        %s1799 = smul.addr %s1798, 2
        %s1800 = smul.addr %s1796, 32
        %s1801 = sadd.s32 %s1799, %s1800
        %s1802 = smul.addr %s1801, 4
        %s1803 = scalar_lea.vmem %s4, %s1802
      $region56: #{double_conv_forward.3} parent=51 // pred_fallthru
        _
      // Predicated region
      $region57: #{double_conv_forward.3} parent=51 // pred_check
        %p1804 = pneg %p205
      $region58: #{double_conv_forward.3} parent=51 // pred_check_branch
        %1806 = sbr.rel (%p1804) target = $region60
      $region59: #{double_conv_forward.3} parent=51 // pred_region
        %p1807 = scmp.lt.s32.totalorder %s24, 1
        %s1808 = scalar_select %p1807, %s24, 1
        %p1809 = scmp.lt.s32.totalorder %s25, 1
        %s1810 = scalar_select %p1809, %s25, 1
        %s1811 = smul.addr %s1808, 2
        %s1812 = sadd.s32 %s1810, %s1811
        %s1813 = scalar_lea.vmem %s5, %s1812
      $region60: #{double_conv_forward.3} parent=51 // pred_fallthru
        _
      // Predicated region
      $region61: #{double_conv_forward.3} parent=51 // pred_check
        %p1814 = pneg %p233
      $region62: #{double_conv_forward.3} parent=51 // pred_check_branch
        %1816 = sbr.rel (%p1814) target = $region64
      $region63: #{double_conv_forward.3} parent=51 // pred_region
        %p1817 = scmp.lt.s32.totalorder %s24, 1
        %s1818 = scalar_select %p1817, %s24, 1
        %p1819 = scmp.lt.s32.totalorder %s25, 1
        %s1820 = scalar_select %p1819, %s25, 1
        %s1821 = smul.addr %s1818, 2
        %s1822 = sadd.s32 %s1820, %s1821
        %s1823 = scalar_lea.vmem %s6, %s1822
      $region64: #{double_conv_forward.3} parent=51 // pred_fallthru
        _
    $region52: #{double_conv_forward.3} parent=5 // pred_fallthru
      _
  $region6: #{double_conv_forward.3} parent=0 // loop_footer
    %s17 = sadd.s32 1, %s13
  $region7: #{double_conv_forward.3} parent=0 // loop_footer_branch
    %12 = sbr.rel target = $region3
  $region8: #{double_conv_forward.3} parent=0 // loop_exit
    _

// kernel: double_conv_forward.4
$region0: #{double_conv_forward.4}
  #allocation0 [shape = 'u32[]', space=smem, size = 0x4, offset = 0x4, fixed_abs, tag = 'smem constant byte address 0x4 - core index']
  #allocation1 [shape = 'u32[144,128]{1,0:T(1,128)}', space=vmem, size = 0x12000, scoped, tag = 'internal scratch']
  #allocation2 [shape = 'bf16[10,32,128]{2,1,0:T(16,128)(2,1)}', space=vmem, size = 0x14000, scoped, tag = 'scratch operand']
  #allocation3 [shape = 'bf16[10,16,384]{2,1,0:T(16,128)(2,1)}', space=vmem, size = 0x1e000, scoped, tag = 'scratch operand']
  %s0 = inlined_call_operand.vmem [shape: bf16[2,16,16,128], index: 0, kind: input, shape index: {}, may-alias: {0,1,2}]
  %s1 = inlined_call_operand.vmem [shape: bf16[2,16,16,128], index: 1, kind: input, shape index: {}, may-alias: {0,1,2}]
  %s2 = inlined_call_operand.vmem [shape: bf16[2,16,16,128], index: 2, kind: input, shape index: {}, may-alias: {0,1,2}]
  %s3 = inlined_call_operand.vmem [shape: f32[1,128], index: 3, kind: input, shape index: {}]
  %s4 = inlined_call_operand.vmem [shape: f32[1,128], index: 4, kind: input, shape index: {}]
  %s5 = inlined_call_operand.vmem [shape: bf16[3,384,128], index: 5, kind: input, shape index: {}]
  %s6 = inlined_call_operand.vmem [shape: bf16[2,16,16,128], index: 6, kind: output, shape index: {0}]
  %s7 = inlined_call_operand.vmem [shape: f32[2,2,1,128], index: 7, kind: output, shape index: {1}]
  %s8 = inlined_call_operand.vmem [shape: f32[2,2,1,128], index: 8, kind: output, shape index: {2}]
  %9 = xla_tuple %s6, %s7, %s8
  %s10 = sld [smem:[#allocation0]]
  $region73: #{double_conv_forward.4} parent=0
    _
  %s12 = ssub.s32 1, %s10
  %s13 = scalar_select 0, %s12, %s10
  loop: start=0, step=1, limit=6
  $region2: #{double_conv_forward.4} parent=0 // loop_pre_header
    _
  $region3: #{double_conv_forward.4} parent=0 // loop_header
    %s15 = sphi 0, %s19
    %p16 = scmp.ge.s32.totalorder %s15, 6
    %s22 = sphi 0, %s34
    %s23 = sphi 0, %s30
    %s24 = sphi 0, %s22
    %s25 = sphi 0, %s23
    %s26 = sphi 0, %s24
    %s27 = sphi 0, %s25
    %s39 = sphi 0, %s41
    %s42 = sphi 0, %s39
    %s43 = sphi 0, %s42
    %s59 = sphi 0, %s43
    %s75 = sphi 0, %s77
    %s78 = sphi 0, %s75
    %s79 = sphi 0, %s78
    %s95 = sphi 0, %s79
    %s111 = sphi 0, %s113
    %s114 = sphi 0, %s111
    %s115 = sphi 0, %s114
    %s131 = sphi 0, %s115
    %s135 = sphi 0, %s135
    %s137 = sphi 0, %s135
    %s138 = sphi 0, %s137
    %s152 = sphi 0, %s138
    %s156 = sphi 0, %s156
    %s158 = sphi 0, %s156
    %s159 = sphi 0, %s158
    %s173 = sphi 0, %s159
    %s177 = sphi 0, %s177
    %s179 = sphi 0, %s177
    %s180 = sphi 0, %s179
    %s194 = sphi 0, %s180
    %s202 = sphi 0, %s204
    %s205 = sphi 0, %s202
    %s206 = sphi 0, %s205
    %s222 = sphi 0, %s206
    %s230 = sphi 0, %s232
    %s233 = sphi 0, %s230
    %s234 = sphi 0, %s233
    %s250 = sphi 0, %s234
    %s258 = sphi 0, %s260
    %s261 = sphi 0, %s258
    %s262 = sphi 0, %s261
    %s278 = sphi 0, %s262
  $region4: #{double_conv_forward.4} parent=0 // loop_header_branch
    %18 = sbr.rel (%p16) target = $region8
  $region5: #{double_conv_forward.4} parent=0 // loop_body
    %s20 = ssub.s32 %s15, 1
    %s21 = ssub.s32 %s15, 2
    %s28 = sadd.s32 1, %s23
    %p29 = scmp.ge.s32.totalorder %s28, 2
    %s30 = scalar_select %p29, 0, %s28
    %s31 = sadd.s32 1, %s22
    %s32 = scalar_select %p29, %s31, %s22
    %p33 = scmp.ge.s32.totalorder %s32, 2
    %s34 = scalar_select %p33, 0, %s32
    %s35 = ssub.s32 %s22, %s34
    %s36 = ssub.s32 %s23, %s30
    %s37 = sor.u32 %s35, %s36
    %p38 = scmp.eq.s32.totalorder %s37, 0
    %s40 = sadd.s32 %s39, 1
    %s41 = scalar_select %p38, %s39, %s40
    %p44 = pneg %p38
    %p45 = scmp.eq.s32.totalorder %s15, 3
    %p46 = por %p44, %p45
    %p47 = scmp.ne.s32.totalorder %s39, %s42
    %p48 = scmp.eq.s32.totalorder %s15, 0
    %p49 = por %p47, %p48
    %p50 = scmp.ne.s32.totalorder %s39, %s42
    %p51 = scmp.eq.s32.totalorder %s20, 3
    %p52 = por %p50, %p51
    %p53 = scmp.ne.s32.totalorder %s42, %s43
    %p54 = scmp.eq.s32.totalorder %s20, 0
    %p55 = por %p53, %p54
    %p56 = scmp.ne.s32.totalorder %s42, %s43
    %p57 = scmp.eq.s32.totalorder %s21, 3
    %p58 = por %p56, %p57
    %p60 = scmp.ne.s32.totalorder %s43, %s59
    %p61 = scmp.eq.s32.totalorder %s21, 0
    %p62 = por %p60, %p61
    %s63 = smul.u32 %s23, 8
    %s64 = ssub.s32 %s63, 1
    %p65 = scmp.gt.s32.totalorder %s64, 0
    %s66 = scalar_select %p65, %s64, 0
    %s67 = smul.u32 %s30, 8
    %s68 = ssub.s32 %s67, 1
    %p69 = scmp.gt.s32.totalorder %s68, 0
    %s70 = scalar_select %p69, %s68, 0
    %s71 = ssub.s32 %s22, %s34
    %s72 = ssub.s32 %s66, %s70
    %s73 = sor.u32 %s71, %s72
    %p74 = scmp.eq.s32.totalorder %s73, 0
    %s76 = sadd.s32 %s75, 1
    %s77 = scalar_select %p74, %s75, %s76
    %p80 = pneg %p74
    %p81 = scmp.eq.s32.totalorder %s15, 3
    %p82 = por %p80, %p81
    %p83 = scmp.ne.s32.totalorder %s75, %s78
    %p84 = scmp.eq.s32.totalorder %s15, 0
    %p85 = por %p83, %p84
    %p86 = scmp.ne.s32.totalorder %s75, %s78
    %p87 = scmp.eq.s32.totalorder %s20, 3
    %p88 = por %p86, %p87
    %p89 = scmp.ne.s32.totalorder %s78, %s79
    %p90 = scmp.eq.s32.totalorder %s20, 0
    %p91 = por %p89, %p90
    %p92 = scmp.ne.s32.totalorder %s78, %s79
    %p93 = scmp.eq.s32.totalorder %s21, 3
    %p94 = por %p92, %p93
    %p96 = scmp.ne.s32.totalorder %s79, %s95
    %p97 = scmp.eq.s32.totalorder %s21, 0
    %p98 = por %p96, %p97
    %s99 = sadd.s32 %s23, 1
    %s100 = smul.u32 %s99, 8
    %p101 = scmp.lt.s32.totalorder %s100, 15
    %s102 = scalar_select %p101, %s100, 15
    %s103 = sadd.s32 %s30, 1
    %s104 = smul.u32 %s103, 8
    %p105 = scmp.lt.s32.totalorder %s104, 15
    %s106 = scalar_select %p105, %s104, 15
    %s107 = ssub.s32 %s22, %s34
    %s108 = ssub.s32 %s102, %s106
    %s109 = sor.u32 %s107, %s108
    %p110 = scmp.eq.s32.totalorder %s109, 0
    %s112 = sadd.s32 %s111, 1
    %s113 = scalar_select %p110, %s111, %s112
    %p116 = pneg %p110
    %p117 = scmp.eq.s32.totalorder %s15, 3
    %p118 = por %p116, %p117
    %p119 = scmp.ne.s32.totalorder %s111, %s114
    %p120 = scmp.eq.s32.totalorder %s15, 0
    %p121 = por %p119, %p120
    %p122 = scmp.ne.s32.totalorder %s111, %s114
    %p123 = scmp.eq.s32.totalorder %s20, 3
    %p124 = por %p122, %p123
    %p125 = scmp.ne.s32.totalorder %s114, %s115
    %p126 = scmp.eq.s32.totalorder %s20, 0
    %p127 = por %p125, %p126
    %p128 = scmp.ne.s32.totalorder %s114, %s115
    %p129 = scmp.eq.s32.totalorder %s21, 3
    %p130 = por %p128, %p129
    %p132 = scmp.ne.s32.totalorder %s115, %s131
    %p133 = scmp.eq.s32.totalorder %s21, 0
    %p134 = por %p132, %p133
    %s136 = sadd.s32 %s135, 1
    %p139 = scmp.eq.s32.totalorder %s15, 3
    %p140 = scmp.ne.s32.totalorder %s135, %s137
    %p141 = scmp.eq.s32.totalorder %s15, 0
    %p142 = por %p140, %p141
    %p143 = scmp.ne.s32.totalorder %s135, %s137
    %p144 = scmp.eq.s32.totalorder %s20, 3
    %p145 = por %p143, %p144
    %p146 = scmp.ne.s32.totalorder %s137, %s138
    %p147 = scmp.eq.s32.totalorder %s20, 0
    %p148 = por %p146, %p147
    %p149 = scmp.ne.s32.totalorder %s137, %s138
    %p150 = scmp.eq.s32.totalorder %s21, 3
    %p151 = por %p149, %p150
    %p153 = scmp.ne.s32.totalorder %s138, %s152
    %p154 = scmp.eq.s32.totalorder %s21, 0
    %p155 = por %p153, %p154
    %s157 = sadd.s32 %s156, 1
    %p160 = scmp.eq.s32.totalorder %s15, 3
    %p161 = scmp.ne.s32.totalorder %s156, %s158
    %p162 = scmp.eq.s32.totalorder %s15, 0
    %p163 = por %p161, %p162
    %p164 = scmp.ne.s32.totalorder %s156, %s158
    %p165 = scmp.eq.s32.totalorder %s20, 3
    %p166 = por %p164, %p165
    %p167 = scmp.ne.s32.totalorder %s158, %s159
    %p168 = scmp.eq.s32.totalorder %s20, 0
    %p169 = por %p167, %p168
    %p170 = scmp.ne.s32.totalorder %s158, %s159
    %p171 = scmp.eq.s32.totalorder %s21, 3
    %p172 = por %p170, %p171
    %p174 = scmp.ne.s32.totalorder %s159, %s173
    %p175 = scmp.eq.s32.totalorder %s21, 0
    %p176 = por %p174, %p175
    %s178 = sadd.s32 %s177, 1
    %p181 = scmp.eq.s32.totalorder %s15, 3
    %p182 = scmp.ne.s32.totalorder %s177, %s179
    %p183 = scmp.eq.s32.totalorder %s15, 0
    %p184 = por %p182, %p183
    %p185 = scmp.ne.s32.totalorder %s177, %s179
    %p186 = scmp.eq.s32.totalorder %s20, 3
    %p187 = por %p185, %p186
    %p188 = scmp.ne.s32.totalorder %s179, %s180
    %p189 = scmp.eq.s32.totalorder %s20, 0
    %p190 = por %p188, %p189
    %p191 = scmp.ne.s32.totalorder %s179, %s180
    %p192 = scmp.eq.s32.totalorder %s21, 3
    %p193 = por %p191, %p192
    %p195 = scmp.ne.s32.totalorder %s180, %s194
    %p196 = scmp.eq.s32.totalorder %s21, 0
    %p197 = por %p195, %p196
    %s198 = ssub.s32 %s22, %s34
    %s199 = ssub.s32 %s23, %s30
    %s200 = sor.u32 %s198, %s199
    %p201 = scmp.eq.s32.totalorder %s200, 0
    %s203 = sadd.s32 %s202, 1
    %s204 = scalar_select %p201, %s202, %s203
    %p207 = pneg %p201
    %p208 = scmp.eq.s32.totalorder %s15, 3
    %p209 = por %p207, %p208
    %p210 = scmp.ne.s32.totalorder %s202, %s205
    %p211 = scmp.eq.s32.totalorder %s15, 0
    %p212 = por %p210, %p211
    %p213 = scmp.ne.s32.totalorder %s202, %s205
    %p214 = scmp.eq.s32.totalorder %s20, 3
    %p215 = por %p213, %p214
    %p216 = scmp.ne.s32.totalorder %s205, %s206
    %p217 = scmp.eq.s32.totalorder %s20, 0
    %p218 = por %p216, %p217
    %p219 = scmp.ne.s32.totalorder %s205, %s206
    %p220 = scmp.eq.s32.totalorder %s21, 3
    %p221 = por %p219, %p220
    %p223 = scmp.ne.s32.totalorder %s206, %s222
    %p224 = scmp.eq.s32.totalorder %s21, 0
    %p225 = por %p223, %p224
    %s226 = ssub.s32 %s22, %s34
    %s227 = ssub.s32 %s23, %s30
    %s228 = sor.u32 %s226, %s227
    %p229 = scmp.eq.s32.totalorder %s228, 0
    %s231 = sadd.s32 %s230, 1
    %s232 = scalar_select %p229, %s230, %s231
    %p235 = pneg %p229
    %p236 = scmp.eq.s32.totalorder %s15, 3
    %p237 = por %p235, %p236
    %p238 = scmp.ne.s32.totalorder %s230, %s233
    %p239 = scmp.eq.s32.totalorder %s15, 0
    %p240 = por %p238, %p239
    %p241 = scmp.ne.s32.totalorder %s230, %s233
    %p242 = scmp.eq.s32.totalorder %s20, 3
    %p243 = por %p241, %p242
    %p244 = scmp.ne.s32.totalorder %s233, %s234
    %p245 = scmp.eq.s32.totalorder %s20, 0
    %p246 = por %p244, %p245
    %p247 = scmp.ne.s32.totalorder %s233, %s234
    %p248 = scmp.eq.s32.totalorder %s21, 3
    %p249 = por %p247, %p248
    %p251 = scmp.ne.s32.totalorder %s234, %s250
    %p252 = scmp.eq.s32.totalorder %s21, 0
    %p253 = por %p251, %p252
    %s254 = ssub.s32 %s22, %s34
    %s255 = ssub.s32 %s23, %s30
    %s256 = sor.u32 %s254, %s255
    %p257 = scmp.eq.s32.totalorder %s256, 0
    %s259 = sadd.s32 %s258, 1
    %s260 = scalar_select %p257, %s258, %s259
    %p263 = pneg %p257
    %p264 = scmp.eq.s32.totalorder %s15, 3
    %p265 = por %p263, %p264
    %p266 = scmp.ne.s32.totalorder %s258, %s261
    %p267 = scmp.eq.s32.totalorder %s15, 0
    %p268 = por %p266, %p267
    %p269 = scmp.ne.s32.totalorder %s258, %s261
    %p270 = scmp.eq.s32.totalorder %s20, 3
    %p271 = por %p269, %p270
    %p272 = scmp.ne.s32.totalorder %s261, %s262
    %p273 = scmp.eq.s32.totalorder %s20, 0
    %p274 = por %p272, %p273
    %p275 = scmp.ne.s32.totalorder %s261, %s262
    %p276 = scmp.eq.s32.totalorder %s21, 3
    %p277 = por %p275, %p276
    %p279 = scmp.ne.s32.totalorder %s262, %s278
    %p280 = scmp.eq.s32.totalorder %s21, 0
    %p281 = por %p279, %p280
    %p282 = scmp.le.s32.totalorder 1, %s15
    %p283 = scmp.lt.s32.totalorder %s15, 5
    %p284 = pnand %p282, %p283
    %p285 = pneg %p284
    // Predicated region
    $region9: #{double_conv_forward.4} parent=5 // pred_check
      _
    $region10: #{double_conv_forward.4} parent=5 // pred_check_branch
      %287 = sbr.rel (%p284) target = $region12
    $region11: #{double_conv_forward.4} parent=5 // pred_region
      %s288 = ssub.s32 %s15, 1
      // Predicated region
      $region13: #{double_conv_forward.4} parent=11 // pred_check
        %p289 = pneg %p148
      $region14: #{double_conv_forward.4} parent=11 // pred_check_branch
        %291 = sbr.rel (%p289) target = $region16
      $region15: #{double_conv_forward.4} parent=11 // pred_region
        _
      $region16: #{double_conv_forward.4} parent=11 // pred_fallthru
        _
      // Predicated region
      $region17: #{double_conv_forward.4} parent=11 // pred_check
        %p292 = pneg %p169
      $region18: #{double_conv_forward.4} parent=11 // pred_check_branch
        %294 = sbr.rel (%p292) target = $region20
      $region19: #{double_conv_forward.4} parent=11 // pred_region
        _
      $region20: #{double_conv_forward.4} parent=11 // pred_fallthru
        _
      // Predicated region
      $region21: #{double_conv_forward.4} parent=11 // pred_check
        %p295 = pneg %p190
      $region22: #{double_conv_forward.4} parent=11 // pred_check_branch
        %297 = sbr.rel (%p295) target = $region24
      $region23: #{double_conv_forward.4} parent=11 // pred_region
        _
      $region24: #{double_conv_forward.4} parent=11 // pred_fallthru
        _
    $region12: #{double_conv_forward.4} parent=5 // pred_fallthru
      _
    %p298 = scmp.lt.s32.totalorder %s15, 4
    // Predicated region
    $region25: #{double_conv_forward.4} parent=5 // pred_check
      %p299 = pneg %p298
    $region26: #{double_conv_forward.4} parent=5 // pred_check_branch
      %301 = sbr.rel (%p299) target = $region28
    $region27: #{double_conv_forward.4} parent=5 // pred_region
      // Predicated region
      $region29: #{double_conv_forward.4} parent=27 // pred_check
        %p302 = pneg %p49
      $region30: #{double_conv_forward.4} parent=27 // pred_check_branch
        %304 = sbr.rel (%p302) target = $region32
      $region31: #{double_conv_forward.4} parent=27 // pred_region
        %s305 = smul.u32 8, %s23
        %p306 = scmp.lt.s32.totalorder %s22, 1
        %s307 = scalar_select %p306, %s22, 1
        %p308 = scmp.lt.s32.totalorder %s305, 15
        %s309 = scalar_select %p308, %s305, 15
        %s310 = smul.addr %s309, 2
        %s311 = smul.addr %s307, 32
        %s312 = sadd.s32 %s310, %s311
        %s313 = smul.addr %s312, 4
        %s314 = scalar_lea.vmem %s0, %s313
        %s315 = smul.u32 8, %s23
      $region32: #{double_conv_forward.4} parent=27 // pred_fallthru
        _
      // Predicated region
      $region33: #{double_conv_forward.4} parent=27 // pred_check
        %p316 = pneg %p85
      $region34: #{double_conv_forward.4} parent=27 // pred_check_branch
        %318 = sbr.rel (%p316) target = $region36
      $region35: #{double_conv_forward.4} parent=27 // pred_region
        %s319 = smul.u32 %s23, 8
        %s320 = ssub.s32 %s319, 1
        %p321 = scmp.gt.s32.totalorder %s320, 0
        %s322 = scalar_select %p321, %s320, 0
        %p323 = scmp.lt.s32.totalorder %s22, 1
        %s324 = scalar_select %p323, %s22, 1
        %p325 = scmp.lt.s32.totalorder %s322, 15
        %s326 = scalar_select %p325, %s322, 15
        %s327 = smul.addr %s326, 2
        %s328 = smul.addr %s324, 32
        %s329 = sadd.s32 %s327, %s328
        %s330 = smul.addr %s329, 4
        %s331 = scalar_lea.vmem %s1, %s330
        %s332 = smul.u32 %s23, 8
        %s333 = ssub.s32 %s332, 1
        %p334 = scmp.gt.s32.totalorder %s333, 0
        %s335 = scalar_select %p334, %s333, 0
      $region36: #{double_conv_forward.4} parent=27 // pred_fallthru
        _
      // Predicated region
      $region37: #{double_conv_forward.4} parent=27 // pred_check
        %p336 = pneg %p121
      $region38: #{double_conv_forward.4} parent=27 // pred_check_branch
        %338 = sbr.rel (%p336) target = $region40
      $region39: #{double_conv_forward.4} parent=27 // pred_region
        %s339 = sadd.s32 %s23, 1
        %s340 = smul.u32 %s339, 8
        %p341 = scmp.lt.s32.totalorder %s340, 15
        %s342 = scalar_select %p341, %s340, 15
        %p343 = scmp.lt.s32.totalorder %s22, 1
        %s344 = scalar_select %p343, %s22, 1
        %p345 = scmp.lt.s32.totalorder %s342, 15
        %s346 = scalar_select %p345, %s342, 15
        %s347 = smul.addr %s346, 2
        %s348 = smul.addr %s344, 32
        %s349 = sadd.s32 %s347, %s348
        %s350 = smul.addr %s349, 4
        %s351 = scalar_lea.vmem %s2, %s350
        %s352 = sadd.s32 %s23, 1
        %s353 = smul.u32 %s352, 8
        %p354 = scmp.lt.s32.totalorder %s353, 15
        %s355 = scalar_select %p354, %s353, 15
      $region40: #{double_conv_forward.4} parent=27 // pred_fallthru
        _
    $region28: #{double_conv_forward.4} parent=5 // pred_fallthru
      _
    %p356 = scmp.le.s32.totalorder 1, %s15
    %p357 = scmp.lt.s32.totalorder %s15, 5
    %p358 = pnand %p356, %p357
    %p359 = pneg %p358
    // Predicated region
    $region41: #{double_conv_forward.4} parent=5 // pred_check
      _
    $region42: #{double_conv_forward.4} parent=5 // pred_check_branch
      %361 = sbr.rel (%p358) target = $region44
    $region43: #{double_conv_forward.4} parent=5 // pred_region
      %s362 = ssub.s32 %s15, 1
      %s363 = smul.u32 8, %s25
      %p364 = scmp.lt.s32.totalorder %s24, 1
      %s365 = scalar_select %p364, %s24, 1
      %p366 = scmp.lt.s32.totalorder %s363, 15
      %s367 = scalar_select %p366, %s363, 15
      %s368 = smul.addr %s367, 2
      %s369 = smul.addr %s365, 32
      %s370 = sadd.s32 %s368, %s369
      %s371 = smul.addr %s370, 4
      %s372 = scalar_lea.vmem %s0, %s371
      %p373 = pneg %p55
      %p374 = pneg %p52
      %s375 = smul.u32 %s25, 8
      %s376 = ssub.s32 %s375, 1
      %p377 = scmp.gt.s32.totalorder %s376, 0
      %s378 = scalar_select %p377, %s376, 0
      %p379 = scmp.lt.s32.totalorder %s24, 1
      %s380 = scalar_select %p379, %s24, 1
      %p381 = scmp.lt.s32.totalorder %s378, 15
      %s382 = scalar_select %p381, %s378, 15
      %s383 = smul.addr %s382, 2
      %s384 = smul.addr %s380, 32
      %s385 = sadd.s32 %s383, %s384
      %s386 = smul.addr %s385, 4
      %s387 = scalar_lea.vmem %s1, %s386
      %p388 = pneg %p91
      %p389 = pneg %p88
      %s390 = sadd.s32 %s25, 1
      %s391 = smul.u32 %s390, 8
      %p392 = scmp.lt.s32.totalorder %s391, 15
      %s393 = scalar_select %p392, %s391, 15
      %p394 = scmp.lt.s32.totalorder %s24, 1
      %s395 = scalar_select %p394, %s24, 1
      %p396 = scmp.lt.s32.totalorder %s393, 15
      %s397 = scalar_select %p396, %s393, 15
      %s398 = smul.addr %s397, 2
      %s399 = smul.addr %s395, 32
      %s400 = sadd.s32 %s398, %s399
      %s401 = smul.addr %s400, 4
      %s402 = scalar_lea.vmem %s2, %s401
      %p403 = pneg %p127
      %p404 = pneg %p124
      %p405 = pneg %p148
      %p406 = pneg %p145
      %p407 = pneg %p169
      %p408 = pneg %p166
      %p409 = pneg %p190
      %p410 = pneg %p187
      %p411 = pneg %p218
      %p412 = pneg %p215
      %s413 = smul.u32 8, %s25
      %p414 = scmp.lt.s32.totalorder %s24, 1
      %s415 = scalar_select %p414, %s24, 1
      %p416 = scmp.lt.s32.totalorder %s413, 15
      %s417 = scalar_select %p416, %s413, 15
      %s418 = smul.addr %s417, 2
      %s419 = smul.addr %s415, 32
      %s420 = sadd.s32 %s418, %s419
      %s421 = smul.addr %s420, 4
      %s422 = scalar_lea.vmem %s6, %s421
      %p423 = pneg %p246
      %p424 = pneg %p243
      %p425 = scmp.lt.s32.totalorder %s24, 1
      %s426 = scalar_select %p425, %s24, 1
      %p427 = scmp.lt.s32.totalorder %s25, 1
      %s428 = scalar_select %p427, %s25, 1
      %s429 = smul.addr %s426, 2
      %s430 = sadd.s32 %s428, %s429
      %s431 = scalar_lea.vmem %s7, %s430
      %p432 = pneg %p274
      %p433 = pneg %p271
      %p434 = scmp.lt.s32.totalorder %s24, 1
      %s435 = scalar_select %p434, %s24, 1
      %p436 = scmp.lt.s32.totalorder %s25, 1
      %s437 = scalar_select %p436, %s25, 1
      %s438 = smul.addr %s435, 2
      %s439 = sadd.s32 %s437, %s438
      %s440 = scalar_lea.vmem %s8, %s439
      %s441 = smul.u32 8, %s25
      %p442 = scmp.lt.s32.totalorder %s24, 1
      %s443 = scalar_select %p442, %s24, 1
      %p444 = scmp.lt.s32.totalorder %s441, 15
      %s445 = scalar_select %p444, %s441, 15
      %s446 = smul.addr %s445, 2
      %s447 = smul.addr %s443, 32
      %s448 = sadd.s32 %s446, %s447
      %s449 = smul.addr %s448, 4
      %s450 = scalar_lea.vmem %s0, %s449
      %s451 = smul.u32 8, %s25
      %s452 = smul.u32 %s25, 8
      %s453 = ssub.s32 %s452, 1
      %p454 = scmp.gt.s32.totalorder %s453, 0
      %s455 = scalar_select %p454, %s453, 0
      %p456 = scmp.lt.s32.totalorder %s24, 1
      %s457 = scalar_select %p456, %s24, 1
      %p458 = scmp.lt.s32.totalorder %s455, 15
      %s459 = scalar_select %p458, %s455, 15
      %s460 = smul.addr %s459, 2
      %s461 = smul.addr %s457, 32
      %s462 = sadd.s32 %s460, %s461
      %s463 = smul.addr %s462, 4
      %s464 = scalar_lea.vmem %s1, %s463
      %s465 = smul.u32 %s25, 8
      %s466 = ssub.s32 %s465, 1
      %p467 = scmp.gt.s32.totalorder %s466, 0
      %s468 = scalar_select %p467, %s466, 0
      %s469 = sadd.s32 %s25, 1
      %s470 = smul.u32 %s469, 8
      %p471 = scmp.lt.s32.totalorder %s470, 15
      %s472 = scalar_select %p471, %s470, 15
      %p473 = scmp.lt.s32.totalorder %s24, 1
      %s474 = scalar_select %p473, %s24, 1
      %p475 = scmp.lt.s32.totalorder %s472, 15
      %s476 = scalar_select %p475, %s472, 15
      %s477 = smul.addr %s476, 2
      %s478 = smul.addr %s474, 32
      %s479 = sadd.s32 %s477, %s478
      %s480 = smul.addr %s479, 4
      %s481 = scalar_lea.vmem %s2, %s480
      %s482 = sadd.s32 %s25, 1
      %s483 = smul.u32 %s482, 8
      %p484 = scmp.lt.s32.totalorder %s483, 15
      %s485 = scalar_select %p484, %s483, 15
      %s486 = smul.u32 8, %s25
      %p487 = scmp.lt.s32.totalorder %s24, 1
      %s488 = scalar_select %p487, %s24, 1
      %p489 = scmp.lt.s32.totalorder %s486, 15
      %s490 = scalar_select %p489, %s486, 15
      %s491 = smul.addr %s490, 2
      %s492 = smul.addr %s488, 32
      %s493 = sadd.s32 %s491, %s492
      %s494 = smul.addr %s493, 4
      %s495 = scalar_lea.vmem %s6, %s494
      %s496 = smul.u32 8, %s25
      %p497 = scmp.lt.s32.totalorder %s24, 1
      %s498 = scalar_select %p497, %s24, 1
      %p499 = scmp.lt.s32.totalorder %s25, 1
      %s500 = scalar_select %p499, %s25, 1
      %s501 = smul.addr %s498, 2
      %s502 = sadd.s32 %s500, %s501
      %s503 = scalar_lea.vmem %s7, %s502
      %p504 = scmp.lt.s32.totalorder %s24, 1
      %s505 = scalar_select %p504, %s24, 1
      %p506 = scmp.lt.s32.totalorder %s25, 1
      %s507 = scalar_select %p506, %s25, 1
      %s508 = smul.addr %s505, 2
      %s509 = sadd.s32 %s507, %s508
      %s510 = scalar_lea.vmem %s8, %s509
      %vm512 = vcmask 1043459
      %vm513 = vsmask.f32 7950
      %vm514 = vmand %vm512, %vm513
      %v515 = vld [vmem:[#allocation2] sm:$0x8]
      %v516 = vsel %vm514, 0, %v515
      %517 = vst [vmem:[#allocation2] sm:$0x8] %v516
      %v518 = vld [vmem:[#allocation2 + $0x10] sm:$0x8]
      %v519 = vsel %vm514, 0, %v518
      %520 = vst [vmem:[#allocation2 + $0x10] sm:$0x8] %v519
      %v521 = vld [vmem:[#allocation2 + $0x20] sm:$0x8]
      %v522 = vsel %vm514, 0, %v521
      %523 = vst [vmem:[#allocation2 + $0x20] sm:$0x8] %v522
      %v524 = vld [vmem:[#allocation2 + $0x30] sm:$0x8]
      %v525 = vsel %vm514, 0, %v524
      %526 = vst [vmem:[#allocation2 + $0x30] sm:$0x8] %v525
      %v527 = vld [vmem:[#allocation2 + $0x40] sm:$0x8]
      %v528 = vsel %vm514, 0, %v527
      %529 = vst [vmem:[#allocation2 + $0x40] sm:$0x8] %v528
      %v530 = vld [vmem:[#allocation2 + $0x50] sm:$0x8]
      %v531 = vsel %vm514, 0, %v530
      %532 = vst [vmem:[#allocation2 + $0x50] sm:$0x8] %v531
      %v533 = vld [vmem:[#allocation2 + $0x60] sm:$0x8]
      %v534 = vsel %vm514, 0, %v533
      %535 = vst [vmem:[#allocation2 + $0x60] sm:$0x8] %v534
      %v536 = vld [vmem:[#allocation2 + $0x70] sm:$0x8]
      %v537 = vsel %vm514, 0, %v536
      %538 = vst [vmem:[#allocation2 + $0x70] sm:$0x8] %v537
      %v539 = vld [vmem:[#allocation2 + $0x80] sm:$0x8]
      %v540 = vsel %vm514, 0, %v539
      %541 = vst [vmem:[#allocation2 + $0x80] sm:$0x8] %v540
      %v542 = vld [vmem:[#allocation2 + $0x90] sm:$0x8]
      %v543 = vsel %vm514, 0, %v542
      %544 = vst [vmem:[#allocation2 + $0x90] sm:$0x8] %v543
      %vm545 = vcmask 1044484
      %vm546 = vsmask.f32 4352
      %vm547 = vmand %vm545, %vm546
      %v548 = vld [vmem:[#allocation2 + $0x8] sm:$0x10]
      %v549 = vsel %vm547, 0, %v548
      %550 = vst [vmem:[#allocation2 + $0x8] sm:$0x10] %v549
      %v551 = vld [vmem:[#allocation2 + $0x18] sm:$0x10]
      %v552 = vsel %vm547, 0, %v551
      %553 = vst [vmem:[#allocation2 + $0x18] sm:$0x10] %v552
      %v554 = vld [vmem:[#allocation2 + $0x28] sm:$0x10]
      %v555 = vsel %vm547, 0, %v554
      %556 = vst [vmem:[#allocation2 + $0x28] sm:$0x10] %v555
      %v557 = vld [vmem:[#allocation2 + $0x38] sm:$0x10]
      %v558 = vsel %vm547, 0, %v557
      %559 = vst [vmem:[#allocation2 + $0x38] sm:$0x10] %v558
      %v560 = vld [vmem:[#allocation2 + $0x48] sm:$0x10]
      %v561 = vsel %vm547, 0, %v560
      %562 = vst [vmem:[#allocation2 + $0x48] sm:$0x10] %v561
      %v563 = vld [vmem:[#allocation2 + $0x58] sm:$0x10]
      %v564 = vsel %vm547, 0, %v563
      %565 = vst [vmem:[#allocation2 + $0x58] sm:$0x10] %v564
      %v566 = vld [vmem:[#allocation2 + $0x68] sm:$0x10]
      %v567 = vsel %vm547, 0, %v566
      %568 = vst [vmem:[#allocation2 + $0x68] sm:$0x10] %v567
      %v569 = vld [vmem:[#allocation2 + $0x78] sm:$0x10]
      %v570 = vsel %vm547, 0, %v569
      %571 = vst [vmem:[#allocation2 + $0x78] sm:$0x10] %v570
      %v572 = vld [vmem:[#allocation2 + $0x88] sm:$0x10]
      %v573 = vsel %vm547, 0, %v572
      %574 = vst [vmem:[#allocation2 + $0x88] sm:$0x10] %v573
      %v575 = vld [vmem:[#allocation2 + $0x98] sm:$0x10]
      %v576 = vsel %vm547, 0, %v575
      %577 = vst [vmem:[#allocation2 + $0x98] sm:$0x10] %v576
      %v578 = vld [vmem:[%s450] sm:$0xf]
      %v579 = vld [vmem:[%s450 + $0x4] sm:$0xf]
      %v580 = vld [vmem:[%s450 + $0x8] sm:$0xf]
      %v581 = vld [vmem:[%s450 + $0xc] sm:$0xf]
      %v582 = vld [vmem:[%s450 + $0x10] sm:$0xf]
      %v583 = vld [vmem:[%s450 + $0x14] sm:$0xf]
      %v584 = vld [vmem:[%s450 + $0x18] sm:$0xf]
      %v585 = vld [vmem:[%s450 + $0x1c] sm:$0xf]
      %v586 = vld [vmem:[%s450 + $0x20] sm:$0xf]
      %v587 = vld [vmem:[%s450 + $0x24] sm:$0xf]
      %v588 = vld [vmem:[%s450 + $0x28] sm:$0xf]
      %v589 = vld [vmem:[%s450 + $0x2c] sm:$0xf]
      %v590 = vld [vmem:[%s450 + $0x30] sm:$0xf]
      %v591 = vld [vmem:[%s450 + $0x34] sm:$0xf]
      %v592 = vld [vmem:[%s450 + $0x38] sm:$0xf]
      %v593 = vld [vmem:[%s450 + $0x3c] sm:$0xf]
      %v594 = vunpack.c.l.bf16 %v578
      %v595 = vunpack.c.l.bf16 %v579
      %v596 = vunpack.c.l.bf16 %v580
      %v597 = vunpack.c.l.bf16 %v581
      %v598 = vunpack.c.l.bf16 %v582
      %v599 = vunpack.c.l.bf16 %v583
      %v600 = vunpack.c.l.bf16 %v584
      %v601 = vunpack.c.l.bf16 %v585
      %v602 = vunpack.c.l.bf16 %v586
      %v603 = vunpack.c.l.bf16 %v587
      %v604 = vunpack.c.l.bf16 %v588
      %v605 = vunpack.c.l.bf16 %v589
      %v606 = vunpack.c.l.bf16 %v590
      %v607 = vunpack.c.l.bf16 %v591
      %v608 = vunpack.c.l.bf16 %v592
      %v609 = vunpack.c.l.bf16 %v593
      %v610 = vld [vmem:[%s3] sm:$0x1]
      %v612 = vlaneseq
      %v613 = vshrl.u32 %v612, 7
      %v614 = vsub.s32 0, %v613
      %v615 = vrot.slane %v610, %v614
      %v617 = vmul.f32 %v594, %v615
      %v618 = vmul.f32 %v595, %v615
      %v619 = vmul.f32 %v596, %v615
      %v620 = vmul.f32 %v597, %v615
      %v621 = vmul.f32 %v598, %v615
      %v622 = vmul.f32 %v599, %v615
      %v623 = vmul.f32 %v600, %v615
      %v624 = vmul.f32 %v601, %v615
      %v625 = vmul.f32 %v602, %v615
      %v626 = vmul.f32 %v603, %v615
      %v627 = vmul.f32 %v604, %v615
      %v628 = vmul.f32 %v605, %v615
      %v629 = vmul.f32 %v606, %v615
      %v630 = vmul.f32 %v607, %v615
      %v631 = vmul.f32 %v608, %v615
      %v632 = vmul.f32 %v609, %v615
      %v633 = vld [vmem:[%s4] sm:$0x1]
      %v635 = vlaneseq
      %v636 = vshrl.u32 %v635, 7
      %v637 = vsub.s32 0, %v636
      %v638 = vrot.slane %v633, %v637
      %v640 = vadd.f32 %v617, %v638
      %v641 = vadd.f32 %v618, %v638
      %v642 = vadd.f32 %v619, %v638
      %v643 = vadd.f32 %v620, %v638
      %v644 = vadd.f32 %v621, %v638
      %v645 = vadd.f32 %v622, %v638
      %v646 = vadd.f32 %v623, %v638
      %v647 = vadd.f32 %v624, %v638
      %v648 = vadd.f32 %v625, %v638
      %v649 = vadd.f32 %v626, %v638
      %v650 = vadd.f32 %v627, %v638
      %v651 = vadd.f32 %v628, %v638
      %v652 = vadd.f32 %v629, %v638
      %v653 = vadd.f32 %v630, %v638
      %v654 = vadd.f32 %v631, %v638
      %v655 = vadd.f32 %v632, %v638
      %v656 = vmax.f32 %v640, 0.0
      %v657 = vmax.f32 %v641, 0.0
      %v658 = vmax.f32 %v642, 0.0
      %v659 = vmax.f32 %v643, 0.0
      %v660 = vmax.f32 %v644, 0.0
      %v661 = vmax.f32 %v645, 0.0
      %v662 = vmax.f32 %v646, 0.0
      %v663 = vmax.f32 %v647, 0.0
      %v664 = vmax.f32 %v648, 0.0
      %v665 = vmax.f32 %v649, 0.0
      %v666 = vmax.f32 %v650, 0.0
      %v667 = vmax.f32 %v651, 0.0
      %v668 = vmax.f32 %v652, 0.0
      %v669 = vmax.f32 %v653, 0.0
      %v670 = vmax.f32 %v654, 0.0
      %v671 = vmax.f32 %v655, 0.0
      %v672 = vpack.c.bf16 %v657, %v656
      %v673 = vpack.c.bf16 %v659, %v658
      %v674 = vpack.c.bf16 %v661, %v660
      %v675 = vpack.c.bf16 %v663, %v662
      %v676 = vpack.c.bf16 %v665, %v664
      %v677 = vpack.c.bf16 %v667, %v666
      %v678 = vpack.c.bf16 %v669, %v668
      %v679 = vpack.c.bf16 %v671, %v670
      %v688 = vrot.slane %v672, 4
      %v689 = vrot.slane %v673, 4
      %v690 = vrot.slane %v674, 4
      %v691 = vrot.slane %v675, 4
      %v692 = vrot.slane %v676, 4
      %v693 = vrot.slane %v677, 4
      %v694 = vrot.slane %v678, 4
      %v695 = vrot.slane %v679, 4
      %s704 = scalar_lea.vmem [#allocation2], 16
      %705 = vst [vmem:[%s704] sm:$0xf0] %v688
      %706 = vst [vmem:[%s704 + $0x8] sm:$0xf] %v688
      %707 = vst [vmem:[%s704 + $0x10] sm:$0xf0] %v689
      %708 = vst [vmem:[%s704 + $0x18] sm:$0xf] %v689
      %709 = vst [vmem:[%s704 + $0x20] sm:$0xf0] %v690
      %710 = vst [vmem:[%s704 + $0x28] sm:$0xf] %v690
      %711 = vst [vmem:[%s704 + $0x30] sm:$0xf0] %v691
      %712 = vst [vmem:[%s704 + $0x38] sm:$0xf] %v691
      %713 = vst [vmem:[%s704 + $0x40] sm:$0xf0] %v692
      %714 = vst [vmem:[%s704 + $0x48] sm:$0xf] %v692
      %715 = vst [vmem:[%s704 + $0x50] sm:$0xf0] %v693
      %716 = vst [vmem:[%s704 + $0x58] sm:$0xf] %v693
      %717 = vst [vmem:[%s704 + $0x60] sm:$0xf0] %v694
      %718 = vst [vmem:[%s704 + $0x68] sm:$0xf] %v694
      %719 = vst [vmem:[%s704 + $0x70] sm:$0xf0] %v695
      %720 = vst [vmem:[%s704 + $0x78] sm:$0xf] %v695
      %v721 = vld [vmem:[%s464] sm:$0xf]
      %v722 = vld [vmem:[%s464 + $0x4] sm:$0xf]
      %v723 = vunpack.c.l.bf16 %v721
      %v724 = vunpack.c.l.bf16 %v722
      %v725 = vld [vmem:[%s3] sm:$0x1]
      %v727 = vlaneseq
      %v728 = vshrl.u32 %v727, 7
      %v729 = vsub.s32 0, %v728
      %v730 = vrot.slane %v725, %v729
      %v732 = vmul.f32 %v723, %v730
      %v733 = vmul.f32 %v724, %v730
      %v734 = vld [vmem:[%s4] sm:$0x1]
      %v736 = vlaneseq
      %v737 = vshrl.u32 %v736, 7
      %v738 = vsub.s32 0, %v737
      %v739 = vrot.slane %v734, %v738
      %v741 = vadd.f32 %v732, %v739
      %v742 = vadd.f32 %v733, %v739
      %v743 = vmax.f32 %v741, 0.0
      %v744 = vmax.f32 %v742, 0.0
      %v745 = vpack.c.bf16 %v744, %v743
      %v746 = vld [vmem:[%s481] sm:$0xf]
      %v747 = vld [vmem:[%s481 + $0x4] sm:$0xf]
      %v748 = vunpack.c.l.bf16 %v746
      %v749 = vunpack.c.l.bf16 %v747
      %v750 = vmul.f32 %v748, %v730
      %v751 = vmul.f32 %v749, %v730
      %v752 = vadd.f32 %v750, %v739
      %v753 = vadd.f32 %v751, %v739
      %v754 = vmax.f32 %v752, 0.0
      %v755 = vmax.f32 %v753, 0.0
      %v756 = vpack.c.bf16 %v755, %v754
      %p757 = scmp.gt.s32.totalorder %s25, 0
      %s758 = scalar_select %p757, 1, 0
      %v759 = vstv %s758
      %vm760 = vcmp.eq.s32.totalorder %v759, 1
      %v761 = vsel %vm760, %v745, 0
      %p762 = scmp.lt.s32.totalorder %s25, 1
      %s763 = scalar_select %p762, 1, 0
      %v764 = vstv %s763
      %vm765 = vcmp.eq.s32.totalorder %v764, 1
      %v766 = vsel %vm765, %v756, 0
      %v768 = vrot.slane %v761, 4
      %770 = vst [vmem:[#allocation2] sm:$0xf0] %v768
      %771 = vst [vmem:[#allocation2 + $0x8] sm:$0xf] %v768
      %v773 = vrot.slane %v766, 4
      %s775 = scalar_lea.vmem [#allocation2], 144
      %776 = vst [vmem:[%s775] sm:$0xf0] %v773
      %777 = vst [vmem:[%s775 + $0x8] sm:$0xf] %v773
      %v778 = vld [vmem:[#allocation2] sm:$0xf8]
      %v779 = vld [vmem:[#allocation2 + $0x8] sm:$0xf]
      %v780 = vld [vmem:[#allocation2 + $0x10] sm:$0xf8]
      %v781 = vld [vmem:[#allocation2 + $0x18] sm:$0xf]
      %v782 = vld [vmem:[#allocation2 + $0x20] sm:$0xf8]
      %v783 = vld [vmem:[#allocation2 + $0x28] sm:$0xf]
      %v784 = vld [vmem:[#allocation2 + $0x30] sm:$0xf8]
      %v785 = vld [vmem:[#allocation2 + $0x38] sm:$0xf]
      %v786 = vld [vmem:[#allocation2 + $0x40] sm:$0xf8]
      %v787 = vld [vmem:[#allocation2 + $0x48] sm:$0xf]
      %v788 = vld [vmem:[#allocation2 + $0x50] sm:$0xf8]
      %v789 = vld [vmem:[#allocation2 + $0x58] sm:$0xf]
      %v790 = vld [vmem:[#allocation2 + $0x60] sm:$0xf8]
      %v791 = vld [vmem:[#allocation2 + $0x68] sm:$0xf]
      %v792 = vld [vmem:[#allocation2 + $0x70] sm:$0xf8]
      %v793 = vld [vmem:[#allocation2 + $0x78] sm:$0xf]
      %v794 = vld [vmem:[#allocation2 + $0x80] sm:$0xf8]
      %v795 = vld [vmem:[#allocation2 + $0x88] sm:$0xf]
      %v796 = vld [vmem:[#allocation2 + $0x90] sm:$0xf8]
      %v797 = vld [vmem:[#allocation2 + $0x98] sm:$0xf]
      %v799 = vshrl.u32 %v778, 16
      %v801 = vrot.slane %v799, 3
      %v802 = vshll.u32 %v778, 16
      %v804 = vrot.slane %v802, 4
      %v805 = vor.u32 %v801, %v804
      %v807 = vshrl.u32 %v779, 16
      %v809 = vrot.slane %v807, 3
      %v810 = vshll.u32 %v779, 16
      %v812 = vrot.slane %v810, 4
      %v813 = vor.u32 %v809, %v812
      %v814 = vsel %vm546, %v805, %v813
      %v816 = vshrl.u32 %v780, 16
      %v818 = vrot.slane %v816, 3
      %v819 = vshll.u32 %v780, 16
      %v821 = vrot.slane %v819, 4
      %v822 = vor.u32 %v818, %v821
      %v824 = vshrl.u32 %v781, 16
      %v826 = vrot.slane %v824, 3
      %v827 = vshll.u32 %v781, 16
      %v829 = vrot.slane %v827, 4
      %v830 = vor.u32 %v826, %v829
      %v831 = vsel %vm546, %v822, %v830
      %v833 = vshrl.u32 %v782, 16
      %v835 = vrot.slane %v833, 3
      %v836 = vshll.u32 %v782, 16
      %v838 = vrot.slane %v836, 4
      %v839 = vor.u32 %v835, %v838
      %v841 = vshrl.u32 %v783, 16
      %v843 = vrot.slane %v841, 3
      %v844 = vshll.u32 %v783, 16
      %v846 = vrot.slane %v844, 4
      %v847 = vor.u32 %v843, %v846
      %v848 = vsel %vm546, %v839, %v847
      %v850 = vshrl.u32 %v784, 16
      %v852 = vrot.slane %v850, 3
      %v853 = vshll.u32 %v784, 16
      %v855 = vrot.slane %v853, 4
      %v856 = vor.u32 %v852, %v855
      %v858 = vshrl.u32 %v785, 16
      %v860 = vrot.slane %v858, 3
      %v861 = vshll.u32 %v785, 16
      %v863 = vrot.slane %v861, 4
      %v864 = vor.u32 %v860, %v863
      %v865 = vsel %vm546, %v856, %v864
      %v867 = vshrl.u32 %v786, 16
      %v869 = vrot.slane %v867, 3
      %v870 = vshll.u32 %v786, 16
      %v872 = vrot.slane %v870, 4
      %v873 = vor.u32 %v869, %v872
      %v875 = vshrl.u32 %v787, 16
      %v877 = vrot.slane %v875, 3
      %v878 = vshll.u32 %v787, 16
      %v880 = vrot.slane %v878, 4
      %v881 = vor.u32 %v877, %v880
      %v882 = vsel %vm546, %v873, %v881
      %v884 = vshrl.u32 %v788, 16
      %v886 = vrot.slane %v884, 3
      %v887 = vshll.u32 %v788, 16
      %v889 = vrot.slane %v887, 4
      %v890 = vor.u32 %v886, %v889
      %v892 = vshrl.u32 %v789, 16
      %v894 = vrot.slane %v892, 3
      %v895 = vshll.u32 %v789, 16
      %v897 = vrot.slane %v895, 4
      %v898 = vor.u32 %v894, %v897
      %v899 = vsel %vm546, %v890, %v898
      %v901 = vshrl.u32 %v790, 16
      %v903 = vrot.slane %v901, 3
      %v904 = vshll.u32 %v790, 16
      %v906 = vrot.slane %v904, 4
      %v907 = vor.u32 %v903, %v906
      %v909 = vshrl.u32 %v791, 16
      %v911 = vrot.slane %v909, 3
      %v912 = vshll.u32 %v791, 16
      %v914 = vrot.slane %v912, 4
      %v915 = vor.u32 %v911, %v914
      %v916 = vsel %vm546, %v907, %v915
      %v918 = vshrl.u32 %v792, 16
      %v920 = vrot.slane %v918, 3
      %v921 = vshll.u32 %v792, 16
      %v923 = vrot.slane %v921, 4
      %v924 = vor.u32 %v920, %v923
      %v926 = vshrl.u32 %v793, 16
      %v928 = vrot.slane %v926, 3
      %v929 = vshll.u32 %v793, 16
      %v931 = vrot.slane %v929, 4
      %v932 = vor.u32 %v928, %v931
      %v933 = vsel %vm546, %v924, %v932
      %v935 = vshrl.u32 %v794, 16
      %v937 = vrot.slane %v935, 3
      %v938 = vshll.u32 %v794, 16
      %v940 = vrot.slane %v938, 4
      %v941 = vor.u32 %v937, %v940
      %v943 = vshrl.u32 %v795, 16
      %v945 = vrot.slane %v943, 3
      %v946 = vshll.u32 %v795, 16
      %v948 = vrot.slane %v946, 4
      %v949 = vor.u32 %v945, %v948
      %v950 = vsel %vm546, %v941, %v949
      %v952 = vshrl.u32 %v796, 16
      %v954 = vrot.slane %v952, 3
      %v955 = vshll.u32 %v796, 16
      %v957 = vrot.slane %v955, 4
      %v958 = vor.u32 %v954, %v957
      %v960 = vshrl.u32 %v797, 16
      %v962 = vrot.slane %v960, 3
      %v963 = vshll.u32 %v797, 16
      %v965 = vrot.slane %v963, 4
      %v966 = vor.u32 %v962, %v965
      %v967 = vsel %vm546, %v958, %v966
      %978 = vst [vmem:[#allocation3] sm:$0xff] %v814
      %979 = vst [vmem:[#allocation3 + $0x18] sm:$0xff] %v831
      %980 = vst [vmem:[#allocation3 + $0x30] sm:$0xff] %v848
      %981 = vst [vmem:[#allocation3 + $0x48] sm:$0xff] %v865
      %982 = vst [vmem:[#allocation3 + $0x60] sm:$0xff] %v882
      %983 = vst [vmem:[#allocation3 + $0x78] sm:$0xff] %v899
      %984 = vst [vmem:[#allocation3 + $0x90] sm:$0xff] %v916
      %985 = vst [vmem:[#allocation3 + $0xa8] sm:$0xff] %v933
      %986 = vst [vmem:[#allocation3 + $0xc0] sm:$0xff] %v950
      %987 = vst [vmem:[#allocation3 + $0xd8] sm:$0xff] %v967
      %v988 = vld [vmem:[#allocation2] sm:$0xf0]
      %v989 = vld [vmem:[#allocation2 + $0x8] sm:$0xf]
      %v990 = vld [vmem:[#allocation2 + $0x10] sm:$0xf0]
      %v991 = vld [vmem:[#allocation2 + $0x18] sm:$0xf]
      %v992 = vld [vmem:[#allocation2 + $0x20] sm:$0xf0]
      %v993 = vld [vmem:[#allocation2 + $0x28] sm:$0xf]
      %v994 = vld [vmem:[#allocation2 + $0x30] sm:$0xf0]
      %v995 = vld [vmem:[#allocation2 + $0x38] sm:$0xf]
      %v996 = vld [vmem:[#allocation2 + $0x40] sm:$0xf0]
      %v997 = vld [vmem:[#allocation2 + $0x48] sm:$0xf]
      %v998 = vld [vmem:[#allocation2 + $0x50] sm:$0xf0]
      %v999 = vld [vmem:[#allocation2 + $0x58] sm:$0xf]
      %v1000 = vld [vmem:[#allocation2 + $0x60] sm:$0xf0]
      %v1001 = vld [vmem:[#allocation2 + $0x68] sm:$0xf]
      %v1002 = vld [vmem:[#allocation2 + $0x70] sm:$0xf0]
      %v1003 = vld [vmem:[#allocation2 + $0x78] sm:$0xf]
      %v1004 = vld [vmem:[#allocation2 + $0x80] sm:$0xf0]
      %v1005 = vld [vmem:[#allocation2 + $0x88] sm:$0xf]
      %v1006 = vld [vmem:[#allocation2 + $0x90] sm:$0xf0]
      %v1007 = vld [vmem:[#allocation2 + $0x98] sm:$0xf]
      %vm1028 = vcmask 1043456
      %v1029 = vrot.slane %v988, 4
      %v1030 = vrot.slane %v989, 4
      %v1031 = vsel %vm1028, %v1029, %v1030
      %v1032 = vrot.slane %v990, 4
      %v1033 = vrot.slane %v991, 4
      %v1034 = vsel %vm1028, %v1032, %v1033
      %v1035 = vrot.slane %v992, 4
      %v1036 = vrot.slane %v993, 4
      %v1037 = vsel %vm1028, %v1035, %v1036
      %v1038 = vrot.slane %v994, 4
      %v1039 = vrot.slane %v995, 4
      %v1040 = vsel %vm1028, %v1038, %v1039
      %v1041 = vrot.slane %v996, 4
      %v1042 = vrot.slane %v997, 4
      %v1043 = vsel %vm1028, %v1041, %v1042
      %v1044 = vrot.slane %v998, 4
      %v1045 = vrot.slane %v999, 4
      %v1046 = vsel %vm1028, %v1044, %v1045
      %v1047 = vrot.slane %v1000, 4
      %v1048 = vrot.slane %v1001, 4
      %v1049 = vsel %vm1028, %v1047, %v1048
      %v1050 = vrot.slane %v1002, 4
      %v1051 = vrot.slane %v1003, 4
      %v1052 = vsel %vm1028, %v1050, %v1051
      %v1053 = vrot.slane %v1004, 4
      %v1054 = vrot.slane %v1005, 4
      %v1055 = vsel %vm1028, %v1053, %v1054
      %v1056 = vrot.slane %v1006, 4
      %v1057 = vrot.slane %v1007, 4
      %v1058 = vsel %vm1028, %v1056, %v1057
      %1069 = vst [vmem:[#allocation3 + $0x8] sm:$0xff] %v1031
      %1070 = vst [vmem:[#allocation3 + $0x20] sm:$0xff] %v1034
      %1071 = vst [vmem:[#allocation3 + $0x38] sm:$0xff] %v1037
      %1072 = vst [vmem:[#allocation3 + $0x50] sm:$0xff] %v1040
      %1073 = vst [vmem:[#allocation3 + $0x68] sm:$0xff] %v1043
      %1074 = vst [vmem:[#allocation3 + $0x80] sm:$0xff] %v1046
      %1075 = vst [vmem:[#allocation3 + $0x98] sm:$0xff] %v1049
      %1076 = vst [vmem:[#allocation3 + $0xb0] sm:$0xff] %v1052
      %1077 = vst [vmem:[#allocation3 + $0xc8] sm:$0xff] %v1055
      %1078 = vst [vmem:[#allocation3 + $0xe0] sm:$0xff] %v1058
      %v1079 = vld [vmem:[#allocation2] sm:$0xf0]
      %v1080 = vld [vmem:[#allocation2 + $0x8] sm:$0x1f]
      %v1081 = vld [vmem:[#allocation2 + $0x10] sm:$0xf0]
      %v1082 = vld [vmem:[#allocation2 + $0x18] sm:$0x1f]
      %v1083 = vld [vmem:[#allocation2 + $0x20] sm:$0xf0]
      %v1084 = vld [vmem:[#allocation2 + $0x28] sm:$0x1f]
      %v1085 = vld [vmem:[#allocation2 + $0x30] sm:$0xf0]
      %v1086 = vld [vmem:[#allocation2 + $0x38] sm:$0x1f]
      %v1087 = vld [vmem:[#allocation2 + $0x40] sm:$0xf0]
      %v1088 = vld [vmem:[#allocation2 + $0x48] sm:$0x1f]
      %v1089 = vld [vmem:[#allocation2 + $0x50] sm:$0xf0]
      %v1090 = vld [vmem:[#allocation2 + $0x58] sm:$0x1f]
      %v1091 = vld [vmem:[#allocation2 + $0x60] sm:$0xf0]
      %v1092 = vld [vmem:[#allocation2 + $0x68] sm:$0x1f]
      %v1093 = vld [vmem:[#allocation2 + $0x70] sm:$0xf0]
      %v1094 = vld [vmem:[#allocation2 + $0x78] sm:$0x1f]
      %v1095 = vld [vmem:[#allocation2 + $0x80] sm:$0xf0]
      %v1096 = vld [vmem:[#allocation2 + $0x88] sm:$0x1f]
      %v1097 = vld [vmem:[#allocation2 + $0x90] sm:$0xf0]
      %v1098 = vld [vmem:[#allocation2 + $0x98] sm:$0x1f]
      %vm1099 = vsmask.f32 3328
      %v1101 = vshrl.u32 %v1079, 16
      %v1103 = vrot.slane %v1101, 4
      %v1104 = vshll.u32 %v1079, 16
      %v1106 = vrot.slane %v1104, 5
      %v1107 = vor.u32 %v1103, %v1106
      %v1109 = vshrl.u32 %v1080, 16
      %v1111 = vrot.slane %v1109, 4
      %v1112 = vshll.u32 %v1080, 16
      %v1114 = vrot.slane %v1112, 5
      %v1115 = vor.u32 %v1111, %v1114
      %v1116 = vsel %vm1099, %v1107, %v1115
      %v1118 = vshrl.u32 %v1081, 16
      %v1120 = vrot.slane %v1118, 4
      %v1121 = vshll.u32 %v1081, 16
      %v1123 = vrot.slane %v1121, 5
      %v1124 = vor.u32 %v1120, %v1123
      %v1126 = vshrl.u32 %v1082, 16
      %v1128 = vrot.slane %v1126, 4
      %v1129 = vshll.u32 %v1082, 16
      %v1131 = vrot.slane %v1129, 5
      %v1132 = vor.u32 %v1128, %v1131
      %v1133 = vsel %vm1099, %v1124, %v1132
      %v1135 = vshrl.u32 %v1083, 16
      %v1137 = vrot.slane %v1135, 4
      %v1138 = vshll.u32 %v1083, 16
      %v1140 = vrot.slane %v1138, 5
      %v1141 = vor.u32 %v1137, %v1140
      %v1143 = vshrl.u32 %v1084, 16
      %v1145 = vrot.slane %v1143, 4
      %v1146 = vshll.u32 %v1084, 16
      %v1148 = vrot.slane %v1146, 5
      %v1149 = vor.u32 %v1145, %v1148
      %v1150 = vsel %vm1099, %v1141, %v1149
      %v1152 = vshrl.u32 %v1085, 16
      %v1154 = vrot.slane %v1152, 4
      %v1155 = vshll.u32 %v1085, 16
      %v1157 = vrot.slane %v1155, 5
      %v1158 = vor.u32 %v1154, %v1157
      %v1160 = vshrl.u32 %v1086, 16
      %v1162 = vrot.slane %v1160, 4
      %v1163 = vshll.u32 %v1086, 16
      %v1165 = vrot.slane %v1163, 5
      %v1166 = vor.u32 %v1162, %v1165
      %v1167 = vsel %vm1099, %v1158, %v1166
      %v1169 = vshrl.u32 %v1087, 16
      %v1171 = vrot.slane %v1169, 4
      %v1172 = vshll.u32 %v1087, 16
      %v1174 = vrot.slane %v1172, 5
      %v1175 = vor.u32 %v1171, %v1174
      %v1177 = vshrl.u32 %v1088, 16
      %v1179 = vrot.slane %v1177, 4
      %v1180 = vshll.u32 %v1088, 16
      %v1182 = vrot.slane %v1180, 5
      %v1183 = vor.u32 %v1179, %v1182
      %v1184 = vsel %vm1099, %v1175, %v1183
      %v1186 = vshrl.u32 %v1089, 16
      %v1188 = vrot.slane %v1186, 4
      %v1189 = vshll.u32 %v1089, 16
      %v1191 = vrot.slane %v1189, 5
      %v1192 = vor.u32 %v1188, %v1191
      %v1194 = vshrl.u32 %v1090, 16
      %v1196 = vrot.slane %v1194, 4
      %v1197 = vshll.u32 %v1090, 16
      %v1199 = vrot.slane %v1197, 5
      %v1200 = vor.u32 %v1196, %v1199
      %v1201 = vsel %vm1099, %v1192, %v1200
      %v1203 = vshrl.u32 %v1091, 16
      %v1205 = vrot.slane %v1203, 4
      %v1206 = vshll.u32 %v1091, 16
      %v1208 = vrot.slane %v1206, 5
      %v1209 = vor.u32 %v1205, %v1208
      %v1211 = vshrl.u32 %v1092, 16
      %v1213 = vrot.slane %v1211, 4
      %v1214 = vshll.u32 %v1092, 16
      %v1216 = vrot.slane %v1214, 5
      %v1217 = vor.u32 %v1213, %v1216
      %v1218 = vsel %vm1099, %v1209, %v1217
      %v1220 = vshrl.u32 %v1093, 16
      %v1222 = vrot.slane %v1220, 4
      %v1223 = vshll.u32 %v1093, 16
      %v1225 = vrot.slane %v1223, 5
      %v1226 = vor.u32 %v1222, %v1225
      %v1228 = vshrl.u32 %v1094, 16
      %v1230 = vrot.slane %v1228, 4
      %v1231 = vshll.u32 %v1094, 16
      %v1233 = vrot.slane %v1231, 5
      %v1234 = vor.u32 %v1230, %v1233
      %v1235 = vsel %vm1099, %v1226, %v1234
      %v1237 = vshrl.u32 %v1095, 16
      %v1239 = vrot.slane %v1237, 4
      %v1240 = vshll.u32 %v1095, 16
      %v1242 = vrot.slane %v1240, 5
      %v1243 = vor.u32 %v1239, %v1242
      %v1245 = vshrl.u32 %v1096, 16
      %v1247 = vrot.slane %v1245, 4
      %v1248 = vshll.u32 %v1096, 16
      %v1250 = vrot.slane %v1248, 5
      %v1251 = vor.u32 %v1247, %v1250
      %v1252 = vsel %vm1099, %v1243, %v1251
      %v1254 = vshrl.u32 %v1097, 16
      %v1256 = vrot.slane %v1254, 4
      %v1257 = vshll.u32 %v1097, 16
      %v1259 = vrot.slane %v1257, 5
      %v1260 = vor.u32 %v1256, %v1259
      %v1262 = vshrl.u32 %v1098, 16
      %v1264 = vrot.slane %v1262, 4
      %v1265 = vshll.u32 %v1098, 16
      %v1267 = vrot.slane %v1265, 5
      %v1268 = vor.u32 %v1264, %v1267
      %v1269 = vsel %vm1099, %v1260, %v1268
      %1280 = vst [vmem:[#allocation3 + $0x10] sm:$0xff] %v1116
      %1281 = vst [vmem:[#allocation3 + $0x28] sm:$0xff] %v1133
      %1282 = vst [vmem:[#allocation3 + $0x40] sm:$0xff] %v1150
      %1283 = vst [vmem:[#allocation3 + $0x58] sm:$0xff] %v1167
      %1284 = vst [vmem:[#allocation3 + $0x70] sm:$0xff] %v1184
      %1285 = vst [vmem:[#allocation3 + $0x88] sm:$0xff] %v1201
      %1286 = vst [vmem:[#allocation3 + $0xa0] sm:$0xff] %v1218
      %1287 = vst [vmem:[#allocation3 + $0xb8] sm:$0xff] %v1235
      %1288 = vst [vmem:[#allocation3 + $0xd0] sm:$0xff] %v1252
      %1289 = vst [vmem:[#allocation3 + $0xe8] sm:$0xff] %v1269
      %v1290 = vld [vmem:[#allocation3] sm:$0xff]
      %v1291 = vld [vmem:[#allocation3 + $0x8] sm:$0xff]
      %v1292 = vld [vmem:[#allocation3 + $0x10] sm:$0xff]
      %v1293 = vld [vmem:[#allocation3 + $0x18] sm:$0xff]
      %v1294 = vld [vmem:[#allocation3 + $0x20] sm:$0xff]
      %v1295 = vld [vmem:[#allocation3 + $0x28] sm:$0xff]
      %v1296 = vld [vmem:[#allocation3 + $0x30] sm:$0xff]
      %v1297 = vld [vmem:[#allocation3 + $0x38] sm:$0xff]
      %v1298 = vld [vmem:[#allocation3 + $0x40] sm:$0xff]
      %v1299 = vld [vmem:[#allocation3 + $0x48] sm:$0xff]
      %v1300 = vld [vmem:[#allocation3 + $0x50] sm:$0xff]
      %v1301 = vld [vmem:[#allocation3 + $0x58] sm:$0xff]
      %v1302 = vld [vmem:[#allocation3 + $0x60] sm:$0xff]
      %v1303 = vld [vmem:[#allocation3 + $0x68] sm:$0xff]
      %v1304 = vld [vmem:[#allocation3 + $0x70] sm:$0xff]
      %v1305 = vld [vmem:[#allocation3 + $0x78] sm:$0xff]
      %v1306 = vld [vmem:[#allocation3 + $0x80] sm:$0xff]
      %v1307 = vld [vmem:[#allocation3 + $0x88] sm:$0xff]
      %v1308 = vld [vmem:[#allocation3 + $0x90] sm:$0xff]
      %v1309 = vld [vmem:[#allocation3 + $0x98] sm:$0xff]
      %v1310 = vld [vmem:[#allocation3 + $0xa0] sm:$0xff]
      %v1311 = vld [vmem:[#allocation3 + $0xa8] sm:$0xff]
      %v1312 = vld [vmem:[#allocation3 + $0xb0] sm:$0xff]
      %v1313 = vld [vmem:[#allocation3 + $0xb8] sm:$0xff]
      %v1314 = vld [vmem:[%s5] sm:$0xf]
      %v1315 = vld [vmem:[%s5 + $0x4] sm:$0xf]
      %v1316 = vld [vmem:[%s5 + $0x8] sm:$0xf]
      %v1317 = vld [vmem:[%s5 + $0xc] sm:$0xf]
      %v1318 = vld [vmem:[%s5 + $0x10] sm:$0xf]
      %v1319 = vld [vmem:[%s5 + $0x14] sm:$0xf]
      %v1320 = vld [vmem:[%s5 + $0x18] sm:$0xf]
      %v1321 = vld [vmem:[%s5 + $0x1c] sm:$0xf]
      %v1322 = vld [vmem:[%s5 + $0x20] sm:$0xf]
      %v1323 = vld [vmem:[%s5 + $0x24] sm:$0xf]
      %v1324 = vld [vmem:[%s5 + $0x28] sm:$0xf]
      %v1325 = vld [vmem:[%s5 + $0x2c] sm:$0xf]
      %v1326 = vld [vmem:[%s5 + $0x30] sm:$0xf]
      %v1327 = vld [vmem:[%s5 + $0x34] sm:$0xf]
      %v1328 = vld [vmem:[%s5 + $0x38] sm:$0xf]
      %v1329 = vld [vmem:[%s5 + $0x3c] sm:$0xf]
      %v1330 = vld [vmem:[%s5 + $0x40] sm:$0xf]
      %v1331 = vld [vmem:[%s5 + $0x44] sm:$0xf]
      %v1332 = vld [vmem:[%s5 + $0x48] sm:$0xf]
      %v1333 = vld [vmem:[%s5 + $0x4c] sm:$0xf]
      %v1334 = vld [vmem:[%s5 + $0x50] sm:$0xf]
      %v1335 = vld [vmem:[%s5 + $0x54] sm:$0xf]
      %v1336 = vld [vmem:[%s5 + $0x58] sm:$0xf]
      %v1337 = vld [vmem:[%s5 + $0x5c] sm:$0xf]
      %v1338 = vld [vmem:[%s5 + $0x60] sm:$0xf]
      %v1339 = vld [vmem:[%s5 + $0x64] sm:$0xf]
      %v1340 = vld [vmem:[%s5 + $0x68] sm:$0xf]
      %v1341 = vld [vmem:[%s5 + $0x6c] sm:$0xf]
      %v1342 = vld [vmem:[%s5 + $0x70] sm:$0xf]
      %v1343 = vld [vmem:[%s5 + $0x74] sm:$0xf]
      %v1344 = vld [vmem:[%s5 + $0x78] sm:$0xf]
      %v1345 = vld [vmem:[%s5 + $0x7c] sm:$0xf]
      %v1346 = vld [vmem:[%s5 + $0x80] sm:$0xf]
      %v1347 = vld [vmem:[%s5 + $0x84] sm:$0xf]
      %v1348 = vld [vmem:[%s5 + $0x88] sm:$0xf]
      %v1349 = vld [vmem:[%s5 + $0x8c] sm:$0xf]
      %v1350 = vld [vmem:[%s5 + $0x90] sm:$0xf]
      %v1351 = vld [vmem:[%s5 + $0x94] sm:$0xf]
      %v1352 = vld [vmem:[%s5 + $0x98] sm:$0xf]
      %v1353 = vld [vmem:[%s5 + $0x9c] sm:$0xf]
      %v1354 = vld [vmem:[%s5 + $0xa0] sm:$0xf]
      %v1355 = vld [vmem:[%s5 + $0xa4] sm:$0xf]
      %v1356 = vld [vmem:[%s5 + $0xa8] sm:$0xf]
      %v1357 = vld [vmem:[%s5 + $0xac] sm:$0xf]
      %v1358 = vld [vmem:[%s5 + $0xb0] sm:$0xf]
      %v1359 = vld [vmem:[%s5 + $0xb4] sm:$0xf]
      %v1360 = vld [vmem:[%s5 + $0xb8] sm:$0xf]
      %v1361 = vld [vmem:[%s5 + $0xbc] sm:$0xf]
      %s1362 = scalar_lea.vmem [#allocation3], 24
      %v1363 = vld [vmem:[%s1362] sm:$0xff]
      %v1364 = vld [vmem:[%s1362 + $0x8] sm:$0xff]
      %v1365 = vld [vmem:[%s1362 + $0x10] sm:$0xff]
      %v1366 = vld [vmem:[%s1362 + $0x18] sm:$0xff]
      %v1367 = vld [vmem:[%s1362 + $0x20] sm:$0xff]
      %v1368 = vld [vmem:[%s1362 + $0x28] sm:$0xff]
      %v1369 = vld [vmem:[%s1362 + $0x30] sm:$0xff]
      %v1370 = vld [vmem:[%s1362 + $0x38] sm:$0xff]
      %v1371 = vld [vmem:[%s1362 + $0x40] sm:$0xff]
      %v1372 = vld [vmem:[%s1362 + $0x48] sm:$0xff]
      %v1373 = vld [vmem:[%s1362 + $0x50] sm:$0xff]
      %v1374 = vld [vmem:[%s1362 + $0x58] sm:$0xff]
      %v1375 = vld [vmem:[%s1362 + $0x60] sm:$0xff]
      %v1376 = vld [vmem:[%s1362 + $0x68] sm:$0xff]
      %v1377 = vld [vmem:[%s1362 + $0x70] sm:$0xff]
      %v1378 = vld [vmem:[%s1362 + $0x78] sm:$0xff]
      %v1379 = vld [vmem:[%s1362 + $0x80] sm:$0xff]
      %v1380 = vld [vmem:[%s1362 + $0x88] sm:$0xff]
      %v1381 = vld [vmem:[%s1362 + $0x90] sm:$0xff]
      %v1382 = vld [vmem:[%s1362 + $0x98] sm:$0xff]
      %v1383 = vld [vmem:[%s1362 + $0xa0] sm:$0xff]
      %v1384 = vld [vmem:[%s1362 + $0xa8] sm:$0xff]
      %v1385 = vld [vmem:[%s1362 + $0xb0] sm:$0xff]
      %v1386 = vld [vmem:[%s1362 + $0xb8] sm:$0xff]
      %s1387 = scalar_lea.vmem %s5, 192
      %v1388 = vld [vmem:[%s1387] sm:$0xf]
      %v1389 = vld [vmem:[%s1387 + $0x4] sm:$0xf]
      %v1390 = vld [vmem:[%s1387 + $0x8] sm:$0xf]
      %v1391 = vld [vmem:[%s1387 + $0xc] sm:$0xf]
      %v1392 = vld [vmem:[%s1387 + $0x10] sm:$0xf]
      %v1393 = vld [vmem:[%s1387 + $0x14] sm:$0xf]
      %v1394 = vld [vmem:[%s1387 + $0x18] sm:$0xf]
      %v1395 = vld [vmem:[%s1387 + $0x1c] sm:$0xf]
      %v1396 = vld [vmem:[%s1387 + $0x20] sm:$0xf]
      %v1397 = vld [vmem:[%s1387 + $0x24] sm:$0xf]
      %v1398 = vld [vmem:[%s1387 + $0x28] sm:$0xf]
      %v1399 = vld [vmem:[%s1387 + $0x2c] sm:$0xf]
      %v1400 = vld [vmem:[%s1387 + $0x30] sm:$0xf]
      %v1401 = vld [vmem:[%s1387 + $0x34] sm:$0xf]
      %v1402 = vld [vmem:[%s1387 + $0x38] sm:$0xf]
      %v1403 = vld [vmem:[%s1387 + $0x3c] sm:$0xf]
      %v1404 = vld [vmem:[%s1387 + $0x40] sm:$0xf]
      %v1405 = vld [vmem:[%s1387 + $0x44] sm:$0xf]
      %v1406 = vld [vmem:[%s1387 + $0x48] sm:$0xf]
      %v1407 = vld [vmem:[%s1387 + $0x4c] sm:$0xf]
      %v1408 = vld [vmem:[%s1387 + $0x50] sm:$0xf]
      %v1409 = vld [vmem:[%s1387 + $0x54] sm:$0xf]
      %v1410 = vld [vmem:[%s1387 + $0x58] sm:$0xf]
      %v1411 = vld [vmem:[%s1387 + $0x5c] sm:$0xf]
      %v1412 = vld [vmem:[%s1387 + $0x60] sm:$0xf]
      %v1413 = vld [vmem:[%s1387 + $0x64] sm:$0xf]
      %v1414 = vld [vmem:[%s1387 + $0x68] sm:$0xf]
      %v1415 = vld [vmem:[%s1387 + $0x6c] sm:$0xf]
      %v1416 = vld [vmem:[%s1387 + $0x70] sm:$0xf]
      %v1417 = vld [vmem:[%s1387 + $0x74] sm:$0xf]
      %v1418 = vld [vmem:[%s1387 + $0x78] sm:$0xf]
      %v1419 = vld [vmem:[%s1387 + $0x7c] sm:$0xf]
      %v1420 = vld [vmem:[%s1387 + $0x80] sm:$0xf]
      %v1421 = vld [vmem:[%s1387 + $0x84] sm:$0xf]
      %v1422 = vld [vmem:[%s1387 + $0x88] sm:$0xf]
      %v1423 = vld [vmem:[%s1387 + $0x8c] sm:$0xf]
      %v1424 = vld [vmem:[%s1387 + $0x90] sm:$0xf]
      %v1425 = vld [vmem:[%s1387 + $0x94] sm:$0xf]
      %v1426 = vld [vmem:[%s1387 + $0x98] sm:$0xf]
      %v1427 = vld [vmem:[%s1387 + $0x9c] sm:$0xf]
      %v1428 = vld [vmem:[%s1387 + $0xa0] sm:$0xf]
      %v1429 = vld [vmem:[%s1387 + $0xa4] sm:$0xf]
      %v1430 = vld [vmem:[%s1387 + $0xa8] sm:$0xf]
      %v1431 = vld [vmem:[%s1387 + $0xac] sm:$0xf]
      %v1432 = vld [vmem:[%s1387 + $0xb0] sm:$0xf]
      %v1433 = vld [vmem:[%s1387 + $0xb4] sm:$0xf]
      %v1434 = vld [vmem:[%s1387 + $0xb8] sm:$0xf]
      %v1435 = vld [vmem:[%s1387 + $0xbc] sm:$0xf]
      %v1484 = vunpack.c.l.b16 %v1388
      %v1485 = vunpack.c.l.b16 %v1389
      %v1486 = vunpack.c.l.b16 %v1390
      %v1487 = vunpack.c.l.b16 %v1391
      %v1488 = vunpack.c.l.b16 %v1392
      %v1489 = vunpack.c.l.b16 %v1393
      %v1490 = vunpack.c.l.b16 %v1394
      %v1491 = vunpack.c.l.b16 %v1395
      %v1492 = vunpack.c.l.b16 %v1396
      %v1493 = vunpack.c.l.b16 %v1397
      %v1494 = vunpack.c.l.b16 %v1398
      %v1495 = vunpack.c.l.b16 %v1399
      %v1496 = vunpack.c.l.b16 %v1400
      %v1497 = vunpack.c.l.b16 %v1401
      %v1498 = vunpack.c.l.b16 %v1402
      %v1499 = vunpack.c.l.b16 %v1403
      %v1500 = vunpack.c.l.b16 %v1404
      %v1501 = vunpack.c.l.b16 %v1405
      %v1502 = vunpack.c.l.b16 %v1406
      %v1503 = vunpack.c.l.b16 %v1407
      %v1504 = vunpack.c.l.b16 %v1408
      %v1505 = vunpack.c.l.b16 %v1409
      %v1506 = vunpack.c.l.b16 %v1410
      %v1507 = vunpack.c.l.b16 %v1411
      %v1508 = vunpack.c.l.b16 %v1412
      %v1509 = vunpack.c.l.b16 %v1413
      %v1510 = vunpack.c.l.b16 %v1414
      %v1511 = vunpack.c.l.b16 %v1415
      %v1512 = vunpack.c.l.b16 %v1416
      %v1513 = vunpack.c.l.b16 %v1417
      %v1514 = vunpack.c.l.b16 %v1418
      %v1515 = vunpack.c.l.b16 %v1419
      %v1516 = vunpack.c.l.b16 %v1420
      %v1517 = vunpack.c.l.b16 %v1421
      %v1518 = vunpack.c.l.b16 %v1422
      %v1519 = vunpack.c.l.b16 %v1423
      %v1520 = vunpack.c.l.b16 %v1424
      %v1521 = vunpack.c.l.b16 %v1425
      %v1522 = vunpack.c.l.b16 %v1426
      %v1523 = vunpack.c.l.b16 %v1427
      %v1524 = vunpack.c.l.b16 %v1428
      %v1525 = vunpack.c.l.b16 %v1429
      %v1526 = vunpack.c.l.b16 %v1430
      %v1527 = vunpack.c.l.b16 %v1431
      %v1528 = vunpack.c.l.b16 %v1432
      %v1529 = vunpack.c.l.b16 %v1433
      %v1530 = vunpack.c.l.b16 %v1434
      %v1531 = vunpack.c.l.b16 %v1435
      %v1532 = vpack.c.b16 %v1485, %v1484
      %v1533 = vpack.c.b16 %v1487, %v1486
      %v1534 = vpack.c.b16 %v1489, %v1488
      %v1535 = vpack.c.b16 %v1491, %v1490
      %v1536 = vpack.c.b16 %v1493, %v1492
      %v1537 = vpack.c.b16 %v1495, %v1494
      %v1538 = vpack.c.b16 %v1497, %v1496
      %v1539 = vpack.c.b16 %v1499, %v1498
      %v1540 = vpack.c.b16 %v1501, %v1500
      %v1541 = vpack.c.b16 %v1503, %v1502
      %v1542 = vpack.c.b16 %v1505, %v1504
      %v1543 = vpack.c.b16 %v1507, %v1506
      %v1544 = vpack.c.b16 %v1509, %v1508
      %v1545 = vpack.c.b16 %v1511, %v1510
      %v1546 = vpack.c.b16 %v1513, %v1512
      %v1547 = vpack.c.b16 %v1515, %v1514
      %v1548 = vpack.c.b16 %v1517, %v1516
      %v1549 = vpack.c.b16 %v1519, %v1518
      %v1550 = vpack.c.b16 %v1521, %v1520
      %v1551 = vpack.c.b16 %v1523, %v1522
      %v1552 = vpack.c.b16 %v1525, %v1524
      %v1553 = vpack.c.b16 %v1527, %v1526
      %v1554 = vpack.c.b16 %v1529, %v1528
      %v1555 = vpack.c.b16 %v1531, %v1530
      %1580 = vmatprep.subr.bf16.mxu0 0
      %1581 = vmatpush1.bf16.msra.mxu0 %v1532
      %1582 = vmatprep.subr.bf16.mxu0 0
      %1583 = vmatpush1.bf16.msra.mxu0 %v1533
      %1584 = vmatprep.subr.bf16.mxu0 0
      %1585 = vmatpush1.bf16.msra.mxu0 %v1534
      %1586 = vmatprep.subr.bf16.mxu0 0
      %1587 = vmatpush1.bf16.msra.mxu0 %v1535
      %1588 = vmatprep.subr.bf16.mxu0 0
      %1589 = vmatpush1.bf16.msra.mxu0 %v1536
      %1590 = vmatprep.subr.bf16.mxu0 0
      %1591 = vmatpush1.bf16.msra.mxu0 %v1537
      %1592 = vmatprep.subr.bf16.mxu0 0
      %1593 = vmatpush1.bf16.msra.mxu0 %v1538
      %1594 = vmatprep.subr.bf16.mxu0 0
      %1595 = vmatpush1.bf16.msra.mxu0 %v1539
      %1596 = vmatprep.subr.bf16.mxu0 0
      %1597 = vmatpush1.bf16.msra.mxu0 %v1540
      %1598 = vmatprep.subr.bf16.mxu0 0
      %1599 = vmatpush1.bf16.msra.mxu0 %v1541
      %1600 = vmatprep.subr.bf16.mxu0 0
      %1601 = vmatpush1.bf16.msra.mxu0 %v1542
      %1602 = vmatprep.subr.bf16.mxu0 0
      %1603 = vmatpush1.bf16.msra.mxu0 %v1543
      %1604 = vmatprep.subr.bf16.mxu0 0
      %1605 = vmatpush1.bf16.msra.mxu0 %v1544
      %1606 = vmatprep.subr.bf16.mxu0 0
      %1607 = vmatpush1.bf16.msra.mxu0 %v1545
      %1608 = vmatprep.subr.bf16.mxu0 0
      %1609 = vmatpush1.bf16.msra.mxu0 %v1546
      %1610 = vmatprep.subr.bf16.mxu0 0
      %1611 = vmatpush1.bf16.msra.mxu0 %v1547
      %1612 = vmatprep.mubr.bf16.mxu0 %v1364
      %1613 = vmatmul.mubr.bf16.gmra.mrb[0].mxu0 %v1363
      %v1614 = vpop.f32.mrb[0].mxu0
      %v1615 = vadd.f32 0.0, %v1614
      %v1616 = vpop.f32.mrb[0].mxu0
      %v1617 = vpop.f32.mrb[0].mxu0
      %v1618 = vadd.f32 0.0, %v1617
      %v1619 = vpop.f32.mrb[0].mxu0
      %1620 = vmatprep.mubr.bf16.mxu0 %v1367
      %1621 = vmatmul.mubr.bf16.gmra.mrb[0].mxu0 %v1366
      %v1622 = vpop.f32.mrb[0].mxu0
      %v1623 = vadd.f32 0.0, %v1622
      %v1624 = vpop.f32.mrb[0].mxu0
      %v1625 = vpop.f32.mrb[0].mxu0
      %v1626 = vadd.f32 0.0, %v1625
      %v1627 = vpop.f32.mrb[0].mxu0
      %1628 = vmatprep.mubr.bf16.mxu0 %v1370
      %1629 = vmatmul.mubr.bf16.gmra.mrb[0].mxu0 %v1369
      %v1630 = vpop.f32.mrb[0].mxu0
      %v1631 = vadd.f32 0.0, %v1630
      %v1632 = vpop.f32.mrb[0].mxu0
      %v1633 = vpop.f32.mrb[0].mxu0
      %v1634 = vadd.f32 0.0, %v1633
      %v1635 = vpop.f32.mrb[0].mxu0
      %1636 = vmatprep.mubr.bf16.mxu0 %v1373
      %1637 = vmatmul.mubr.bf16.gmra.mrb[0].mxu0 %v1372
      %v1638 = vpop.f32.mrb[0].mxu0
      %v1639 = vadd.f32 0.0, %v1638
      %v1640 = vpop.f32.mrb[0].mxu0
      %v1641 = vpop.f32.mrb[0].mxu0
      %v1642 = vadd.f32 0.0, %v1641
      %v1643 = vpop.f32.mrb[0].mxu0
      %1644 = vmatprep.mubr.bf16.mxu0 %v1376
      %1645 = vmatmul.mubr.bf16.gmra.mrb[0].mxu0 %v1375
      %v1646 = vpop.f32.mrb[0].mxu0
      %v1647 = vadd.f32 0.0, %v1646
      %v1648 = vpop.f32.mrb[0].mxu0
      %v1649 = vpop.f32.mrb[0].mxu0
      %v1650 = vadd.f32 0.0, %v1649
      %v1651 = vpop.f32.mrb[0].mxu0
      %1652 = vmatprep.mubr.bf16.mxu0 %v1379
      %1653 = vmatmul.mubr.bf16.gmra.mrb[0].mxu0 %v1378
      %v1654 = vpop.f32.mrb[0].mxu0
      %v1655 = vadd.f32 0.0, %v1654
      %v1656 = vpop.f32.mrb[0].mxu0
      %v1657 = vpop.f32.mrb[0].mxu0
      %v1658 = vadd.f32 0.0, %v1657
      %v1659 = vpop.f32.mrb[0].mxu0
      %1660 = vmatprep.mubr.bf16.mxu0 %v1382
      %1661 = vmatmul.mubr.bf16.gmra.mrb[0].mxu0 %v1381
      %v1662 = vpop.f32.mrb[0].mxu0
      %v1663 = vadd.f32 0.0, %v1662
      %v1664 = vpop.f32.mrb[0].mxu0
      %v1665 = vpop.f32.mrb[0].mxu0
      %v1666 = vadd.f32 0.0, %v1665
      %v1667 = vpop.f32.mrb[0].mxu0
      %1668 = vmatprep.mubr.bf16.mxu0 %v1385
      %1669 = vmatmul.mubr.bf16.gmra.mrb[0].mxu0 %v1384
      %v1670 = vpop.f32.mrb[0].mxu0
      %v1671 = vadd.f32 0.0, %v1670
      %v1672 = vpop.f32.mrb[0].mxu0
      %v1673 = vpop.f32.mrb[0].mxu0
      %v1674 = vadd.f32 0.0, %v1673
      %v1675 = vpop.f32.mrb[0].mxu0
      %1676 = vdwg.mxu0
      %1677 = vmatprep.subr.bf16.mxu0 0
      %1678 = vmatpush1.bf16.msra.mxu0 %v1548
      %1679 = vmatprep.subr.bf16.mxu0 0
      %1680 = vmatpush1.bf16.msra.mxu0 %v1549
      %1681 = vmatprep.subr.bf16.mxu0 0
      %1682 = vmatpush1.bf16.msra.mxu0 %v1550
      %1683 = vmatprep.subr.bf16.mxu0 0
      %1684 = vmatpush1.bf16.msra.mxu0 %v1551
      %1685 = vmatprep.subr.bf16.mxu0 0
      %1686 = vmatpush1.bf16.msra.mxu0 %v1552
      %1687 = vmatprep.subr.bf16.mxu0 0
      %1688 = vmatpush1.bf16.msra.mxu0 %v1553
      %1689 = vmatprep.subr.bf16.mxu0 0
      %1690 = vmatpush1.bf16.msra.mxu0 %v1554
      %1691 = vmatprep.subr.bf16.mxu0 0
      %1692 = vmatpush1.bf16.msra.mxu0 %v1555
      %1693 = vmatprep.subr.bf16.mxu0 0
      %1694 = vmatpush1.bf16.msra.mxu0 0
      %1695 = vmatprep.subr.bf16.mxu0 0
      %1696 = vmatpush1.bf16.msra.mxu0 0
      %1697 = vmatprep.subr.bf16.mxu0 0
      %1698 = vmatpush1.bf16.msra.mxu0 0
      %1699 = vmatprep.subr.bf16.mxu0 0
      %1700 = vmatpush1.bf16.msra.mxu0 0
      %1701 = vmatprep.subr.bf16.mxu0 0
      %1702 = vmatpush1.bf16.msra.mxu0 0
      %1703 = vmatprep.subr.bf16.mxu0 0
      %1704 = vmatpush1.bf16.msra.mxu0 0
      %1705 = vmatprep.subr.bf16.mxu0 0
      %1706 = vmatpush1.bf16.msra.mxu0 0
      %1707 = vmatprep.subr.bf16.mxu0 0
      %1708 = vmatpush1.bf16.msra.mxu0 0
      %1709 = vmatprep.mubr.bf16.mxu0 0
      %1710 = vmatmul.mubr.bf16.gmra.mrb[0].mxu0 %v1365
      %v1711 = vpop.f32.mrb[0].mxu0
      %v1712 = vadd.f32 %v1615, %v1711
      %v1713 = vpop.f32.mrb[0].mxu0
      %v1714 = vpop.f32.mrb[0].mxu0
      %v1715 = vadd.f32 %v1618, %v1714
      %v1716 = vpop.f32.mrb[0].mxu0
      %1717 = vmatprep.mubr.bf16.mxu0 0
      %1718 = vmatmul.mubr.bf16.gmra.mrb[0].mxu0 %v1368
      %v1719 = vpop.f32.mrb[0].mxu0
      %v1720 = vadd.f32 %v1623, %v1719
      %v1721 = vpop.f32.mrb[0].mxu0
      %v1722 = vpop.f32.mrb[0].mxu0
      %v1723 = vadd.f32 %v1626, %v1722
      %v1724 = vpop.f32.mrb[0].mxu0
      %1725 = vmatprep.mubr.bf16.mxu0 0
      %1726 = vmatmul.mubr.bf16.gmra.mrb[0].mxu0 %v1371
      %v1727 = vpop.f32.mrb[0].mxu0
      %v1728 = vadd.f32 %v1631, %v1727
      %v1729 = vpop.f32.mrb[0].mxu0
      %v1730 = vpop.f32.mrb[0].mxu0
      %v1731 = vadd.f32 %v1634, %v1730
      %v1732 = vpop.f32.mrb[0].mxu0
      %1733 = vmatprep.mubr.bf16.mxu0 0
      %1734 = vmatmul.mubr.bf16.gmra.mrb[0].mxu0 %v1374
      %v1735 = vpop.f32.mrb[0].mxu0
      %v1736 = vadd.f32 %v1639, %v1735
      %v1737 = vpop.f32.mrb[0].mxu0
      %v1738 = vpop.f32.mrb[0].mxu0
      %v1739 = vadd.f32 %v1642, %v1738
      %v1740 = vpop.f32.mrb[0].mxu0
      %1741 = vmatprep.mubr.bf16.mxu0 0
      %1742 = vmatmul.mubr.bf16.gmra.mrb[0].mxu0 %v1377
      %v1743 = vpop.f32.mrb[0].mxu0
      %v1744 = vadd.f32 %v1647, %v1743
      %v1745 = vpop.f32.mrb[0].mxu0
      %v1746 = vpop.f32.mrb[0].mxu0
      %v1747 = vadd.f32 %v1650, %v1746
      %v1748 = vpop.f32.mrb[0].mxu0
      %1749 = vmatprep.mubr.bf16.mxu0 0
      %1750 = vmatmul.mubr.bf16.gmra.mrb[0].mxu0 %v1380
      %v1751 = vpop.f32.mrb[0].mxu0
      %v1752 = vadd.f32 %v1655, %v1751
      %v1753 = vpop.f32.mrb[0].mxu0
      %v1754 = vpop.f32.mrb[0].mxu0
      %v1755 = vadd.f32 %v1658, %v1754
      %v1756 = vpop.f32.mrb[0].mxu0
      %1757 = vmatprep.mubr.bf16.mxu0 0
      %1758 = vmatmul.mubr.bf16.gmra.mrb[0].mxu0 %v1383
      %v1759 = vpop.f32.mrb[0].mxu0
      %v1760 = vadd.f32 %v1663, %v1759
      %v1761 = vpop.f32.mrb[0].mxu0
      %v1762 = vpop.f32.mrb[0].mxu0
      %v1763 = vadd.f32 %v1666, %v1762
      %v1764 = vpop.f32.mrb[0].mxu0
      %1765 = vmatprep.mubr.bf16.mxu0 0
      %1766 = vmatmul.mubr.bf16.gmra.mrb[0].mxu0 %v1386
      %v1767 = vpop.f32.mrb[0].mxu0
      %v1768 = vadd.f32 %v1671, %v1767
      %v1769 = vpop.f32.mrb[0].mxu0
      %v1770 = vpop.f32.mrb[0].mxu0
      %v1771 = vadd.f32 %v1674, %v1770
      %v1772 = vpop.f32.mrb[0].mxu0
      %1773 = vdwg.mxu0
      %v1822 = vunpack.c.l.b16 %v1314
      %v1823 = vunpack.c.l.b16 %v1315
      %v1824 = vunpack.c.l.b16 %v1316
      %v1825 = vunpack.c.l.b16 %v1317
      %v1826 = vunpack.c.l.b16 %v1318
      %v1827 = vunpack.c.l.b16 %v1319
      %v1828 = vunpack.c.l.b16 %v1320
      %v1829 = vunpack.c.l.b16 %v1321
      %v1830 = vunpack.c.l.b16 %v1322
      %v1831 = vunpack.c.l.b16 %v1323
      %v1832 = vunpack.c.l.b16 %v1324
      %v1833 = vunpack.c.l.b16 %v1325
      %v1834 = vunpack.c.l.b16 %v1326
      %v1835 = vunpack.c.l.b16 %v1327
      %v1836 = vunpack.c.l.b16 %v1328
      %v1837 = vunpack.c.l.b16 %v1329
      %v1838 = vunpack.c.l.b16 %v1330
      %v1839 = vunpack.c.l.b16 %v1331
      %v1840 = vunpack.c.l.b16 %v1332
      %v1841 = vunpack.c.l.b16 %v1333
      %v1842 = vunpack.c.l.b16 %v1334
      %v1843 = vunpack.c.l.b16 %v1335
      %v1844 = vunpack.c.l.b16 %v1336
      %v1845 = vunpack.c.l.b16 %v1337
      %v1846 = vunpack.c.l.b16 %v1338
      %v1847 = vunpack.c.l.b16 %v1339
      %v1848 = vunpack.c.l.b16 %v1340
      %v1849 = vunpack.c.l.b16 %v1341
      %v1850 = vunpack.c.l.b16 %v1342
      %v1851 = vunpack.c.l.b16 %v1343
      %v1852 = vunpack.c.l.b16 %v1344
      %v1853 = vunpack.c.l.b16 %v1345
      %v1854 = vunpack.c.l.b16 %v1346
      %v1855 = vunpack.c.l.b16 %v1347
      %v1856 = vunpack.c.l.b16 %v1348
      %v1857 = vunpack.c.l.b16 %v1349
      %v1858 = vunpack.c.l.b16 %v1350
      %v1859 = vunpack.c.l.b16 %v1351
      %v1860 = vunpack.c.l.b16 %v1352
      %v1861 = vunpack.c.l.b16 %v1353
      %v1862 = vunpack.c.l.b16 %v1354
      %v1863 = vunpack.c.l.b16 %v1355
      %v1864 = vunpack.c.l.b16 %v1356
      %v1865 = vunpack.c.l.b16 %v1357
      %v1866 = vunpack.c.l.b16 %v1358
      %v1867 = vunpack.c.l.b16 %v1359
      %v1868 = vunpack.c.l.b16 %v1360
      %v1869 = vunpack.c.l.b16 %v1361
      %v1870 = vpack.c.b16 %v1823, %v1822
      %v1871 = vpack.c.b16 %v1825, %v1824
      %v1872 = vpack.c.b16 %v1827, %v1826
      %v1873 = vpack.c.b16 %v1829, %v1828
      %v1874 = vpack.c.b16 %v1831, %v1830
      %v1875 = vpack.c.b16 %v1833, %v1832
      %v1876 = vpack.c.b16 %v1835, %v1834
      %v1877 = vpack.c.b16 %v1837, %v1836
      %v1878 = vpack.c.b16 %v1839, %v1838
      %v1879 = vpack.c.b16 %v1841, %v1840
      %v1880 = vpack.c.b16 %v1843, %v1842
      %v1881 = vpack.c.b16 %v1845, %v1844
      %v1882 = vpack.c.b16 %v1847, %v1846
      %v1883 = vpack.c.b16 %v1849, %v1848
      %v1884 = vpack.c.b16 %v1851, %v1850
      %v1885 = vpack.c.b16 %v1853, %v1852
      %v1886 = vpack.c.b16 %v1855, %v1854
      %v1887 = vpack.c.b16 %v1857, %v1856
      %v1888 = vpack.c.b16 %v1859, %v1858
      %v1889 = vpack.c.b16 %v1861, %v1860
      %v1890 = vpack.c.b16 %v1863, %v1862
      %v1891 = vpack.c.b16 %v1865, %v1864
      %v1892 = vpack.c.b16 %v1867, %v1866
      %v1893 = vpack.c.b16 %v1869, %v1868
      %1918 = vmatprep.subr.bf16.mxu0 0
      %1919 = vmatpush1.bf16.msra.mxu0 %v1870
      %1920 = vmatprep.subr.bf16.mxu0 0
      %1921 = vmatpush1.bf16.msra.mxu0 %v1871
      %1922 = vmatprep.subr.bf16.mxu0 0
      %1923 = vmatpush1.bf16.msra.mxu0 %v1872
      %1924 = vmatprep.subr.bf16.mxu0 0
      %1925 = vmatpush1.bf16.msra.mxu0 %v1873
      %1926 = vmatprep.subr.bf16.mxu0 0
      %1927 = vmatpush1.bf16.msra.mxu0 %v1874
      %1928 = vmatprep.subr.bf16.mxu0 0
      %1929 = vmatpush1.bf16.msra.mxu0 %v1875
      %1930 = vmatprep.subr.bf16.mxu0 0
      %1931 = vmatpush1.bf16.msra.mxu0 %v1876
      %1932 = vmatprep.subr.bf16.mxu0 0
      %1933 = vmatpush1.bf16.msra.mxu0 %v1877
      %1934 = vmatprep.subr.bf16.mxu0 0
      %1935 = vmatpush1.bf16.msra.mxu0 %v1878
      %1936 = vmatprep.subr.bf16.mxu0 0
      %1937 = vmatpush1.bf16.msra.mxu0 %v1879
      %1938 = vmatprep.subr.bf16.mxu0 0
      %1939 = vmatpush1.bf16.msra.mxu0 %v1880
      %1940 = vmatprep.subr.bf16.mxu0 0
      %1941 = vmatpush1.bf16.msra.mxu0 %v1881
      %1942 = vmatprep.subr.bf16.mxu0 0
      %1943 = vmatpush1.bf16.msra.mxu0 %v1882
      %1944 = vmatprep.subr.bf16.mxu0 0
      %1945 = vmatpush1.bf16.msra.mxu0 %v1883
      %1946 = vmatprep.subr.bf16.mxu0 0
      %1947 = vmatpush1.bf16.msra.mxu0 %v1884
      %1948 = vmatprep.subr.bf16.mxu0 0
      %1949 = vmatpush1.bf16.msra.mxu0 %v1885
      %1950 = vmatprep.mubr.bf16.mxu0 %v1291
      %1951 = vmatmul.mubr.bf16.gmra.mrb[0].mxu0 %v1290
      %v1952 = vpop.f32.mrb[0].mxu0
      %v1953 = vadd.f32 %v1712, %v1952
      %v1954 = vpop.f32.mrb[0].mxu0
      %v1955 = vpop.f32.mrb[0].mxu0
      %v1956 = vadd.f32 %v1715, %v1955
      %v1957 = vpop.f32.mrb[0].mxu0
      %1958 = vmatprep.mubr.bf16.mxu0 %v1294
      %1959 = vmatmul.mubr.bf16.gmra.mrb[0].mxu0 %v1293
      %v1960 = vpop.f32.mrb[0].mxu0
      %v1961 = vadd.f32 %v1720, %v1960
      %v1962 = vpop.f32.mrb[0].mxu0
      %v1963 = vpop.f32.mrb[0].mxu0
      %v1964 = vadd.f32 %v1723, %v1963
      %v1965 = vpop.f32.mrb[0].mxu0
      %1966 = vmatprep.mubr.bf16.mxu0 %v1297
      %1967 = vmatmul.mubr.bf16.gmra.mrb[0].mxu0 %v1296
      %v1968 = vpop.f32.mrb[0].mxu0
      %v1969 = vadd.f32 %v1728, %v1968
      %v1970 = vpop.f32.mrb[0].mxu0
      %v1971 = vpop.f32.mrb[0].mxu0
      %v1972 = vadd.f32 %v1731, %v1971
      %v1973 = vpop.f32.mrb[0].mxu0
      %1974 = vmatprep.mubr.bf16.mxu0 %v1300
      %1975 = vmatmul.mubr.bf16.gmra.mrb[0].mxu0 %v1299
      %v1976 = vpop.f32.mrb[0].mxu0
      %v1977 = vadd.f32 %v1736, %v1976
      %v1978 = vpop.f32.mrb[0].mxu0
      %v1979 = vpop.f32.mrb[0].mxu0
      %v1980 = vadd.f32 %v1739, %v1979
      %v1981 = vpop.f32.mrb[0].mxu0
      %1982 = vmatprep.mubr.bf16.mxu0 %v1303
      %1983 = vmatmul.mubr.bf16.gmra.mrb[0].mxu0 %v1302
      %v1984 = vpop.f32.mrb[0].mxu0
      %v1985 = vadd.f32 %v1744, %v1984
      %v1986 = vpop.f32.mrb[0].mxu0
      %v1987 = vpop.f32.mrb[0].mxu0
      %v1988 = vadd.f32 %v1747, %v1987
      %v1989 = vpop.f32.mrb[0].mxu0
      %1990 = vmatprep.mubr.bf16.mxu0 %v1306
      %1991 = vmatmul.mubr.bf16.gmra.mrb[0].mxu0 %v1305
      %v1992 = vpop.f32.mrb[0].mxu0
      %v1993 = vadd.f32 %v1752, %v1992
      %v1994 = vpop.f32.mrb[0].mxu0
      %v1995 = vpop.f32.mrb[0].mxu0
      %v1996 = vadd.f32 %v1755, %v1995
      %v1997 = vpop.f32.mrb[0].mxu0
      %1998 = vmatprep.mubr.bf16.mxu0 %v1309
      %1999 = vmatmul.mubr.bf16.gmra.mrb[0].mxu0 %v1308
      %v2000 = vpop.f32.mrb[0].mxu0
      %v2001 = vadd.f32 %v1760, %v2000
      %v2002 = vpop.f32.mrb[0].mxu0
      %v2003 = vpop.f32.mrb[0].mxu0
      %v2004 = vadd.f32 %v1763, %v2003
      %v2005 = vpop.f32.mrb[0].mxu0
      %2006 = vmatprep.mubr.bf16.mxu0 %v1312
      %2007 = vmatmul.mubr.bf16.gmra.mrb[0].mxu0 %v1311
      %v2008 = vpop.f32.mrb[0].mxu0
      %v2009 = vadd.f32 %v1768, %v2008
      %v2010 = vpop.f32.mrb[0].mxu0
      %v2011 = vpop.f32.mrb[0].mxu0
      %v2012 = vadd.f32 %v1771, %v2011
      %v2013 = vpop.f32.mrb[0].mxu0
      %2014 = vdwg.mxu0
      %2015 = vmatprep.subr.bf16.mxu0 0
      %2016 = vmatpush1.bf16.msra.mxu0 %v1886
      %2017 = vmatprep.subr.bf16.mxu0 0
      %2018 = vmatpush1.bf16.msra.mxu0 %v1887
      %2019 = vmatprep.subr.bf16.mxu0 0
      %2020 = vmatpush1.bf16.msra.mxu0 %v1888
      %2021 = vmatprep.subr.bf16.mxu0 0
      %2022 = vmatpush1.bf16.msra.mxu0 %v1889
      %2023 = vmatprep.subr.bf16.mxu0 0
      %2024 = vmatpush1.bf16.msra.mxu0 %v1890
      %2025 = vmatprep.subr.bf16.mxu0 0
      %2026 = vmatpush1.bf16.msra.mxu0 %v1891
      %2027 = vmatprep.subr.bf16.mxu0 0
      %2028 = vmatpush1.bf16.msra.mxu0 %v1892
      %2029 = vmatprep.subr.bf16.mxu0 0
      %2030 = vmatpush1.bf16.msra.mxu0 %v1893
      %2031 = vmatprep.subr.bf16.mxu0 0
      %2032 = vmatpush1.bf16.msra.mxu0 0
      %2033 = vmatprep.subr.bf16.mxu0 0
      %2034 = vmatpush1.bf16.msra.mxu0 0
      %2035 = vmatprep.subr.bf16.mxu0 0
      %2036 = vmatpush1.bf16.msra.mxu0 0
      %2037 = vmatprep.subr.bf16.mxu0 0
      %2038 = vmatpush1.bf16.msra.mxu0 0
      %2039 = vmatprep.subr.bf16.mxu0 0
      %2040 = vmatpush1.bf16.msra.mxu0 0
      %2041 = vmatprep.subr.bf16.mxu0 0
      %2042 = vmatpush1.bf16.msra.mxu0 0
      %2043 = vmatprep.subr.bf16.mxu0 0
      %2044 = vmatpush1.bf16.msra.mxu0 0
      %2045 = vmatprep.subr.bf16.mxu0 0
      %2046 = vmatpush1.bf16.msra.mxu0 0
      %2047 = vmatprep.mubr.bf16.mxu0 0
      %2048 = vmatmul.mubr.bf16.gmra.mrb[0].mxu0 %v1292
      %v2049 = vpop.f32.mrb[0].mxu0
      %v2050 = vadd.f32 %v1953, %v2049
      %v2051 = vpop.f32.mrb[0].mxu0
      %v2052 = vpop.f32.mrb[0].mxu0
      %v2053 = vadd.f32 %v1956, %v2052
      %v2054 = vpop.f32.mrb[0].mxu0
      %2055 = vmatprep.mubr.bf16.mxu0 0
      %2056 = vmatmul.mubr.bf16.gmra.mrb[0].mxu0 %v1295
      %v2057 = vpop.f32.mrb[0].mxu0
      %v2058 = vadd.f32 %v1961, %v2057
      %v2059 = vpop.f32.mrb[0].mxu0
      %v2060 = vpop.f32.mrb[0].mxu0
      %v2061 = vadd.f32 %v1964, %v2060
      %v2062 = vpop.f32.mrb[0].mxu0
      %2063 = vmatprep.mubr.bf16.mxu0 0
      %2064 = vmatmul.mubr.bf16.gmra.mrb[0].mxu0 %v1298
      %v2065 = vpop.f32.mrb[0].mxu0
      %v2066 = vadd.f32 %v1969, %v2065
      %v2067 = vpop.f32.mrb[0].mxu0
      %v2068 = vpop.f32.mrb[0].mxu0
      %v2069 = vadd.f32 %v1972, %v2068
      %v2070 = vpop.f32.mrb[0].mxu0
      %2071 = vmatprep.mubr.bf16.mxu0 0
      %2072 = vmatmul.mubr.bf16.gmra.mrb[0].mxu0 %v1301
      %v2073 = vpop.f32.mrb[0].mxu0
      %v2074 = vadd.f32 %v1977, %v2073
      %v2075 = vpop.f32.mrb[0].mxu0
      %v2076 = vpop.f32.mrb[0].mxu0
      %v2077 = vadd.f32 %v1980, %v2076
      %v2078 = vpop.f32.mrb[0].mxu0
      %2079 = vmatprep.mubr.bf16.mxu0 0
      %2080 = vmatmul.mubr.bf16.gmra.mrb[0].mxu0 %v1304
      %v2081 = vpop.f32.mrb[0].mxu0
      %v2082 = vadd.f32 %v1985, %v2081
      %v2083 = vpop.f32.mrb[0].mxu0
      %v2084 = vpop.f32.mrb[0].mxu0
      %v2085 = vadd.f32 %v1988, %v2084
      %v2086 = vpop.f32.mrb[0].mxu0
      %2087 = vmatprep.mubr.bf16.mxu0 0
      %2088 = vmatmul.mubr.bf16.gmra.mrb[0].mxu0 %v1307
      %v2089 = vpop.f32.mrb[0].mxu0
      %v2090 = vadd.f32 %v1993, %v2089
      %v2091 = vpop.f32.mrb[0].mxu0
      %v2092 = vpop.f32.mrb[0].mxu0
      %v2093 = vadd.f32 %v1996, %v2092
      %v2094 = vpop.f32.mrb[0].mxu0
      %2095 = vmatprep.mubr.bf16.mxu0 0
      %2096 = vmatmul.mubr.bf16.gmra.mrb[0].mxu0 %v1310
      %v2097 = vpop.f32.mrb[0].mxu0
      %v2098 = vadd.f32 %v2001, %v2097
      %v2099 = vpop.f32.mrb[0].mxu0
      %v2100 = vpop.f32.mrb[0].mxu0
      %v2101 = vadd.f32 %v2004, %v2100
      %v2102 = vpop.f32.mrb[0].mxu0
      %2103 = vmatprep.mubr.bf16.mxu0 0
      %2104 = vmatmul.mubr.bf16.gmra.mrb[0].mxu0 %v1313
      %v2105 = vpop.f32.mrb[0].mxu0
      %v2106 = vadd.f32 %v2009, %v2105
      %v2107 = vpop.f32.mrb[0].mxu0
      %v2108 = vpop.f32.mrb[0].mxu0
      %v2109 = vadd.f32 %v2012, %v2108
      %v2110 = vpop.f32.mrb[0].mxu0
      %2111 = vdwg.mxu0
      %s2112 = scalar_lea.vmem [#allocation3], 48
      %v2113 = vld [vmem:[%s2112] sm:$0xff]
      %v2114 = vld [vmem:[%s2112 + $0x8] sm:$0xff]
      %v2115 = vld [vmem:[%s2112 + $0x10] sm:$0xff]
      %v2116 = vld [vmem:[%s2112 + $0x18] sm:$0xff]
      %v2117 = vld [vmem:[%s2112 + $0x20] sm:$0xff]
      %v2118 = vld [vmem:[%s2112 + $0x28] sm:$0xff]
      %v2119 = vld [vmem:[%s2112 + $0x30] sm:$0xff]
      %v2120 = vld [vmem:[%s2112 + $0x38] sm:$0xff]
      %v2121 = vld [vmem:[%s2112 + $0x40] sm:$0xff]
      %v2122 = vld [vmem:[%s2112 + $0x48] sm:$0xff]
      %v2123 = vld [vmem:[%s2112 + $0x50] sm:$0xff]
      %v2124 = vld [vmem:[%s2112 + $0x58] sm:$0xff]
      %v2125 = vld [vmem:[%s2112 + $0x60] sm:$0xff]
      %v2126 = vld [vmem:[%s2112 + $0x68] sm:$0xff]
      %v2127 = vld [vmem:[%s2112 + $0x70] sm:$0xff]
      %v2128 = vld [vmem:[%s2112 + $0x78] sm:$0xff]
      %v2129 = vld [vmem:[%s2112 + $0x80] sm:$0xff]
      %v2130 = vld [vmem:[%s2112 + $0x88] sm:$0xff]
      %v2131 = vld [vmem:[%s2112 + $0x90] sm:$0xff]
      %v2132 = vld [vmem:[%s2112 + $0x98] sm:$0xff]
      %v2133 = vld [vmem:[%s2112 + $0xa0] sm:$0xff]
      %v2134 = vld [vmem:[%s2112 + $0xa8] sm:$0xff]
      %v2135 = vld [vmem:[%s2112 + $0xb0] sm:$0xff]
      %v2136 = vld [vmem:[%s2112 + $0xb8] sm:$0xff]
      %s2137 = scalar_lea.vmem %s5, 384
      %v2138 = vld [vmem:[%s2137] sm:$0xf]
      %v2139 = vld [vmem:[%s2137 + $0x4] sm:$0xf]
      %v2140 = vld [vmem:[%s2137 + $0x8] sm:$0xf]
      %v2141 = vld [vmem:[%s2137 + $0xc] sm:$0xf]
      %v2142 = vld [vmem:[%s2137 + $0x10] sm:$0xf]
      %v2143 = vld [vmem:[%s2137 + $0x14] sm:$0xf]
      %v2144 = vld [vmem:[%s2137 + $0x18] sm:$0xf]
      %v2145 = vld [vmem:[%s2137 + $0x1c] sm:$0xf]
      %v2146 = vld [vmem:[%s2137 + $0x20] sm:$0xf]
      %v2147 = vld [vmem:[%s2137 + $0x24] sm:$0xf]
      %v2148 = vld [vmem:[%s2137 + $0x28] sm:$0xf]
      %v2149 = vld [vmem:[%s2137 + $0x2c] sm:$0xf]
      %v2150 = vld [vmem:[%s2137 + $0x30] sm:$0xf]
      %v2151 = vld [vmem:[%s2137 + $0x34] sm:$0xf]
      %v2152 = vld [vmem:[%s2137 + $0x38] sm:$0xf]
      %v2153 = vld [vmem:[%s2137 + $0x3c] sm:$0xf]
      %v2154 = vld [vmem:[%s2137 + $0x40] sm:$0xf]
      %v2155 = vld [vmem:[%s2137 + $0x44] sm:$0xf]
      %v2156 = vld [vmem:[%s2137 + $0x48] sm:$0xf]
      %v2157 = vld [vmem:[%s2137 + $0x4c] sm:$0xf]
      %v2158 = vld [vmem:[%s2137 + $0x50] sm:$0xf]
      %v2159 = vld [vmem:[%s2137 + $0x54] sm:$0xf]
      %v2160 = vld [vmem:[%s2137 + $0x58] sm:$0xf]
      %v2161 = vld [vmem:[%s2137 + $0x5c] sm:$0xf]
      %v2162 = vld [vmem:[%s2137 + $0x60] sm:$0xf]
      %v2163 = vld [vmem:[%s2137 + $0x64] sm:$0xf]
      %v2164 = vld [vmem:[%s2137 + $0x68] sm:$0xf]
      %v2165 = vld [vmem:[%s2137 + $0x6c] sm:$0xf]
      %v2166 = vld [vmem:[%s2137 + $0x70] sm:$0xf]
      %v2167 = vld [vmem:[%s2137 + $0x74] sm:$0xf]
      %v2168 = vld [vmem:[%s2137 + $0x78] sm:$0xf]
      %v2169 = vld [vmem:[%s2137 + $0x7c] sm:$0xf]
      %v2170 = vld [vmem:[%s2137 + $0x80] sm:$0xf]
      %v2171 = vld [vmem:[%s2137 + $0x84] sm:$0xf]
      %v2172 = vld [vmem:[%s2137 + $0x88] sm:$0xf]
      %v2173 = vld [vmem:[%s2137 + $0x8c] sm:$0xf]
      %v2174 = vld [vmem:[%s2137 + $0x90] sm:$0xf]
      %v2175 = vld [vmem:[%s2137 + $0x94] sm:$0xf]
      %v2176 = vld [vmem:[%s2137 + $0x98] sm:$0xf]
      %v2177 = vld [vmem:[%s2137 + $0x9c] sm:$0xf]
      %v2178 = vld [vmem:[%s2137 + $0xa0] sm:$0xf]
      %v2179 = vld [vmem:[%s2137 + $0xa4] sm:$0xf]
      %v2180 = vld [vmem:[%s2137 + $0xa8] sm:$0xf]
      %v2181 = vld [vmem:[%s2137 + $0xac] sm:$0xf]
      %v2182 = vld [vmem:[%s2137 + $0xb0] sm:$0xf]
      %v2183 = vld [vmem:[%s2137 + $0xb4] sm:$0xf]
      %v2184 = vld [vmem:[%s2137 + $0xb8] sm:$0xf]
      %v2185 = vld [vmem:[%s2137 + $0xbc] sm:$0xf]
      %v2234 = vunpack.c.l.b16 %v2138
      %v2235 = vunpack.c.l.b16 %v2139
      %v2236 = vunpack.c.l.b16 %v2140
      %v2237 = vunpack.c.l.b16 %v2141
      %v2238 = vunpack.c.l.b16 %v2142
      %v2239 = vunpack.c.l.b16 %v2143
      %v2240 = vunpack.c.l.b16 %v2144
      %v2241 = vunpack.c.l.b16 %v2145
      %v2242 = vunpack.c.l.b16 %v2146
      %v2243 = vunpack.c.l.b16 %v2147
      %v2244 = vunpack.c.l.b16 %v2148
      %v2245 = vunpack.c.l.b16 %v2149
      %v2246 = vunpack.c.l.b16 %v2150
      %v2247 = vunpack.c.l.b16 %v2151
      %v2248 = vunpack.c.l.b16 %v2152
      %v2249 = vunpack.c.l.b16 %v2153
      %v2250 = vunpack.c.l.b16 %v2154
      %v2251 = vunpack.c.l.b16 %v2155
      %v2252 = vunpack.c.l.b16 %v2156
      %v2253 = vunpack.c.l.b16 %v2157
      %v2254 = vunpack.c.l.b16 %v2158
      %v2255 = vunpack.c.l.b16 %v2159
      %v2256 = vunpack.c.l.b16 %v2160
      %v2257 = vunpack.c.l.b16 %v2161
      %v2258 = vunpack.c.l.b16 %v2162
      %v2259 = vunpack.c.l.b16 %v2163
      %v2260 = vunpack.c.l.b16 %v2164
      %v2261 = vunpack.c.l.b16 %v2165
      %v2262 = vunpack.c.l.b16 %v2166
      %v2263 = vunpack.c.l.b16 %v2167
      %v2264 = vunpack.c.l.b16 %v2168
      %v2265 = vunpack.c.l.b16 %v2169
      %v2266 = vunpack.c.l.b16 %v2170
      %v2267 = vunpack.c.l.b16 %v2171
      %v2268 = vunpack.c.l.b16 %v2172
      %v2269 = vunpack.c.l.b16 %v2173
      %v2270 = vunpack.c.l.b16 %v2174
      %v2271 = vunpack.c.l.b16 %v2175
      %v2272 = vunpack.c.l.b16 %v2176
      %v2273 = vunpack.c.l.b16 %v2177
      %v2274 = vunpack.c.l.b16 %v2178
      %v2275 = vunpack.c.l.b16 %v2179
      %v2276 = vunpack.c.l.b16 %v2180
      %v2277 = vunpack.c.l.b16 %v2181
      %v2278 = vunpack.c.l.b16 %v2182
      %v2279 = vunpack.c.l.b16 %v2183
      %v2280 = vunpack.c.l.b16 %v2184
      %v2281 = vunpack.c.l.b16 %v2185
      %v2282 = vpack.c.b16 %v2235, %v2234
      %v2283 = vpack.c.b16 %v2237, %v2236
      %v2284 = vpack.c.b16 %v2239, %v2238
      %v2285 = vpack.c.b16 %v2241, %v2240
      %v2286 = vpack.c.b16 %v2243, %v2242
      %v2287 = vpack.c.b16 %v2245, %v2244
      %v2288 = vpack.c.b16 %v2247, %v2246
      %v2289 = vpack.c.b16 %v2249, %v2248
      %v2290 = vpack.c.b16 %v2251, %v2250
      %v2291 = vpack.c.b16 %v2253, %v2252
      %v2292 = vpack.c.b16 %v2255, %v2254
      %v2293 = vpack.c.b16 %v2257, %v2256
      %v2294 = vpack.c.b16 %v2259, %v2258
      %v2295 = vpack.c.b16 %v2261, %v2260
      %v2296 = vpack.c.b16 %v2263, %v2262
      %v2297 = vpack.c.b16 %v2265, %v2264
      %v2298 = vpack.c.b16 %v2267, %v2266
      %v2299 = vpack.c.b16 %v2269, %v2268
      %v2300 = vpack.c.b16 %v2271, %v2270
      %v2301 = vpack.c.b16 %v2273, %v2272
      %v2302 = vpack.c.b16 %v2275, %v2274
      %v2303 = vpack.c.b16 %v2277, %v2276
      %v2304 = vpack.c.b16 %v2279, %v2278
      %v2305 = vpack.c.b16 %v2281, %v2280
      %2330 = vmatprep.subr.bf16.mxu0 0
      %2331 = vmatpush1.bf16.msra.mxu0 %v2282
      %2332 = vmatprep.subr.bf16.mxu0 0
      %2333 = vmatpush1.bf16.msra.mxu0 %v2283
      %2334 = vmatprep.subr.bf16.mxu0 0
      %2335 = vmatpush1.bf16.msra.mxu0 %v2284
      %2336 = vmatprep.subr.bf16.mxu0 0
      %2337 = vmatpush1.bf16.msra.mxu0 %v2285
      %2338 = vmatprep.subr.bf16.mxu0 0
      %2339 = vmatpush1.bf16.msra.mxu0 %v2286
      %2340 = vmatprep.subr.bf16.mxu0 0
      %2341 = vmatpush1.bf16.msra.mxu0 %v2287
      %2342 = vmatprep.subr.bf16.mxu0 0
      %2343 = vmatpush1.bf16.msra.mxu0 %v2288
      %2344 = vmatprep.subr.bf16.mxu0 0
      %2345 = vmatpush1.bf16.msra.mxu0 %v2289
      %2346 = vmatprep.subr.bf16.mxu0 0
      %2347 = vmatpush1.bf16.msra.mxu0 %v2290
      %2348 = vmatprep.subr.bf16.mxu0 0
      %2349 = vmatpush1.bf16.msra.mxu0 %v2291
      %2350 = vmatprep.subr.bf16.mxu0 0
      %2351 = vmatpush1.bf16.msra.mxu0 %v2292
      %2352 = vmatprep.subr.bf16.mxu0 0
      %2353 = vmatpush1.bf16.msra.mxu0 %v2293
      %2354 = vmatprep.subr.bf16.mxu0 0
      %2355 = vmatpush1.bf16.msra.mxu0 %v2294
      %2356 = vmatprep.subr.bf16.mxu0 0
      %2357 = vmatpush1.bf16.msra.mxu0 %v2295
      %2358 = vmatprep.subr.bf16.mxu0 0
      %2359 = vmatpush1.bf16.msra.mxu0 %v2296
      %2360 = vmatprep.subr.bf16.mxu0 0
      %2361 = vmatpush1.bf16.msra.mxu0 %v2297
      %2362 = vmatprep.mubr.bf16.mxu0 %v2114
      %2363 = vmatmul.mubr.bf16.gmra.mrb[0].mxu0 %v2113
      %v2364 = vpop.f32.mrb[0].mxu0
      %v2365 = vadd.f32 0.0, %v2364
      %v2366 = vpop.f32.mrb[0].mxu0
      %v2367 = vpop.f32.mrb[0].mxu0
      %v2368 = vadd.f32 0.0, %v2367
      %v2369 = vpop.f32.mrb[0].mxu0
      %2370 = vmatprep.mubr.bf16.mxu0 %v2117
      %2371 = vmatmul.mubr.bf16.gmra.mrb[0].mxu0 %v2116
      %v2372 = vpop.f32.mrb[0].mxu0
      %v2373 = vadd.f32 0.0, %v2372
      %v2374 = vpop.f32.mrb[0].mxu0
      %v2375 = vpop.f32.mrb[0].mxu0
      %v2376 = vadd.f32 0.0, %v2375
      %v2377 = vpop.f32.mrb[0].mxu0
      %2378 = vmatprep.mubr.bf16.mxu0 %v2120
      %2379 = vmatmul.mubr.bf16.gmra.mrb[0].mxu0 %v2119
      %v2380 = vpop.f32.mrb[0].mxu0
      %v2381 = vadd.f32 0.0, %v2380
      %v2382 = vpop.f32.mrb[0].mxu0
      %v2383 = vpop.f32.mrb[0].mxu0
      %v2384 = vadd.f32 0.0, %v2383
      %v2385 = vpop.f32.mrb[0].mxu0
      %2386 = vmatprep.mubr.bf16.mxu0 %v2123
      %2387 = vmatmul.mubr.bf16.gmra.mrb[0].mxu0 %v2122
      %v2388 = vpop.f32.mrb[0].mxu0
      %v2389 = vadd.f32 0.0, %v2388
      %v2390 = vpop.f32.mrb[0].mxu0
      %v2391 = vpop.f32.mrb[0].mxu0
      %v2392 = vadd.f32 0.0, %v2391
      %v2393 = vpop.f32.mrb[0].mxu0
      %2394 = vmatprep.mubr.bf16.mxu0 %v2126
      %2395 = vmatmul.mubr.bf16.gmra.mrb[0].mxu0 %v2125
      %v2396 = vpop.f32.mrb[0].mxu0
      %v2397 = vadd.f32 0.0, %v2396
      %v2398 = vpop.f32.mrb[0].mxu0
      %v2399 = vpop.f32.mrb[0].mxu0
      %v2400 = vadd.f32 0.0, %v2399
      %v2401 = vpop.f32.mrb[0].mxu0
      %2402 = vmatprep.mubr.bf16.mxu0 %v2129
      %2403 = vmatmul.mubr.bf16.gmra.mrb[0].mxu0 %v2128
      %v2404 = vpop.f32.mrb[0].mxu0
      %v2405 = vadd.f32 0.0, %v2404
      %v2406 = vpop.f32.mrb[0].mxu0
      %v2407 = vpop.f32.mrb[0].mxu0
      %v2408 = vadd.f32 0.0, %v2407
      %v2409 = vpop.f32.mrb[0].mxu0
      %2410 = vmatprep.mubr.bf16.mxu0 %v2132
      %2411 = vmatmul.mubr.bf16.gmra.mrb[0].mxu0 %v2131
      %v2412 = vpop.f32.mrb[0].mxu0
      %v2413 = vadd.f32 0.0, %v2412
      %v2414 = vpop.f32.mrb[0].mxu0
      %v2415 = vpop.f32.mrb[0].mxu0
      %v2416 = vadd.f32 0.0, %v2415
      %v2417 = vpop.f32.mrb[0].mxu0
      %2418 = vmatprep.mubr.bf16.mxu0 %v2135
      %2419 = vmatmul.mubr.bf16.gmra.mrb[0].mxu0 %v2134
      %v2420 = vpop.f32.mrb[0].mxu0
      %v2421 = vadd.f32 0.0, %v2420
      %v2422 = vpop.f32.mrb[0].mxu0
      %v2423 = vpop.f32.mrb[0].mxu0
      %v2424 = vadd.f32 0.0, %v2423
      %v2425 = vpop.f32.mrb[0].mxu0
      %2426 = vdwg.mxu0
      %2427 = vmatprep.subr.bf16.mxu0 0
      %2428 = vmatpush1.bf16.msra.mxu0 %v2298
      %2429 = vmatprep.subr.bf16.mxu0 0
      %2430 = vmatpush1.bf16.msra.mxu0 %v2299
      %2431 = vmatprep.subr.bf16.mxu0 0
      %2432 = vmatpush1.bf16.msra.mxu0 %v2300
      %2433 = vmatprep.subr.bf16.mxu0 0
      %2434 = vmatpush1.bf16.msra.mxu0 %v2301
      %2435 = vmatprep.subr.bf16.mxu0 0
      %2436 = vmatpush1.bf16.msra.mxu0 %v2302
      %2437 = vmatprep.subr.bf16.mxu0 0
      %2438 = vmatpush1.bf16.msra.mxu0 %v2303
      %2439 = vmatprep.subr.bf16.mxu0 0
      %2440 = vmatpush1.bf16.msra.mxu0 %v2304
      %2441 = vmatprep.subr.bf16.mxu0 0
      %2442 = vmatpush1.bf16.msra.mxu0 %v2305
      %2443 = vmatprep.subr.bf16.mxu0 0
      %2444 = vmatpush1.bf16.msra.mxu0 0
      %2445 = vmatprep.subr.bf16.mxu0 0
      %2446 = vmatpush1.bf16.msra.mxu0 0
      %2447 = vmatprep.subr.bf16.mxu0 0
      %2448 = vmatpush1.bf16.msra.mxu0 0
      %2449 = vmatprep.subr.bf16.mxu0 0
      %2450 = vmatpush1.bf16.msra.mxu0 0
      %2451 = vmatprep.subr.bf16.mxu0 0
      %2452 = vmatpush1.bf16.msra.mxu0 0
      %2453 = vmatprep.subr.bf16.mxu0 0
      %2454 = vmatpush1.bf16.msra.mxu0 0
      %2455 = vmatprep.subr.bf16.mxu0 0
      %2456 = vmatpush1.bf16.msra.mxu0 0
      %2457 = vmatprep.subr.bf16.mxu0 0
      %2458 = vmatpush1.bf16.msra.mxu0 0
      %2459 = vmatprep.mubr.bf16.mxu0 0
      %2460 = vmatmul.mubr.bf16.gmra.mrb[0].mxu0 %v2115
      %v2461 = vpop.f32.mrb[0].mxu0
      %v2462 = vadd.f32 %v2365, %v2461
      %v2463 = vpop.f32.mrb[0].mxu0
      %v2464 = vpop.f32.mrb[0].mxu0
      %v2465 = vadd.f32 %v2368, %v2464
      %v2466 = vpop.f32.mrb[0].mxu0
      %2467 = vmatprep.mubr.bf16.mxu0 0
      %2468 = vmatmul.mubr.bf16.gmra.mrb[0].mxu0 %v2118
      %v2469 = vpop.f32.mrb[0].mxu0
      %v2470 = vadd.f32 %v2373, %v2469
      %v2471 = vpop.f32.mrb[0].mxu0
      %v2472 = vpop.f32.mrb[0].mxu0
      %v2473 = vadd.f32 %v2376, %v2472
      %v2474 = vpop.f32.mrb[0].mxu0
      %2475 = vmatprep.mubr.bf16.mxu0 0
      %2476 = vmatmul.mubr.bf16.gmra.mrb[0].mxu0 %v2121
      %v2477 = vpop.f32.mrb[0].mxu0
      %v2478 = vadd.f32 %v2381, %v2477
      %v2479 = vpop.f32.mrb[0].mxu0
      %v2480 = vpop.f32.mrb[0].mxu0
      %v2481 = vadd.f32 %v2384, %v2480
      %v2482 = vpop.f32.mrb[0].mxu0
      %2483 = vmatprep.mubr.bf16.mxu0 0
      %2484 = vmatmul.mubr.bf16.gmra.mrb[0].mxu0 %v2124
      %v2485 = vpop.f32.mrb[0].mxu0
      %v2486 = vadd.f32 %v2389, %v2485
      %v2487 = vpop.f32.mrb[0].mxu0
      %v2488 = vpop.f32.mrb[0].mxu0
      %v2489 = vadd.f32 %v2392, %v2488
      %v2490 = vpop.f32.mrb[0].mxu0
      %2491 = vmatprep.mubr.bf16.mxu0 0
      %2492 = vmatmul.mubr.bf16.gmra.mrb[0].mxu0 %v2127
      %v2493 = vpop.f32.mrb[0].mxu0
      %v2494 = vadd.f32 %v2397, %v2493
      %v2495 = vpop.f32.mrb[0].mxu0
      %v2496 = vpop.f32.mrb[0].mxu0
      %v2497 = vadd.f32 %v2400, %v2496
      %v2498 = vpop.f32.mrb[0].mxu0
      %2499 = vmatprep.mubr.bf16.mxu0 0
      %2500 = vmatmul.mubr.bf16.gmra.mrb[0].mxu0 %v2130
      %v2501 = vpop.f32.mrb[0].mxu0
      %v2502 = vadd.f32 %v2405, %v2501
      %v2503 = vpop.f32.mrb[0].mxu0
      %v2504 = vpop.f32.mrb[0].mxu0
      %v2505 = vadd.f32 %v2408, %v2504
      %v2506 = vpop.f32.mrb[0].mxu0
      %2507 = vmatprep.mubr.bf16.mxu0 0
      %2508 = vmatmul.mubr.bf16.gmra.mrb[0].mxu0 %v2133
      %v2509 = vpop.f32.mrb[0].mxu0
      %v2510 = vadd.f32 %v2413, %v2509
      %v2511 = vpop.f32.mrb[0].mxu0
      %v2512 = vpop.f32.mrb[0].mxu0
      %v2513 = vadd.f32 %v2416, %v2512
      %v2514 = vpop.f32.mrb[0].mxu0
      %2515 = vmatprep.mubr.bf16.mxu0 0
      %2516 = vmatmul.mubr.bf16.gmra.mrb[0].mxu0 %v2136
      %v2517 = vpop.f32.mrb[0].mxu0
      %v2518 = vadd.f32 %v2421, %v2517
      %v2519 = vpop.f32.mrb[0].mxu0
      %v2520 = vpop.f32.mrb[0].mxu0
      %v2521 = vadd.f32 %v2424, %v2520
      %v2522 = vpop.f32.mrb[0].mxu0
      %2523 = vdwg.mxu0
      %v2524 = vadd.f32 %v2050, %v2462
      %v2525 = vadd.f32 %v2053, %v2465
      %v2526 = vadd.f32 %v2058, %v2470
      %v2527 = vadd.f32 %v2061, %v2473
      %v2528 = vadd.f32 %v2066, %v2478
      %v2529 = vadd.f32 %v2069, %v2481
      %v2530 = vadd.f32 %v2074, %v2486
      %v2531 = vadd.f32 %v2077, %v2489
      %v2532 = vadd.f32 %v2082, %v2494
      %v2533 = vadd.f32 %v2085, %v2497
      %v2534 = vadd.f32 %v2090, %v2502
      %v2535 = vadd.f32 %v2093, %v2505
      %v2536 = vadd.f32 %v2098, %v2510
      %v2537 = vadd.f32 %v2101, %v2513
      %v2538 = vadd.f32 %v2106, %v2518
      %v2539 = vadd.f32 %v2109, %v2521
      %v2540 = vadd.f32 %v2524, %v2525
      %v2541 = vadd.f32 %v2540, %v2526
      %v2542 = vadd.f32 %v2541, %v2527
      %v2543 = vadd.f32 %v2542, %v2528
      %v2544 = vadd.f32 %v2543, %v2529
      %v2545 = vadd.f32 %v2544, %v2530
      %v2546 = vadd.f32 %v2545, %v2531
      %v2547 = vadd.f32 %v2546, %v2532
      %v2548 = vadd.f32 %v2547, %v2533
      %v2549 = vadd.f32 %v2548, %v2534
      %v2550 = vadd.f32 %v2549, %v2535
      %v2551 = vadd.f32 %v2550, %v2536
      %v2552 = vadd.f32 %v2551, %v2537
      %v2553 = vadd.f32 %v2552, %v2538
      %v2554 = vadd.f32 %v2553, %v2539
      %v2555 = vrot.slane %v2554, 4
      %v2556 = vadd.f32 %v2554, %v2555
      %v2557 = vrot.slane %v2556, 2
      %v2558 = vadd.f32 %v2556, %v2557
      %v2559 = vrot.slane %v2558, 1
      %v2560 = vadd.f32 %v2558, %v2559
      %2561 = vst [vmem:[%s503] sm:$0x1] %v2560
      %v2562 = vmul.f32 %v2524, %v2524
      %v2563 = vmul.f32 %v2525, %v2525
      %v2564 = vmul.f32 %v2526, %v2526
      %v2565 = vmul.f32 %v2527, %v2527
      %v2566 = vmul.f32 %v2528, %v2528
      %v2567 = vmul.f32 %v2529, %v2529
      %v2568 = vmul.f32 %v2530, %v2530
      %v2569 = vmul.f32 %v2531, %v2531
      %v2570 = vmul.f32 %v2532, %v2532
      %v2571 = vmul.f32 %v2533, %v2533
      %v2572 = vmul.f32 %v2534, %v2534
      %v2573 = vmul.f32 %v2535, %v2535
      %v2574 = vmul.f32 %v2536, %v2536
      %v2575 = vmul.f32 %v2537, %v2537
      %v2576 = vmul.f32 %v2538, %v2538
      %v2577 = vmul.f32 %v2539, %v2539
      %v2578 = vadd.f32 %v2562, %v2563
      %v2579 = vadd.f32 %v2578, %v2564
      %v2580 = vadd.f32 %v2579, %v2565
      %v2581 = vadd.f32 %v2580, %v2566
      %v2582 = vadd.f32 %v2581, %v2567
      %v2583 = vadd.f32 %v2582, %v2568
      %v2584 = vadd.f32 %v2583, %v2569
      %v2585 = vadd.f32 %v2584, %v2570
      %v2586 = vadd.f32 %v2585, %v2571
      %v2587 = vadd.f32 %v2586, %v2572
      %v2588 = vadd.f32 %v2587, %v2573
      %v2589 = vadd.f32 %v2588, %v2574
      %v2590 = vadd.f32 %v2589, %v2575
      %v2591 = vadd.f32 %v2590, %v2576
      %v2592 = vadd.f32 %v2591, %v2577
      %v2593 = vrot.slane %v2592, 4
      %v2594 = vadd.f32 %v2592, %v2593
      %v2595 = vrot.slane %v2594, 2
      %v2596 = vadd.f32 %v2594, %v2595
      %v2597 = vrot.slane %v2596, 1
      %v2598 = vadd.f32 %v2596, %v2597
      %2599 = vst [vmem:[%s510] sm:$0x1] %v2598
      %v2600 = vpack.c.bf16 %v2525, %v2524
      %v2601 = vpack.c.bf16 %v2527, %v2526
      %v2602 = vpack.c.bf16 %v2529, %v2528
      %v2603 = vpack.c.bf16 %v2531, %v2530
      %v2604 = vpack.c.bf16 %v2533, %v2532
      %v2605 = vpack.c.bf16 %v2535, %v2534
      %v2606 = vpack.c.bf16 %v2537, %v2536
      %v2607 = vpack.c.bf16 %v2539, %v2538
      %v2616 = vunpack.c.l.b16 %v2600
      %v2617 = vunpack.c.h.b16 %v2600
      %v2618 = vunpack.c.l.b16 %v2601
      %v2619 = vunpack.c.h.b16 %v2601
      %v2620 = vunpack.c.l.b16 %v2602
      %v2621 = vunpack.c.h.b16 %v2602
      %v2622 = vunpack.c.l.b16 %v2603
      %v2623 = vunpack.c.h.b16 %v2603
      %v2624 = vunpack.c.l.b16 %v2604
      %v2625 = vunpack.c.h.b16 %v2604
      %v2626 = vunpack.c.l.b16 %v2605
      %v2627 = vunpack.c.h.b16 %v2605
      %v2628 = vunpack.c.l.b16 %v2606
      %v2629 = vunpack.c.h.b16 %v2606
      %v2630 = vunpack.c.l.b16 %v2607
      %v2631 = vunpack.c.h.b16 %v2607
      %v2632 = vpack.c.b16 %v2616, %v2616
      %v2633 = vpack.c.b16 %v2617, %v2617
      %v2634 = vpack.c.b16 %v2618, %v2618
      %v2635 = vpack.c.b16 %v2619, %v2619
      %v2636 = vpack.c.b16 %v2620, %v2620
      %v2637 = vpack.c.b16 %v2621, %v2621
      %v2638 = vpack.c.b16 %v2622, %v2622
      %v2639 = vpack.c.b16 %v2623, %v2623
      %v2640 = vpack.c.b16 %v2624, %v2624
      %v2641 = vpack.c.b16 %v2625, %v2625
      %v2642 = vpack.c.b16 %v2626, %v2626
      %v2643 = vpack.c.b16 %v2627, %v2627
      %v2644 = vpack.c.b16 %v2628, %v2628
      %v2645 = vpack.c.b16 %v2629, %v2629
      %v2646 = vpack.c.b16 %v2630, %v2630
      %v2647 = vpack.c.b16 %v2631, %v2631
      %2664 = vst [vmem:[%s495] sm:$0xf] %v2632
      %2665 = vst [vmem:[%s495 + $0x4] sm:$0xf] %v2633
      %2666 = vst [vmem:[%s495 + $0x8] sm:$0xf] %v2634
      %2667 = vst [vmem:[%s495 + $0xc] sm:$0xf] %v2635
      %2668 = vst [vmem:[%s495 + $0x10] sm:$0xf] %v2636
      %2669 = vst [vmem:[%s495 + $0x14] sm:$0xf] %v2637
      %2670 = vst [vmem:[%s495 + $0x18] sm:$0xf] %v2638
      %2671 = vst [vmem:[%s495 + $0x1c] sm:$0xf] %v2639
      %2672 = vst [vmem:[%s495 + $0x20] sm:$0xf] %v2640
      %2673 = vst [vmem:[%s495 + $0x24] sm:$0xf] %v2641
      %2674 = vst [vmem:[%s495 + $0x28] sm:$0xf] %v2642
      %2675 = vst [vmem:[%s495 + $0x2c] sm:$0xf] %v2643
      %2676 = vst [vmem:[%s495 + $0x30] sm:$0xf] %v2644
      %2677 = vst [vmem:[%s495 + $0x34] sm:$0xf] %v2645
      %2678 = vst [vmem:[%s495 + $0x38] sm:$0xf] %v2646
      %2679 = vst [vmem:[%s495 + $0x3c] sm:$0xf] %v2647
      %s2680 = smul.u32 8, %s25
      %p2681 = scmp.lt.s32.totalorder %s24, 1
      %s2682 = scalar_select %p2681, %s24, 1
      %p2683 = scmp.lt.s32.totalorder %s2680, 15
      %s2684 = scalar_select %p2683, %s2680, 15
      %s2685 = smul.addr %s2684, 2
      %s2686 = smul.addr %s2682, 32
      %s2687 = sadd.s32 %s2685, %s2686
      %s2688 = smul.addr %s2687, 4
      %s2689 = scalar_lea.vmem %s6, %s2688
      %p2690 = scmp.lt.s32.totalorder %s24, 1
      %s2691 = scalar_select %p2690, %s24, 1
      %p2692 = scmp.lt.s32.totalorder %s25, 1
      %s2693 = scalar_select %p2692, %s25, 1
      %s2694 = smul.addr %s2691, 2
      %s2695 = sadd.s32 %s2693, %s2694
      %s2696 = scalar_lea.vmem %s7, %s2695
      %p2697 = scmp.lt.s32.totalorder %s24, 1
      %s2698 = scalar_select %p2697, %s24, 1
      %p2699 = scmp.lt.s32.totalorder %s25, 1
      %s2700 = scalar_select %p2699, %s25, 1
      %s2701 = smul.addr %s2698, 2
      %s2702 = sadd.s32 %s2700, %s2701
      %s2703 = scalar_lea.vmem %s8, %s2702
      // Predicated region
      $region45: #{double_conv_forward.4} parent=43 // pred_check
        %p2704 = pneg %p215
      $region46: #{double_conv_forward.4} parent=43 // pred_check_branch
        %2706 = sbr.rel (%p2704) target = $region48
      $region47: #{double_conv_forward.4} parent=43 // pred_region
        %s2707 = smul.u32 8, %s25
      $region48: #{double_conv_forward.4} parent=43 // pred_fallthru
        _
      // Predicated region
      $region49: #{double_conv_forward.4} parent=43 // pred_check
        %p2708 = pneg %p243
      $region50: #{double_conv_forward.4} parent=43 // pred_check_branch
        %2710 = sbr.rel (%p2708) target = $region52
      $region51: #{double_conv_forward.4} parent=43 // pred_region
        _
      $region52: #{double_conv_forward.4} parent=43 // pred_fallthru
        _
      // Predicated region
      $region53: #{double_conv_forward.4} parent=43 // pred_check
        %p2711 = pneg %p271
      $region54: #{double_conv_forward.4} parent=43 // pred_check_branch
        %2713 = sbr.rel (%p2711) target = $region56
      $region55: #{double_conv_forward.4} parent=43 // pred_region
        _
      $region56: #{double_conv_forward.4} parent=43 // pred_fallthru
        _
    $region44: #{double_conv_forward.4} parent=5 // pred_fallthru
      _
    %p2714 = scmp.le.s32.totalorder 2, %s15
    // Predicated region
    $region57: #{double_conv_forward.4} parent=5 // pred_check
      %p2715 = pneg %p2714
    $region58: #{double_conv_forward.4} parent=5 // pred_check_branch
      %2717 = sbr.rel (%p2715) target = $region60
    $region59: #{double_conv_forward.4} parent=5 // pred_region
      %s2718 = ssub.s32 %s15, 2
      // Predicated region
      $region61: #{double_conv_forward.4} parent=59 // pred_check
        %p2719 = pneg %p221
      $region62: #{double_conv_forward.4} parent=59 // pred_check_branch
        %2721 = sbr.rel (%p2719) target = $region64
      $region63: #{double_conv_forward.4} parent=59 // pred_region
        %s2722 = smul.u32 8, %s27
        %p2723 = scmp.lt.s32.totalorder %s26, 1
        %s2724 = scalar_select %p2723, %s26, 1
        %p2725 = scmp.lt.s32.totalorder %s2722, 15
        %s2726 = scalar_select %p2725, %s2722, 15
        %s2727 = smul.addr %s2726, 2
        %s2728 = smul.addr %s2724, 32
        %s2729 = sadd.s32 %s2727, %s2728
        %s2730 = smul.addr %s2729, 4
        %s2731 = scalar_lea.vmem %s6, %s2730
      $region64: #{double_conv_forward.4} parent=59 // pred_fallthru
        _
      // Predicated region
      $region65: #{double_conv_forward.4} parent=59 // pred_check
        %p2732 = pneg %p249
      $region66: #{double_conv_forward.4} parent=59 // pred_check_branch
        %2734 = sbr.rel (%p2732) target = $region68
      $region67: #{double_conv_forward.4} parent=59 // pred_region
        %p2735 = scmp.lt.s32.totalorder %s26, 1
        %s2736 = scalar_select %p2735, %s26, 1
        %p2737 = scmp.lt.s32.totalorder %s27, 1
        %s2738 = scalar_select %p2737, %s27, 1
        %s2739 = smul.addr %s2736, 2
        %s2740 = sadd.s32 %s2738, %s2739
        %s2741 = scalar_lea.vmem %s7, %s2740
      $region68: #{double_conv_forward.4} parent=59 // pred_fallthru
        _
      // Predicated region
      $region69: #{double_conv_forward.4} parent=59 // pred_check
        %p2742 = pneg %p277
      $region70: #{double_conv_forward.4} parent=59 // pred_check_branch
        %2744 = sbr.rel (%p2742) target = $region72
      $region71: #{double_conv_forward.4} parent=59 // pred_region
        %p2745 = scmp.lt.s32.totalorder %s26, 1
        %s2746 = scalar_select %p2745, %s26, 1
        %p2747 = scmp.lt.s32.totalorder %s27, 1
        %s2748 = scalar_select %p2747, %s27, 1
        %s2749 = smul.addr %s2746, 2
        %s2750 = sadd.s32 %s2748, %s2749
        %s2751 = scalar_lea.vmem %s8, %s2750
      $region72: #{double_conv_forward.4} parent=59 // pred_fallthru
        _
    $region60: #{double_conv_forward.4} parent=5 // pred_fallthru
      _
  $region6: #{double_conv_forward.4} parent=0 // loop_footer
    %s19 = sadd.s32 1, %s15
  $region7: #{double_conv_forward.4} parent=0 // loop_footer_branch
    %14 = sbr.rel target = $region3
  $region8: #{double_conv_forward.4} parent=0 // loop_exit
    _

</llo_original>
